<compile_context>
chip_gen: v7x
topology: tpu7x:2x2x1
jax: 0.10.0
libtpu: 0.0.40
codegen_flags: <defaults>
</compile_context>

<pallas_src>
import functools

import jax
import jax.numpy as jnp
import numpy as np
from jax import lax
from jax.experimental import pallas as pl
from jax.experimental.pallas import tpu as pltpu


def _fused_dwconv_bn_hswish_kernel(x_ref, w_ref, shift_ref, o_ref, xpad_ref,
                                   *, Kmax, H, W):
    """One (batch, channel-tile) slab: depthwise conv + BN affine + Hardswish.

    x_ref:     (H, W, Ct)        NHWC input slab (VMEM), channels in lanes
    w_ref:     (Kmax, Kmax, Ct)  per-channel taps, zero-padded/centered per group,
                                 pre-scaled by the BN scale
    shift_ref: (1, 1, Ct)        conv bias * scale + BN shift (folded)
    o_ref:     (H, W, Ct)        output slab
    xpad_ref:  (H+Kmax-1, W+Kmax-1, Ct) f32 VMEM halo scratch (in-kernel padding)
    """
    Pmax = (Kmax - 1) // 2
    C = x_ref.shape[-1]

    # In-kernel zero padding: clear the halo buffer, copy the interior once
    # (single hoisted cast; avoids a wrapper-side padded HBM copy).
    xpad_ref[...] = jnp.zeros_like(xpad_ref)
    xpad_ref[Pmax:Pmax + H, Pmax:Pmax + W, :] = x_ref[...].astype(jnp.float32)

    xp = xpad_ref[...]          # (Hp, Wp, C) f32, loaded once
    w = w_ref[...]              # (Kmax, Kmax, C), BN scale already folded in

    acc = jnp.zeros((H, W, C), jnp.float32)
    for kh in range(Kmax):
        for kw in range(Kmax):
            # Per-channel tap broadcasts along the lane (channel) axis.
            acc = acc + xp[kh:kh + H, kw:kw + W, :] * w[kh, kw]

    y = acc + shift_ref[...]    # fused conv-bias + BN shift
    # Hardswish: y * relu6(y + 3) / 6
    o_ref[...] = (y * jnp.clip(y + 3.0, 0.0, 6.0) * (1.0 / 6.0)).astype(o_ref.dtype)


def multi_kernel_conv_norm_active(x, weights, biases, gamma, beta,
                                  running_mean, running_var, kernel_sizes,
                                  eps=1e-5, c_tile=None):
    """x: (B, C, H, W) float32, NCHW (PyTorch layout). Returns (B, C, H, W)."""
    B, C, H, W = x.shape
    G = len(kernel_sizes)
    assert C % G == 0
    pd = C // G
    for K in kernel_sizes:
        assert K % 2 == 1, "even kernel sizes not supported (output size changes)"

    Kmax = max(kernel_sizes)
    Pmax = (Kmax - 1) // 2
    Hp, Wp = H + 2 * Pmax, W + 2 * Pmax

    # BN (eval mode) affine, conv bias folded in.
    scale_all = (gamma / jnp.sqrt(running_var + eps)).astype(jnp.float32)   # (C,)
    shift_all = (beta.astype(jnp.float32) - running_mean * scale_all)       # (C,)
    bias_all = jnp.concatenate([b.astype(jnp.float32) for b in biases])     # (C,)
    shift_eff = (shift_all + bias_all * scale_all).reshape(1, 1, C)

    # Fuse all kernel-size groups: embed each group's (K,K) depthwise taps,
    # centered, into a common (Kmax, Kmax, C) slab (zeros elsewhere), channels
    # last so they broadcast along lanes. Pre-fold the BN scale into the taps.
    w_all = jnp.zeros((Kmax, Kmax, C), jnp.float32)
    for t, K in enumerate(kernel_sizes):
        P = (K - 1) // 2
        d = Pmax - P
        wt = jnp.transpose(weights[t][:, 0].astype(jnp.float32), (1, 2, 0))  # (K,K,pd)
        w_all = w_all.at[d:d + K, d:d + K, t * pd:(t + 1) * pd].set(wt)
    w_all = w_all * scale_all[None, None, :]

    # Channels-last so the channel axis lands in the lane dimension.
    x_nhwc = jnp.transpose(x, (0, 2, 3, 1))          # (B, H, W, C)

    if c_tile is None:
        c_tile = C
    # Lane-dense requirement on the last block dim: full C or a multiple of 128.
    assert C % c_tile == 0 and (c_tile == C or c_tile % 128 == 0)
    nct = C // c_tile

    kern = functools.partial(_fused_dwconv_bn_hswish_kernel,
                             Kmax=Kmax, H=H, W=W)

    out_nhwc = pl.pallas_call(
        kern,
        out_shape=jax.ShapeDtypeStruct((B, H, W, C), x.dtype),
        grid=(B, nct),
        in_specs=[
            pl.BlockSpec((None, H, W, c_tile), lambda b, ci: (b, 0, 0, ci)),
            pl.BlockSpec((Kmax, Kmax, c_tile), lambda b, ci: (0, 0, ci)),
            pl.BlockSpec((1, 1, c_tile), lambda b, ci: (0, 0, ci)),
        ],
        out_specs=pl.BlockSpec((None, H, W, c_tile),
                               lambda b, ci: (b, 0, 0, ci)),
        scratch_shapes=[pltpu.VMEM((Hp, Wp, c_tile), jnp.float32)],
        compiler_params=pltpu.CompilerParams(
            dimension_semantics=("parallel", "parallel"),
            vmem_limit_bytes=64 * 1024 * 1024),
    )(x_nhwc, w_all, shift_eff)

    return jnp.transpose(out_nhwc, (0, 3, 1, 2))     # back to NCHW


def _reference(x, weights, biases, gamma, beta, running_mean, running_var,
               kernel_sizes, eps=1e-5):
    """Pure-JAX reference matching the PyTorch forward (BN in eval mode)."""
    B, C, H, W = x.shape
    G = len(kernel_sizes)
    pd = C // G
    parts = []
    for t, K in enumerate(kernel_sizes):
        P = (K - 1) // 2
        xt = x[:, t * pd:(t + 1) * pd]
        yt = lax.conv_general_dilated(
            xt, weights[t], window_strides=(1, 1), padding=[(P, P), (P, P)],
            dimension_numbers=('NCHW', 'OIHW', 'NCHW'),
            feature_group_count=pd)
        yt = yt + biases[t][None, :, None, None]
        parts.append(yt)
    y = jnp.concatenate(parts, axis=1)
    scale = gamma / jnp.sqrt(running_var + eps)
    shift = beta - running_mean * scale
    y = y * scale[None, :, None, None] + shift[None, :, None, None]
    return y * jnp.clip(y + 3.0, 0.0, 6.0) / 6.0


if __name__ == "__main__":
    # Small shapes consistent with the module.
    B, C, H, W = 2, 4, 16, 16
    kernel_sizes = [3, 5]          # kernel_groups = 2, part_dim = 2
    G = len(kernel_sizes)
    pd = C // G

    key = jax.random.PRNGKey(0)
    keys = jax.random.split(key, 8)

    x = jax.random.normal(keys[0], (B, C, H, W), jnp.float32)

    # Depthwise conv params: weight (pd, 1, K, K), bias (pd,) per group.
    weights, biases = [], []
    for t, K in enumerate(kernel_sizes):
        wk, bk = jax.random.split(keys[1 + t])
        weights.append(
            jax.random.normal(wk, (pd, 1, K, K), jnp.float32) * 0.2)
        biases.append(jax.random.normal(bk, (pd,), jnp.float32) * 0.1)

    # BatchNorm2d(C) parameters / running stats (eval mode), deterministic.
    gamma = jax.random.uniform(keys[4], (C,), jnp.float32, 0.8, 1.2)
    beta = jax.random.normal(keys[5], (C,), jnp.float32) * 0.1
    running_mean = jax.random.normal(keys[6], (C,), jnp.float32) * 0.1
    running_var = jax.random.uniform(keys[7], (C,), jnp.float32, 0.5, 1.5)

    out = multi_kernel_conv_norm_active(
        x, weights, biases, gamma, beta, running_mean, running_var,
        kernel_sizes)
    out = jax.block_until_ready(out)

    ref = _reference(x, weights, biases, gamma, beta, running_mean,
                     running_var, kernel_sizes)
    ref = jax.block_until_ready(ref)

    assert out.shape == (B, C, H, W)
    np.testing.assert_allclose(np.asarray(out), np.asarray(ref),
                               rtol=1e-4, atol=1e-5)
    print("KERNEL_OK")
</pallas_src>

<mosaic_0001>
module attributes {stable_mosaic.version = 11 : i64} {
  func.func @_fused_dwconv_bn_hswish_kernel(%arg0: i32, %arg1: i32, %arg2: memref<1x16x16x4xf32, #tpu.memory_space<vmem>>, %arg3: memref<5x5x4xf32, #tpu.memory_space<vmem>>, %arg4: memref<1x1x4xf32, #tpu.memory_space<vmem>>, %arg5: memref<1x16x16x4xf32, #tpu.memory_space<vmem>>, %arg6: memref<20x20x4xf32, #tpu.memory_space<vmem>>) attributes {dimension_semantics = [#tpu.dimension_semantics<parallel>, #tpu.dimension_semantics<parallel>], iteration_bounds = array<i64: 2, 1>, scalar_prefetch = 0 : i64, scratch_operands = 1 : i64, tpu.core_type = #tpu.core_type<tc>, window_params = [{transform_indices = @transform_0, window_bounds = array<i64: 1, 16, 16, 4>}, {transform_indices = @transform_1, window_bounds = array<i64: 5, 5, 4>}, {transform_indices = @transform_2, window_bounds = array<i64: 1, 1, 4>}, {transform_indices = @transform_3, window_bounds = array<i64: 1, 16, 16, 4>}]} {
    %cst = arith.constant 0.000000e+00 : f32
    %0 = vector.broadcast %cst : f32 to vector<20x20x4xf32>
    %c0 = arith.constant 0 : index
    %c0_0 = arith.constant 0 : index
    %c0_1 = arith.constant 0 : index
    %1 = vector.load %arg6[%c0, %c0_0, %c0_1] : memref<20x20x4xf32, #tpu.memory_space<vmem>>, vector<20x20x4xf32>
    tpu.vector_store %arg6[%c0, %c0_0, %c0_1], %0 {strides = array<i32>} : memref<20x20x4xf32, #tpu.memory_space<vmem>>, vector<20x20x4xf32>,
    %c0_2 = arith.constant 0 : index
    %c0_3 = arith.constant 0 : index
    %c0_4 = arith.constant 0 : index
    %c0_5 = arith.constant 0 : index
    %2 = vector.load %arg2[%c0_2, %c0_3, %c0_4, %c0_5] : memref<1x16x16x4xf32, #tpu.memory_space<vmem>>, vector<1x16x16x4xf32>
    %3 = vector.shape_cast %2 : vector<1x16x16x4xf32> to vector<16x16x4xf32>
    %c2 = arith.constant 2 : index
    %c2_6 = arith.constant 2 : index
    %c0_7 = arith.constant 0 : index
    %4 = vector.load %arg6[%c2, %c2_6, %c0_7] : memref<20x20x4xf32, #tpu.memory_space<vmem>>, vector<16x16x4xf32>
    tpu.vector_store %arg6[%c2, %c2_6, %c0_7], %3 {strides = array<i32>} : memref<20x20x4xf32, #tpu.memory_space<vmem>>, vector<16x16x4xf32>,
    %c0_8 = arith.constant 0 : index
    %c0_9 = arith.constant 0 : index
    %c0_10 = arith.constant 0 : index
    %5 = vector.load %arg6[%c0_8, %c0_9, %c0_10] : memref<20x20x4xf32, #tpu.memory_space<vmem>>, vector<20x20x4xf32>
    %c0_11 = arith.constant 0 : index
    %c0_12 = arith.constant 0 : index
    %c0_13 = arith.constant 0 : index
    %6 = vector.load %arg3[%c0_11, %c0_12, %c0_13] : memref<5x5x4xf32, #tpu.memory_space<vmem>>, vector<5x5x4xf32>
    %cst_14 = arith.constant 0.000000e+00 : f32
    %7 = vector.broadcast %cst_14 : f32 to vector<16x16x4xf32>
    %8 = vector.extract_strided_slice %5 {offsets = [0, 0, 0], sizes = [16, 16, 4], strides = [1, 1, 1]} : vector<20x20x4xf32> to vector<16x16x4xf32>
    %9 = vector.extract_strided_slice %6 {offsets = [0, 0, 0], sizes = [1, 1, 4], strides = [1, 1, 1]} : vector<5x5x4xf32> to vector<1x1x4xf32>
    %10 = vector.shape_cast %9 : vector<1x1x4xf32> to vector<4xf32>
    %11 = vector.shape_cast %10 : vector<4xf32> to vector<1x1x4xf32>
    %12 = vector.broadcast %11 : vector<1x1x4xf32> to vector<16x16x4xf32>
    %13 = arith.mulf %8, %12 : vector<16x16x4xf32>
    %14 = arith.addf %7, %13 : vector<16x16x4xf32>
    %15 = vector.extract_strided_slice %5 {offsets = [0, 1, 0], sizes = [16, 16, 4], strides = [1, 1, 1]} : vector<20x20x4xf32> to vector<16x16x4xf32>
    %16 = vector.extract_strided_slice %6 {offsets = [0, 1, 0], sizes = [1, 1, 4], strides = [1, 1, 1]} : vector<5x5x4xf32> to vector<1x1x4xf32>
    %17 = vector.shape_cast %16 : vector<1x1x4xf32> to vector<4xf32>
    %18 = vector.shape_cast %17 : vector<4xf32> to vector<1x1x4xf32>
    %19 = vector.broadcast %18 : vector<1x1x4xf32> to vector<16x16x4xf32>
    %20 = arith.mulf %15, %19 : vector<16x16x4xf32>
    %21 = arith.addf %14, %20 : vector<16x16x4xf32>
    %22 = vector.extract_strided_slice %5 {offsets = [0, 2, 0], sizes = [16, 16, 4], strides = [1, 1, 1]} : vector<20x20x4xf32> to vector<16x16x4xf32>
    %23 = vector.extract_strided_slice %6 {offsets = [0, 2, 0], sizes = [1, 1, 4], strides = [1, 1, 1]} : vector<5x5x4xf32> to vector<1x1x4xf32>
    %24 = vector.shape_cast %23 : vector<1x1x4xf32> to vector<4xf32>
    %25 = vector.shape_cast %24 : vector<4xf32> to vector<1x1x4xf32>
    %26 = vector.broadcast %25 : vector<1x1x4xf32> to vector<16x16x4xf32>
    %27 = arith.mulf %22, %26 : vector<16x16x4xf32>
    %28 = arith.addf %21, %27 : vector<16x16x4xf32>
    %29 = vector.extract_strided_slice %5 {offsets = [0, 3, 0], sizes = [16, 16, 4], strides = [1, 1, 1]} : vector<20x20x4xf32> to vector<16x16x4xf32>
    %30 = vector.extract_strided_slice %6 {offsets = [0, 3, 0], sizes = [1, 1, 4], strides = [1, 1, 1]} : vector<5x5x4xf32> to vector<1x1x4xf32>
    %31 = vector.shape_cast %30 : vector<1x1x4xf32> to vector<4xf32>
    %32 = vector.shape_cast %31 : vector<4xf32> to vector<1x1x4xf32>
    %33 = vector.broadcast %32 : vector<1x1x4xf32> to vector<16x16x4xf32>
    %34 = arith.mulf %29, %33 : vector<16x16x4xf32>
    %35 = arith.addf %28, %34 : vector<16x16x4xf32>
    %36 = vector.extract_strided_slice %5 {offsets = [0, 4, 0], sizes = [16, 16, 4], strides = [1, 1, 1]} : vector<20x20x4xf32> to vector<16x16x4xf32>
    %37 = vector.extract_strided_slice %6 {offsets = [0, 4, 0], sizes = [1, 1, 4], strides = [1, 1, 1]} : vector<5x5x4xf32> to vector<1x1x4xf32>
    %38 = vector.shape_cast %37 : vector<1x1x4xf32> to vector<4xf32>
    %39 = vector.shape_cast %38 : vector<4xf32> to vector<1x1x4xf32>
    %40 = vector.broadcast %39 : vector<1x1x4xf32> to vector<16x16x4xf32>
    %41 = arith.mulf %36, %40 : vector<16x16x4xf32>
    %42 = arith.addf %35, %41 : vector<16x16x4xf32>
    %43 = vector.extract_strided_slice %5 {offsets = [1, 0, 0], sizes = [16, 16, 4], strides = [1, 1, 1]} : vector<20x20x4xf32> to vector<16x16x4xf32>
    %44 = vector.extract_strided_slice %6 {offsets = [1, 0, 0], sizes = [1, 1, 4], strides = [1, 1, 1]} : vector<5x5x4xf32> to vector<1x1x4xf32>
    %45 = vector.shape_cast %44 : vector<1x1x4xf32> to vector<4xf32>
    %46 = vector.shape_cast %45 : vector<4xf32> to vector<1x1x4xf32>
    %47 = vector.broadcast %46 : vector<1x1x4xf32> to vector<16x16x4xf32>
    %48 = arith.mulf %43, %47 : vector<16x16x4xf32>
    %49 = arith.addf %42, %48 : vector<16x16x4xf32>
    %50 = vector.extract_strided_slice %5 {offsets = [1, 1, 0], sizes = [16, 16, 4], strides = [1, 1, 1]} : vector<20x20x4xf32> to vector<16x16x4xf32>
    %51 = vector.extract_strided_slice %6 {offsets = [1, 1, 0], sizes = [1, 1, 4], strides = [1, 1, 1]} : vector<5x5x4xf32> to vector<1x1x4xf32>
    %52 = vector.shape_cast %51 : vector<1x1x4xf32> to vector<4xf32>
    %53 = vector.shape_cast %52 : vector<4xf32> to vector<1x1x4xf32>
    %54 = vector.broadcast %53 : vector<1x1x4xf32> to vector<16x16x4xf32>
    %55 = arith.mulf %50, %54 : vector<16x16x4xf32>
    %56 = arith.addf %49, %55 : vector<16x16x4xf32>
    %57 = vector.extract_strided_slice %5 {offsets = [1, 2, 0], sizes = [16, 16, 4], strides = [1, 1, 1]} : vector<20x20x4xf32> to vector<16x16x4xf32>
    %58 = vector.extract_strided_slice %6 {offsets = [1, 2, 0], sizes = [1, 1, 4], strides = [1, 1, 1]} : vector<5x5x4xf32> to vector<1x1x4xf32>
    %59 = vector.shape_cast %58 : vector<1x1x4xf32> to vector<4xf32>
    %60 = vector.shape_cast %59 : vector<4xf32> to vector<1x1x4xf32>
    %61 = vector.broadcast %60 : vector<1x1x4xf32> to vector<16x16x4xf32>
    %62 = arith.mulf %57, %61 : vector<16x16x4xf32>
    %63 = arith.addf %56, %62 : vector<16x16x4xf32>
    %64 = vector.extract_strided_slice %5 {offsets = [1, 3, 0], sizes = [16, 16, 4], strides = [1, 1, 1]} : vector<20x20x4xf32> to vector<16x16x4xf32>
    %65 = vector.extract_strided_slice %6 {offsets = [1, 3, 0], sizes = [1, 1, 4], strides = [1, 1, 1]} : vector<5x5x4xf32> to vector<1x1x4xf32>
    %66 = vector.shape_cast %65 : vector<1x1x4xf32> to vector<4xf32>
    %67 = vector.shape_cast %66 : vector<4xf32> to vector<1x1x4xf32>
    %68 = vector.broadcast %67 : vector<1x1x4xf32> to vector<16x16x4xf32>
    %69 = arith.mulf %64, %68 : vector<16x16x4xf32>
    %70 = arith.addf %63, %69 : vector<16x16x4xf32>
    %71 = vector.extract_strided_slice %5 {offsets = [1, 4, 0], sizes = [16, 16, 4], strides = [1, 1, 1]} : vector<20x20x4xf32> to vector<16x16x4xf32>
    %72 = vector.extract_strided_slice %6 {offsets = [1, 4, 0], sizes = [1, 1, 4], strides = [1, 1, 1]} : vector<5x5x4xf32> to vector<1x1x4xf32>
    %73 = vector.shape_cast %72 : vector<1x1x4xf32> to vector<4xf32>
    %74 = vector.shape_cast %73 : vector<4xf32> to vector<1x1x4xf32>
    %75 = vector.broadcast %74 : vector<1x1x4xf32> to vector<16x16x4xf32>
    %76 = arith.mulf %71, %75 : vector<16x16x4xf32>
    %77 = arith.addf %70, %76 : vector<16x16x4xf32>
    %78 = vector.extract_strided_slice %5 {offsets = [2, 0, 0], sizes = [16, 16, 4], strides = [1, 1, 1]} : vector<20x20x4xf32> to vector<16x16x4xf32>
    %79 = vector.extract_strided_slice %6 {offsets = [2, 0, 0], sizes = [1, 1, 4], strides = [1, 1, 1]} : vector<5x5x4xf32> to vector<1x1x4xf32>
    %80 = vector.shape_cast %79 : vector<1x1x4xf32> to vector<4xf32>
    %81 = vector.shape_cast %80 : vector<4xf32> to vector<1x1x4xf32>
    %82 = vector.broadcast %81 : vector<1x1x4xf32> to vector<16x16x4xf32>
    %83 = arith.mulf %78, %82 : vector<16x16x4xf32>
    %84 = arith.addf %77, %83 : vector<16x16x4xf32>
    %85 = vector.extract_strided_slice %5 {offsets = [2, 1, 0], sizes = [16, 16, 4], strides = [1, 1, 1]} : vector<20x20x4xf32> to vector<16x16x4xf32>
    %86 = vector.extract_strided_slice %6 {offsets = [2, 1, 0], sizes = [1, 1, 4], strides = [1, 1, 1]} : vector<5x5x4xf32> to vector<1x1x4xf32>
    %87 = vector.shape_cast %86 : vector<1x1x4xf32> to vector<4xf32>
    %88 = vector.shape_cast %87 : vector<4xf32> to vector<1x1x4xf32>
    %89 = vector.broadcast %88 : vector<1x1x4xf32> to vector<16x16x4xf32>
    %90 = arith.mulf %85, %89 : vector<16x16x4xf32>
    %91 = arith.addf %84, %90 : vector<16x16x4xf32>
    %92 = vector.extract_strided_slice %5 {offsets = [2, 2, 0], sizes = [16, 16, 4], strides = [1, 1, 1]} : vector<20x20x4xf32> to vector<16x16x4xf32>
    %93 = vector.extract_strided_slice %6 {offsets = [2, 2, 0], sizes = [1, 1, 4], strides = [1, 1, 1]} : vector<5x5x4xf32> to vector<1x1x4xf32>
    %94 = vector.shape_cast %93 : vector<1x1x4xf32> to vector<4xf32>
    %95 = vector.shape_cast %94 : vector<4xf32> to vector<1x1x4xf32>
    %96 = vector.broadcast %95 : vector<1x1x4xf32> to vector<16x16x4xf32>
    %97 = arith.mulf %92, %96 : vector<16x16x4xf32>
    %98 = arith.addf %91, %97 : vector<16x16x4xf32>
    %99 = vector.extract_strided_slice %5 {offsets = [2, 3, 0], sizes = [16, 16, 4], strides = [1, 1, 1]} : vector<20x20x4xf32> to vector<16x16x4xf32>
    %100 = vector.extract_strided_slice %6 {offsets = [2, 3, 0], sizes = [1, 1, 4], strides = [1, 1, 1]} : vector<5x5x4xf32> to vector<1x1x4xf32>
    %101 = vector.shape_cast %100 : vector<1x1x4xf32> to vector<4xf32>
    %102 = vector.shape_cast %101 : vector<4xf32> to vector<1x1x4xf32>
    %103 = vector.broadcast %102 : vector<1x1x4xf32> to vector<16x16x4xf32>
    %104 = arith.mulf %99, %103 : vector<16x16x4xf32>
    %105 = arith.addf %98, %104 : vector<16x16x4xf32>
    %106 = vector.extract_strided_slice %5 {offsets = [2, 4, 0], sizes = [16, 16, 4], strides = [1, 1, 1]} : vector<20x20x4xf32> to vector<16x16x4xf32>
    %107 = vector.extract_strided_slice %6 {offsets = [2, 4, 0], sizes = [1, 1, 4], strides = [1, 1, 1]} : vector<5x5x4xf32> to vector<1x1x4xf32>
    %108 = vector.shape_cast %107 : vector<1x1x4xf32> to vector<4xf32>
    %109 = vector.shape_cast %108 : vector<4xf32> to vector<1x1x4xf32>
    %110 = vector.broadcast %109 : vector<1x1x4xf32> to vector<16x16x4xf32>
    %111 = arith.mulf %106, %110 : vector<16x16x4xf32>
    %112 = arith.addf %105, %111 : vector<16x16x4xf32>
    %113 = vector.extract_strided_slice %5 {offsets = [3, 0, 0], sizes = [16, 16, 4], strides = [1, 1, 1]} : vector<20x20x4xf32> to vector<16x16x4xf32>
    %114 = vector.extract_strided_slice %6 {offsets = [3, 0, 0], sizes = [1, 1, 4], strides = [1, 1, 1]} : vector<5x5x4xf32> to vector<1x1x4xf32>
    %115 = vector.shape_cast %114 : vector<1x1x4xf32> to vector<4xf32>
    %116 = vector.shape_cast %115 : vector<4xf32> to vector<1x1x4xf32>
    %117 = vector.broadcast %116 : vector<1x1x4xf32> to vector<16x16x4xf32>
    %118 = arith.mulf %113, %117 : vector<16x16x4xf32>
    %119 = arith.addf %112, %118 : vector<16x16x4xf32>
    %120 = vector.extract_strided_slice %5 {offsets = [3, 1, 0], sizes = [16, 16, 4], strides = [1, 1, 1]} : vector<20x20x4xf32> to vector<16x16x4xf32>
    %121 = vector.extract_strided_slice %6 {offsets = [3, 1, 0], sizes = [1, 1, 4], strides = [1, 1, 1]} : vector<5x5x4xf32> to vector<1x1x4xf32>
    %122 = vector.shape_cast %121 : vector<1x1x4xf32> to vector<4xf32>
    %123 = vector.shape_cast %122 : vector<4xf32> to vector<1x1x4xf32>
    %124 = vector.broadcast %123 : vector<1x1x4xf32> to vector<16x16x4xf32>
    %125 = arith.mulf %120, %124 : vector<16x16x4xf32>
    %126 = arith.addf %119, %125 : vector<16x16x4xf32>
    %127 = vector.extract_strided_slice %5 {offsets = [3, 2, 0], sizes = [16, 16, 4], strides = [1, 1, 1]} : vector<20x20x4xf32> to vector<16x16x4xf32>
    %128 = vector.extract_strided_slice %6 {offsets = [3, 2, 0], sizes = [1, 1, 4], strides = [1, 1, 1]} : vector<5x5x4xf32> to vector<1x1x4xf32>
    %129 = vector.shape_cast %128 : vector<1x1x4xf32> to vector<4xf32>
    %130 = vector.shape_cast %129 : vector<4xf32> to vector<1x1x4xf32>
    %131 = vector.broadcast %130 : vector<1x1x4xf32> to vector<16x16x4xf32>
    %132 = arith.mulf %127, %131 : vector<16x16x4xf32>
    %133 = arith.addf %126, %132 : vector<16x16x4xf32>
    %134 = vector.extract_strided_slice %5 {offsets = [3, 3, 0], sizes = [16, 16, 4], strides = [1, 1, 1]} : vector<20x20x4xf32> to vector<16x16x4xf32>
    %135 = vector.extract_strided_slice %6 {offsets = [3, 3, 0], sizes = [1, 1, 4], strides = [1, 1, 1]} : vector<5x5x4xf32> to vector<1x1x4xf32>
    %136 = vector.shape_cast %135 : vector<1x1x4xf32> to vector<4xf32>
    %137 = vector.shape_cast %136 : vector<4xf32> to vector<1x1x4xf32>
    %138 = vector.broadcast %137 : vector<1x1x4xf32> to vector<16x16x4xf32>
    %139 = arith.mulf %134, %138 : vector<16x16x4xf32>
    %140 = arith.addf %133, %139 : vector<16x16x4xf32>
    %141 = vector.extract_strided_slice %5 {offsets = [3, 4, 0], sizes = [16, 16, 4], strides = [1, 1, 1]} : vector<20x20x4xf32> to vector<16x16x4xf32>
    %142 = vector.extract_strided_slice %6 {offsets = [3, 4, 0], sizes = [1, 1, 4], strides = [1, 1, 1]} : vector<5x5x4xf32> to vector<1x1x4xf32>
    %143 = vector.shape_cast %142 : vector<1x1x4xf32> to vector<4xf32>
    %144 = vector.shape_cast %143 : vector<4xf32> to vector<1x1x4xf32>
    %145 = vector.broadcast %144 : vector<1x1x4xf32> to vector<16x16x4xf32>
    %146 = arith.mulf %141, %145 : vector<16x16x4xf32>
    %147 = arith.addf %140, %146 : vector<16x16x4xf32>
    %148 = vector.extract_strided_slice %5 {offsets = [4, 0, 0], sizes = [16, 16, 4], strides = [1, 1, 1]} : vector<20x20x4xf32> to vector<16x16x4xf32>
    %149 = vector.extract_strided_slice %6 {offsets = [4, 0, 0], sizes = [1, 1, 4], strides = [1, 1, 1]} : vector<5x5x4xf32> to vector<1x1x4xf32>
    %150 = vector.shape_cast %149 : vector<1x1x4xf32> to vector<4xf32>
    %151 = vector.shape_cast %150 : vector<4xf32> to vector<1x1x4xf32>
    %152 = vector.broadcast %151 : vector<1x1x4xf32> to vector<16x16x4xf32>
    %153 = arith.mulf %148, %152 : vector<16x16x4xf32>
    %154 = arith.addf %147, %153 : vector<16x16x4xf32>
    %155 = vector.extract_strided_slice %5 {offsets = [4, 1, 0], sizes = [16, 16, 4], strides = [1, 1, 1]} : vector<20x20x4xf32> to vector<16x16x4xf32>
    %156 = vector.extract_strided_slice %6 {offsets = [4, 1, 0], sizes = [1, 1, 4], strides = [1, 1, 1]} : vector<5x5x4xf32> to vector<1x1x4xf32>
    %157 = vector.shape_cast %156 : vector<1x1x4xf32> to vector<4xf32>
    %158 = vector.shape_cast %157 : vector<4xf32> to vector<1x1x4xf32>
    %159 = vector.broadcast %158 : vector<1x1x4xf32> to vector<16x16x4xf32>
    %160 = arith.mulf %155, %159 : vector<16x16x4xf32>
    %161 = arith.addf %154, %160 : vector<16x16x4xf32>
    %162 = vector.extract_strided_slice %5 {offsets = [4, 2, 0], sizes = [16, 16, 4], strides = [1, 1, 1]} : vector<20x20x4xf32> to vector<16x16x4xf32>
    %163 = vector.extract_strided_slice %6 {offsets = [4, 2, 0], sizes = [1, 1, 4], strides = [1, 1, 1]} : vector<5x5x4xf32> to vector<1x1x4xf32>
    %164 = vector.shape_cast %163 : vector<1x1x4xf32> to vector<4xf32>
    %165 = vector.shape_cast %164 : vector<4xf32> to vector<1x1x4xf32>
    %166 = vector.broadcast %165 : vector<1x1x4xf32> to vector<16x16x4xf32>
    %167 = arith.mulf %162, %166 : vector<16x16x4xf32>
    %168 = arith.addf %161, %167 : vector<16x16x4xf32>
    %169 = vector.extract_strided_slice %5 {offsets = [4, 3, 0], sizes = [16, 16, 4], strides = [1, 1, 1]} : vector<20x20x4xf32> to vector<16x16x4xf32>
    %170 = vector.extract_strided_slice %6 {offsets = [4, 3, 0], sizes = [1, 1, 4], strides = [1, 1, 1]} : vector<5x5x4xf32> to vector<1x1x4xf32>
    %171 = vector.shape_cast %170 : vector<1x1x4xf32> to vector<4xf32>
    %172 = vector.shape_cast %171 : vector<4xf32> to vector<1x1x4xf32>
    %173 = vector.broadcast %172 : vector<1x1x4xf32> to vector<16x16x4xf32>
    %174 = arith.mulf %169, %173 : vector<16x16x4xf32>
    %175 = arith.addf %168, %174 : vector<16x16x4xf32>
    %176 = vector.extract_strided_slice %5 {offsets = [4, 4, 0], sizes = [16, 16, 4], strides = [1, 1, 1]} : vector<20x20x4xf32> to vector<16x16x4xf32>
    %177 = vector.extract_strided_slice %6 {offsets = [4, 4, 0], sizes = [1, 1, 4], strides = [1, 1, 1]} : vector<5x5x4xf32> to vector<1x1x4xf32>
    %178 = vector.shape_cast %177 : vector<1x1x4xf32> to vector<4xf32>
    %179 = vector.shape_cast %178 : vector<4xf32> to vector<1x1x4xf32>
    %180 = vector.broadcast %179 : vector<1x1x4xf32> to vector<16x16x4xf32>
    %181 = arith.mulf %176, %180 : vector<16x16x4xf32>
    %182 = arith.addf %175, %181 : vector<16x16x4xf32>
    %c0_15 = arith.constant 0 : index
    %c0_16 = arith.constant 0 : index
    %c0_17 = arith.constant 0 : index
    %183 = vector.load %arg4[%c0_15, %c0_16, %c0_17] : memref<1x1x4xf32, #tpu.memory_space<vmem>>, vector<1x1x4xf32>
    %184 = vector.broadcast %183 : vector<1x1x4xf32> to vector<16x16x4xf32>
    %185 = arith.addf %182, %184 : vector<16x16x4xf32>
    %cst_18 = arith.constant 3.000000e+00 : f32
    %186 = vector.broadcast %cst_18 : f32 to vector<16x16x4xf32>
    %187 = arith.addf %185, %186 : vector<16x16x4xf32>
    %cst_19 = arith.constant 0.000000e+00 : f32
    %cst_20 = arith.constant 6.000000e+00 : f32
    %188 = vector.broadcast %cst_19 : f32 to vector<16x16x4xf32>
    %189 = arith.maximumf %188, %187 : vector<16x16x4xf32>
    %190 = vector.broadcast %cst_20 : f32 to vector<16x16x4xf32>
    %191 = arith.minimumf %190, %189 : vector<16x16x4xf32>
    %192 = arith.mulf %185, %191 : vector<16x16x4xf32>
    %cst_21 = arith.constant 0.166666672 : f32
    %193 = vector.broadcast %cst_21 : f32 to vector<16x16x4xf32>
    %194 = arith.mulf %192, %193 : vector<16x16x4xf32>
    %c0_22 = arith.constant 0 : index
    %c0_23 = arith.constant 0 : index
    %c0_24 = arith.constant 0 : index
    %c0_25 = arith.constant 0 : index
    %195 = vector.load %arg5[%c0_22, %c0_23, %c0_24, %c0_25] : memref<1x16x16x4xf32, #tpu.memory_space<vmem>>, vector<1x16x16x4xf32>
    %196 = vector.shape_cast %195 : vector<1x16x16x4xf32> to vector<16x16x4xf32>
    %197 = vector.shape_cast %194 : vector<16x16x4xf32> to vector<1x16x16x4xf32>
    tpu.vector_store %arg5[%c0_22, %c0_23, %c0_24, %c0_25], %197 {strides = array<i32>} : memref<1x16x16x4xf32, #tpu.memory_space<vmem>>, vector<1x16x16x4xf32>,
    return
  }
  func.func @transform_0(%arg0: i32, %arg1: i32) -> (i32, i32, i32, i32) {
    %c0_i32 = arith.constant 0 : i32
    %c0_i32_0 = arith.constant 0 : i32
    %c0_i32_1 = arith.constant 0 : i32
    return %arg0, %c0_i32, %c0_i32_0, %arg1 : i32, i32, i32, i32
  }
  func.func @transform_1(%arg0: i32, %arg1: i32) -> (i32, i32, i32) {
    %c0_i32 = arith.constant 0 : i32
    %c0_i32_0 = arith.constant 0 : i32
    %c0_i32_1 = arith.constant 0 : i32
    return %c0_i32, %c0_i32_0, %arg1 : i32, i32, i32
  }
  func.func @transform_2(%arg0: i32, %arg1: i32) -> (i32, i32, i32) {
    %c0_i32 = arith.constant 0 : i32
    %c0_i32_0 = arith.constant 0 : i32
    %c0_i32_1 = arith.constant 0 : i32
    return %c0_i32, %c0_i32_0, %arg1 : i32, i32, i32
  }
  func.func @transform_3(%arg0: i32, %arg1: i32) -> (i32, i32, i32, i32) {
    %c0_i32 = arith.constant 0 : i32
    %c0_i32_0 = arith.constant 0 : i32
    %c0_i32_1 = arith.constant 0 : i32
    return %arg0, %c0_i32, %c0_i32_0, %arg1 : i32, i32, i32, i32
  }
}

</mosaic_0001>

<llo_original>
// kernel: tpu_custom_call.1
$region0: #{tpu_custom_call.1}
  #allocation0 [shape = 'u32[]', space=smem, size = 0x4, offset = 0x4, fixed_abs, tag = 'smem constant byte address 0x4 - core index']
  #allocation1 [shape = 'u32[144,128]{1,0:T(1,128)}', space=vmem, size = 0x12000, scoped, tag = 'internal scratch']
  #allocation2 [shape = 'f32[20,20,4]{2,1,0:T(8,128)}', space=vmem, size = 0x3c000, scoped, tag = 'scratch operand']
  %s0 = inlined_call_operand.hbm [shape: f32[2,16,16,4], index: 0, kind: input, shape index: {}]
  %s1 = inlined_call_operand.hbm [shape: f32[5,5,4], index: 1, kind: input, shape index: {}]
  %s2 = inlined_call_operand.hbm [shape: f32[1,1,4], index: 2, kind: input, shape index: {}]
  %s3 = inlined_call_operand.hbm [shape: f32[2,16,16,4], index: 3, kind: output, shape index: {}]
  %s4 = sld [smem:[#allocation0]]
  $region57: #{tpu_custom_call.1} parent=0
    _
  %s6 = ssub.s32 1, %s4
  %s7 = scalar_select 0, %s6, %s4
  $region1: #{tpu_custom_call.1} parent=0
    #allocation3 [shape = 'u8[262144]{0}', space=vmem, size = 0x40000, scoped, tag = 'input window, operand 0']
    #allocation4 [shape = 's32[2]{0}', space=sflag, size = 0x8, scoped, tag = 'scoped memory for tpu_custom_call.1']
    #allocation5 [shape = 's32[2]{0}', space=sflag, size = 0x8, scoped, tag = 'scoped memory for tpu_custom_call.1']
    #allocation6 [shape = 'u8[20480]{0}', space=vmem, size = 0x5000, scoped, tag = 'input window, operand 1, single buffered']
    #allocation7 [shape = 's32[1]{0}', space=sflag, size = 0x4, scoped, tag = 'scoped memory for tpu_custom_call.1']
    #allocation8 [shape = 'u8[512]{0}', space=vmem, size = 0x400, scoped, tag = 'input window, operand 2, single buffered']
    #allocation9 [shape = 'u8[262144]{0}', space=vmem, size = 0x40000, scoped, tag = 'output window, operand 0']
    %8 = vsyncpa [#allocation4], 0
    %s9 = scalar_lea.sflag [#allocation4], 1
    %10 = vsyncpa %s9, 0
    %11 = vsyncpa [#allocation7], 0
    %12 = vsyncpa [#allocation5], 0
    %s13 = scalar_lea.sflag [#allocation5], 1
    %14 = vsyncpa %s13, 0
    loop: start=0, step=1, limit=4
    $region2: #{tpu_custom_call.1} parent=1 // loop_pre_header
      _
    $region3: #{tpu_custom_call.1} parent=1 // loop_header
      %s16 = sphi 0, %s20
      %p17 = scmp.ge.s32.totalorder %s16, 4
      %s23 = sphi 0, %s35
      %s24 = sphi 0, %s31
      %s25 = sphi 0, %s23
      %s26 = sphi 0, %s24
      %s27 = sphi 0, %s25
      %s28 = sphi 0, %s26
      %s40 = sphi 0, %s42
      %s43 = sphi 0, %s40
      %s44 = sphi 0, %s43
      %s60 = sphi 0, %s44
      %s66 = sphi 0, %s68
      %s69 = sphi 0, %s66
      %s70 = sphi 0, %s69
      %s86 = sphi 0, %s70
      %s92 = sphi 0, %s94
      %s95 = sphi 0, %s92
      %s96 = sphi 0, %s95
      %s112 = sphi 0, %s96
      %s120 = sphi 0, %s122
      %s123 = sphi 0, %s120
      %s124 = sphi 0, %s123
      %s140 = sphi 0, %s124
    $region4: #{tpu_custom_call.1} parent=1 // loop_header_branch
      %19 = sbr.rel (%p17) target = $region8
    $region5: #{tpu_custom_call.1} parent=1 // loop_body
      %s21 = ssub.s32 %s16, 1
      %s22 = ssub.s32 %s16, 2
      %s29 = sadd.s32 1, %s24
      %p30 = scmp.ge.s32.totalorder %s29, 1
      %s31 = scalar_select %p30, 0, %s29
      %s32 = sadd.s32 1, %s23
      %s33 = scalar_select %p30, %s32, %s23
      %p34 = scmp.ge.s32.totalorder %s33, 2
      %s35 = scalar_select %p34, 0, %s33
      %s36 = ssub.s32 %s23, %s35
      %s37 = ssub.s32 %s24, %s31
      %s38 = sor.u32 %s36, %s37
      %p39 = scmp.eq.s32.totalorder %s38, 0
      %s41 = sadd.s32 %s40, 1
      %s42 = scalar_select %p39, %s40, %s41
      %p45 = pneg %p39
      %p46 = scmp.eq.s32.totalorder %s16, 1
      %p47 = por %p45, %p46
      %p48 = scmp.ne.s32.totalorder %s40, %s43
      %p49 = scmp.eq.s32.totalorder %s16, 0
      %p50 = por %p48, %p49
      %p51 = scmp.ne.s32.totalorder %s40, %s43
      %p52 = scmp.eq.s32.totalorder %s21, 1
      %p53 = por %p51, %p52
      %p54 = scmp.ne.s32.totalorder %s43, %s44
      %p55 = scmp.eq.s32.totalorder %s21, 0
      %p56 = por %p54, %p55
      %p57 = scmp.ne.s32.totalorder %s43, %s44
      %p58 = scmp.eq.s32.totalorder %s22, 1
      %p59 = por %p57, %p58
      %p61 = scmp.ne.s32.totalorder %s44, %s60
      %p62 = scmp.eq.s32.totalorder %s22, 0
      %p63 = por %p61, %p62
      %s64 = ssub.s32 %s24, %s31
      %p65 = scmp.eq.s32.totalorder %s64, 0
      %s67 = sadd.s32 %s66, 1
      %s68 = scalar_select %p65, %s66, %s67
      %p71 = pneg %p65
      %p72 = scmp.eq.s32.totalorder %s16, 1
      %p73 = por %p71, %p72
      %p74 = scmp.ne.s32.totalorder %s66, %s69
      %p75 = scmp.eq.s32.totalorder %s16, 0
      %p76 = por %p74, %p75
      %p77 = scmp.ne.s32.totalorder %s66, %s69
      %p78 = scmp.eq.s32.totalorder %s21, 1
      %p79 = por %p77, %p78
      %p80 = scmp.ne.s32.totalorder %s69, %s70
      %p81 = scmp.eq.s32.totalorder %s21, 0
      %p82 = por %p80, %p81
      %p83 = scmp.ne.s32.totalorder %s69, %s70
      %p84 = scmp.eq.s32.totalorder %s22, 1
      %p85 = por %p83, %p84
      %p87 = scmp.ne.s32.totalorder %s70, %s86
      %p88 = scmp.eq.s32.totalorder %s22, 0
      %p89 = por %p87, %p88
      %s90 = ssub.s32 %s24, %s31
      %p91 = scmp.eq.s32.totalorder %s90, 0
      %s93 = sadd.s32 %s92, 1
      %s94 = scalar_select %p91, %s92, %s93
      %p97 = pneg %p91
      %p98 = scmp.eq.s32.totalorder %s16, 1
      %p99 = por %p97, %p98
      %p100 = scmp.ne.s32.totalorder %s92, %s95
      %p101 = scmp.eq.s32.totalorder %s16, 0
      %p102 = por %p100, %p101
      %p103 = scmp.ne.s32.totalorder %s92, %s95
      %p104 = scmp.eq.s32.totalorder %s21, 1
      %p105 = por %p103, %p104
      %p106 = scmp.ne.s32.totalorder %s95, %s96
      %p107 = scmp.eq.s32.totalorder %s21, 0
      %p108 = por %p106, %p107
      %p109 = scmp.ne.s32.totalorder %s95, %s96
      %p110 = scmp.eq.s32.totalorder %s22, 1
      %p111 = por %p109, %p110
      %p113 = scmp.ne.s32.totalorder %s96, %s112
      %p114 = scmp.eq.s32.totalorder %s22, 0
      %p115 = por %p113, %p114
      %s116 = ssub.s32 %s23, %s35
      %s117 = ssub.s32 %s24, %s31
      %s118 = sor.u32 %s116, %s117
      %p119 = scmp.eq.s32.totalorder %s118, 0
      %s121 = sadd.s32 %s120, 1
      %s122 = scalar_select %p119, %s120, %s121
      %p125 = pneg %p119
      %p126 = scmp.eq.s32.totalorder %s16, 1
      %p127 = por %p125, %p126
      %p128 = scmp.ne.s32.totalorder %s120, %s123
      %p129 = scmp.eq.s32.totalorder %s16, 0
      %p130 = por %p128, %p129
      %p131 = scmp.ne.s32.totalorder %s120, %s123
      %p132 = scmp.eq.s32.totalorder %s21, 1
      %p133 = por %p131, %p132
      %p134 = scmp.ne.s32.totalorder %s123, %s124
      %p135 = scmp.eq.s32.totalorder %s21, 0
      %p136 = por %p134, %p135
      %p137 = scmp.ne.s32.totalorder %s123, %s124
      %p138 = scmp.eq.s32.totalorder %s22, 1
      %p139 = por %p137, %p138
      %p141 = scmp.ne.s32.totalorder %s124, %s140
      %p142 = scmp.eq.s32.totalorder %s22, 0
      %p143 = por %p141, %p142
      %p144 = scmp.le.s32.totalorder 1, %s16
      %p145 = scmp.lt.s32.totalorder %s16, 3
      %p146 = pnand %p144, %p145
      %p147 = pneg %p146
      // Predicated region
      $region9: #{tpu_custom_call.1} parent=5 // pred_check
        _
      $region10: #{tpu_custom_call.1} parent=5 // pred_check_branch
        %149 = sbr.rel (%p146) target = $region12
      $region11: #{tpu_custom_call.1} parent=5 // pred_region
        %s150 = ssub.s32 %s16, 1
        // Predicated region
        $region13: #{tpu_custom_call.1} parent=11 // pred_check
          %p151 = pneg %p82
        $region14: #{tpu_custom_call.1} parent=11 // pred_check_branch
          %153 = sbr.rel (%p151) target = $region16
        $region15: #{tpu_custom_call.1} parent=11 // pred_region
          %s155 = ssub.s32 640, 640
          %156 = vsyncadd [#allocation7], %s155
          %s157 = smul.addr %s26, 128
          %s158 = scalar_lea.hbm %s1, %s157
          %s159 = sshll.u32 [#allocation6], 4
          %s160 = int_to_ptr.vmem [resolvable:$true] %s159
          %165 = dma.hbm_to_vmem [thread:$0]  %s158, 640, %s160, [#allocation7], 128, 128, 8
        $region16: #{tpu_custom_call.1} parent=11 // pred_fallthru
          _
        // Predicated region
        $region17: #{tpu_custom_call.1} parent=11 // pred_check
          %p166 = pneg %p108
        $region18: #{tpu_custom_call.1} parent=11 // pred_check_branch
          %168 = sbr.rel (%p166) target = $region20
        $region19: #{tpu_custom_call.1} parent=11 // pred_region
          %s170 = ssub.s32 16, 16
          %171 = vsyncadd [#allocation7], %s170
          %s172 = smul.addr %s26, 16
          %s173 = scalar_lea.hbm %s2, %s172
          %s175 = sshll.u32 [#allocation8], 4
          %s176 = int_to_ptr.vmem [resolvable:$true] %s175
          %178 = dma.hbm_to_vmem [thread:$0]  %s173, 16, %s176, [#allocation7]
        $region20: #{tpu_custom_call.1} parent=11 // pred_fallthru
          _
      $region12: #{tpu_custom_call.1} parent=5 // pred_fallthru
        _
      %p179 = scmp.lt.s32.totalorder %s16, 2
      // Predicated region
      $region21: #{tpu_custom_call.1} parent=5 // pred_check
        %p180 = pneg %p179
      $region22: #{tpu_custom_call.1} parent=5 // pred_check_branch
        %182 = sbr.rel (%p180) target = $region24
      $region23: #{tpu_custom_call.1} parent=5 // pred_region
        // Predicated region
        $region25: #{tpu_custom_call.1} parent=23 // pred_check
          %p183 = pneg %p50
        $region26: #{tpu_custom_call.1} parent=23 // pred_check_branch
          %185 = sbr.rel (%p183) target = $region28
        $region27: #{tpu_custom_call.1} parent=23 // pred_region
          %s186 = sand.u32 %s40, 1
          %s187 = scalar_lea.sflag [#allocation4], %s186
          %s188 = sand.u32 %s40, 1
          %s189 = smul.addr %s188, 256
          %s190 = scalar_lea.vmem [#allocation3], %s189
          %s192 = ssub.s32 4096, 4096
          %193 = vsyncadd %s187, %s192
          %s194 = smul.addr %s23, 32
          %s195 = sadd.s32 %s24, %s194
          %s196 = smul.addr %s195, 128
          %s197 = scalar_lea.hbm %s0, %s196
          %s198 = sshll.u32 %s190, 4
          %s199 = int_to_ptr.vmem [resolvable:$true] %s198
          %204 = dma.hbm_to_vmem [thread:$0]  %s197, 4096, %s199, %s187, 128, 128, 8
        $region28: #{tpu_custom_call.1} parent=23 // pred_fallthru
          _
      $region24: #{tpu_custom_call.1} parent=5 // pred_fallthru
        _
      %p205 = scmp.le.s32.totalorder 1, %s16
      %p206 = scmp.lt.s32.totalorder %s16, 3
      %p207 = pnand %p205, %p206
      %p208 = pneg %p207
      // Predicated region
      $region29: #{tpu_custom_call.1} parent=5 // pred_check
        _
      $region30: #{tpu_custom_call.1} parent=5 // pred_check_branch
        %210 = sbr.rel (%p207) target = $region32
      $region31: #{tpu_custom_call.1} parent=5 // pred_region
        %s211 = ssub.s32 %s16, 1
        %s212 = sand.u32 %s43, 1
        %s213 = scalar_lea.sflag [#allocation4], %s212
        %s214 = sand.u32 %s43, 1
        %s215 = smul.addr %s214, 256
        %s216 = scalar_lea.vmem [#allocation3], %s215
        // Predicated region
        $region33: #{tpu_custom_call.1} parent=31 // pred_check
          %p217 = pneg %p56
        $region34: #{tpu_custom_call.1} parent=31 // pred_check_branch
          %219 = sbr.rel (%p217) target = $region36
        $region35: #{tpu_custom_call.1} parent=31 // pred_region
          %220 = dma.done %s213, 4096
        $region36: #{tpu_custom_call.1} parent=31 // pred_fallthru
          _
        // Predicated region
        $region37: #{tpu_custom_call.1} parent=31 // pred_check
          %p221 = pneg %p82
        $region38: #{tpu_custom_call.1} parent=31 // pred_check_branch
          %223 = sbr.rel (%p221) target = $region40
        $region39: #{tpu_custom_call.1} parent=31 // pred_region
          %224 = dma.done [#allocation7], 640
        $region40: #{tpu_custom_call.1} parent=31 // pred_fallthru
          _
        // Predicated region
        $region41: #{tpu_custom_call.1} parent=31 // pred_check
          %p225 = pneg %p108
        $region42: #{tpu_custom_call.1} parent=31 // pred_check_branch
          %227 = sbr.rel (%p225) target = $region44
        $region43: #{tpu_custom_call.1} parent=31 // pred_region
          %228 = dma.done [#allocation7], 16
        $region44: #{tpu_custom_call.1} parent=31 // pred_fallthru
          _
        %s229 = sand.u32 %s43, 1
        %s230 = scalar_lea.sflag [#allocation4], %s229
        %s231 = sand.u32 %s43, 1
        %s232 = smul.addr %s231, 256
        %s233 = scalar_lea.vmem [#allocation3], %s232
        %p234 = pneg %p56
        %p235 = pneg %p53
        %p236 = pneg %p82
        %p237 = pneg %p79
        %p238 = pneg %p108
        %p239 = pneg %p105
        %p240 = pneg %p136
        %p241 = pneg %p133
        %s242 = sand.u32 %s123, 1
        %s243 = scalar_lea.sflag [#allocation5], %s242
        %s244 = sand.u32 %s123, 1
        %s245 = smul.addr %s244, 256
        %s246 = scalar_lea.vmem [#allocation9], %s245
        %vm247 = vcmask 31744
        %248 = vst.msk [vmem:[#allocation2] sm:$0xff] %vm247, 0.0
        %249 = vst.msk [vmem:[#allocation2 + $0x8] sm:$0xff] %vm247, 0.0
        %vm250 = vcmask 27648
        %251 = vst.msk [vmem:[#allocation2 + $0x10] sm:$0xf] %vm250, 0.0
        %252 = vst.msk [vmem:[#allocation2 + $0x18] sm:$0xff] %vm247, 0.0
        %253 = vst.msk [vmem:[#allocation2 + $0x20] sm:$0xff] %vm247, 0.0
        %254 = vst.msk [vmem:[#allocation2 + $0x28] sm:$0xf] %vm250, 0.0
        %255 = vst.msk [vmem:[#allocation2 + $0x30] sm:$0xff] %vm247, 0.0
        %256 = vst.msk [vmem:[#allocation2 + $0x38] sm:$0xff] %vm247, 0.0
        %257 = vst.msk [vmem:[#allocation2 + $0x40] sm:$0xf] %vm250, 0.0
        %258 = vst.msk [vmem:[#allocation2 + $0x48] sm:$0xff] %vm247, 0.0
        %259 = vst.msk [vmem:[#allocation2 + $0x50] sm:$0xff] %vm247, 0.0
        %260 = vst.msk [vmem:[#allocation2 + $0x58] sm:$0xf] %vm250, 0.0
        %261 = vst.msk [vmem:[#allocation2 + $0x60] sm:$0xff] %vm247, 0.0
        %262 = vst.msk [vmem:[#allocation2 + $0x68] sm:$0xff] %vm247, 0.0
        %263 = vst.msk [vmem:[#allocation2 + $0x70] sm:$0xf] %vm250, 0.0
        %264 = vst.msk [vmem:[#allocation2 + $0x78] sm:$0xff] %vm247, 0.0
        %265 = vst.msk [vmem:[#allocation2 + $0x80] sm:$0xff] %vm247, 0.0
        %266 = vst.msk [vmem:[#allocation2 + $0x88] sm:$0xf] %vm250, 0.0
        %267 = vst.msk [vmem:[#allocation2 + $0x90] sm:$0xff] %vm247, 0.0
        %268 = vst.msk [vmem:[#allocation2 + $0x98] sm:$0xff] %vm247, 0.0
        %269 = vst.msk [vmem:[#allocation2 + $0xa0] sm:$0xf] %vm250, 0.0
        %270 = vst.msk [vmem:[#allocation2 + $0xa8] sm:$0xff] %vm247, 0.0
        %271 = vst.msk [vmem:[#allocation2 + $0xb0] sm:$0xff] %vm247, 0.0
        %272 = vst.msk [vmem:[#allocation2 + $0xb8] sm:$0xf] %vm250, 0.0
        %273 = vst.msk [vmem:[#allocation2 + $0xc0] sm:$0xff] %vm247, 0.0
        %274 = vst.msk [vmem:[#allocation2 + $0xc8] sm:$0xff] %vm247, 0.0
        %275 = vst.msk [vmem:[#allocation2 + $0xd0] sm:$0xf] %vm250, 0.0
        %276 = vst.msk [vmem:[#allocation2 + $0xd8] sm:$0xff] %vm247, 0.0
        %277 = vst.msk [vmem:[#allocation2 + $0xe0] sm:$0xff] %vm247, 0.0
        %278 = vst.msk [vmem:[#allocation2 + $0xe8] sm:$0xf] %vm250, 0.0
        %279 = vst.msk [vmem:[#allocation2 + $0xf0] sm:$0xff] %vm247, 0.0
        %280 = vst.msk [vmem:[#allocation2 + $0xf8] sm:$0xff] %vm247, 0.0
        %281 = vst.msk [vmem:[#allocation2 + $0x100] sm:$0xf] %vm250, 0.0
        %282 = vst.msk [vmem:[#allocation2 + $0x108] sm:$0xff] %vm247, 0.0
        %283 = vst.msk [vmem:[#allocation2 + $0x110] sm:$0xff] %vm247, 0.0
        %284 = vst.msk [vmem:[#allocation2 + $0x118] sm:$0xf] %vm250, 0.0
        %285 = vst.msk [vmem:[#allocation2 + $0x120] sm:$0xff] %vm247, 0.0
        %286 = vst.msk [vmem:[#allocation2 + $0x128] sm:$0xff] %vm247, 0.0
        %287 = vst.msk [vmem:[#allocation2 + $0x130] sm:$0xf] %vm250, 0.0
        %288 = vst.msk [vmem:[#allocation2 + $0x138] sm:$0xff] %vm247, 0.0
        %289 = vst.msk [vmem:[#allocation2 + $0x140] sm:$0xff] %vm247, 0.0
        %290 = vst.msk [vmem:[#allocation2 + $0x148] sm:$0xf] %vm250, 0.0
        %291 = vst.msk [vmem:[#allocation2 + $0x150] sm:$0xff] %vm247, 0.0
        %292 = vst.msk [vmem:[#allocation2 + $0x158] sm:$0xff] %vm247, 0.0
        %293 = vst.msk [vmem:[#allocation2 + $0x160] sm:$0xf] %vm250, 0.0
        %294 = vst.msk [vmem:[#allocation2 + $0x168] sm:$0xff] %vm247, 0.0
        %295 = vst.msk [vmem:[#allocation2 + $0x170] sm:$0xff] %vm247, 0.0
        %296 = vst.msk [vmem:[#allocation2 + $0x178] sm:$0xf] %vm250, 0.0
        %297 = vst.msk [vmem:[#allocation2 + $0x180] sm:$0xff] %vm247, 0.0
        %298 = vst.msk [vmem:[#allocation2 + $0x188] sm:$0xff] %vm247, 0.0
        %299 = vst.msk [vmem:[#allocation2 + $0x190] sm:$0xf] %vm250, 0.0
        %300 = vst.msk [vmem:[#allocation2 + $0x198] sm:$0xff] %vm247, 0.0
        %301 = vst.msk [vmem:[#allocation2 + $0x1a0] sm:$0xff] %vm247, 0.0
        %302 = vst.msk [vmem:[#allocation2 + $0x1a8] sm:$0xf] %vm250, 0.0
        %303 = vst.msk [vmem:[#allocation2 + $0x1b0] sm:$0xff] %vm247, 0.0
        %304 = vst.msk [vmem:[#allocation2 + $0x1b8] sm:$0xff] %vm247, 0.0
        %305 = vst.msk [vmem:[#allocation2 + $0x1c0] sm:$0xf] %vm250, 0.0
        %306 = vst.msk [vmem:[#allocation2 + $0x1c8] sm:$0xff] %vm247, 0.0
        %307 = vst.msk [vmem:[#allocation2 + $0x1d0] sm:$0xff] %vm247, 0.0
        %308 = vst.msk [vmem:[#allocation2 + $0x1d8] sm:$0xf] %vm250, 0.0
        %v309 = vld [vmem:[%s216] sm:$0xff]
        %v310 = vld [vmem:[%s216 + $0x8] sm:$0xff]
        %v311 = vld [vmem:[%s216 + $0x10] sm:$0xff]
        %v312 = vld [vmem:[%s216 + $0x18] sm:$0xff]
        %v313 = vld [vmem:[%s216 + $0x20] sm:$0xff]
        %v314 = vld [vmem:[%s216 + $0x28] sm:$0xff]
        %v315 = vld [vmem:[%s216 + $0x30] sm:$0xff]
        %v316 = vld [vmem:[%s216 + $0x38] sm:$0xff]
        %v317 = vld [vmem:[%s216 + $0x40] sm:$0xff]
        %v318 = vld [vmem:[%s216 + $0x48] sm:$0xff]
        %v319 = vld [vmem:[%s216 + $0x50] sm:$0xff]
        %v320 = vld [vmem:[%s216 + $0x58] sm:$0xff]
        %v321 = vld [vmem:[%s216 + $0x60] sm:$0xff]
        %v322 = vld [vmem:[%s216 + $0x68] sm:$0xff]
        %v323 = vld [vmem:[%s216 + $0x70] sm:$0xff]
        %v324 = vld [vmem:[%s216 + $0x78] sm:$0xff]
        %v325 = vld [vmem:[%s216 + $0x80] sm:$0xff]
        %v326 = vld [vmem:[%s216 + $0x88] sm:$0xff]
        %v327 = vld [vmem:[%s216 + $0x90] sm:$0xff]
        %v328 = vld [vmem:[%s216 + $0x98] sm:$0xff]
        %v329 = vld [vmem:[%s216 + $0xa0] sm:$0xff]
        %v330 = vld [vmem:[%s216 + $0xa8] sm:$0xff]
        %v331 = vld [vmem:[%s216 + $0xb0] sm:$0xff]
        %v332 = vld [vmem:[%s216 + $0xb8] sm:$0xff]
        %v333 = vld [vmem:[%s216 + $0xc0] sm:$0xff]
        %v334 = vld [vmem:[%s216 + $0xc8] sm:$0xff]
        %v335 = vld [vmem:[%s216 + $0xd0] sm:$0xff]
        %v336 = vld [vmem:[%s216 + $0xd8] sm:$0xff]
        %v337 = vld [vmem:[%s216 + $0xe0] sm:$0xff]
        %v338 = vld [vmem:[%s216 + $0xe8] sm:$0xff]
        %v339 = vld [vmem:[%s216 + $0xf0] sm:$0xff]
        %v340 = vld [vmem:[%s216 + $0xf8] sm:$0xff]
        %s341 = scalar_lea.vmem [#allocation2], 48
        %342 = vst.msk [vmem:[%s341 + $0x2] sm:$0xff] %vm247, %v309
        %343 = vst.msk [vmem:[%s341 + $0xa] sm:$0xff] %vm247, %v310
        %344 = vst.msk [vmem:[%s341 + $0x1a] sm:$0xff] %vm247, %v311
        %345 = vst.msk [vmem:[%s341 + $0x22] sm:$0xff] %vm247, %v312
        %346 = vst.msk [vmem:[%s341 + $0x32] sm:$0xff] %vm247, %v313
        %347 = vst.msk [vmem:[%s341 + $0x3a] sm:$0xff] %vm247, %v314
        %348 = vst.msk [vmem:[%s341 + $0x4a] sm:$0xff] %vm247, %v315
        %349 = vst.msk [vmem:[%s341 + $0x52] sm:$0xff] %vm247, %v316
        %350 = vst.msk [vmem:[%s341 + $0x62] sm:$0xff] %vm247, %v317
        %351 = vst.msk [vmem:[%s341 + $0x6a] sm:$0xff] %vm247, %v318
        %352 = vst.msk [vmem:[%s341 + $0x7a] sm:$0xff] %vm247, %v319
        %353 = vst.msk [vmem:[%s341 + $0x82] sm:$0xff] %vm247, %v320
        %354 = vst.msk [vmem:[%s341 + $0x92] sm:$0xff] %vm247, %v321
        %355 = vst.msk [vmem:[%s341 + $0x9a] sm:$0xff] %vm247, %v322
        %356 = vst.msk [vmem:[%s341 + $0xaa] sm:$0xff] %vm247, %v323
        %357 = vst.msk [vmem:[%s341 + $0xb2] sm:$0xff] %vm247, %v324
        %358 = vst.msk [vmem:[%s341 + $0xc2] sm:$0xff] %vm247, %v325
        %359 = vst.msk [vmem:[%s341 + $0xca] sm:$0xff] %vm247, %v326
        %360 = vst.msk [vmem:[%s341 + $0xda] sm:$0xff] %vm247, %v327
        %361 = vst.msk [vmem:[%s341 + $0xe2] sm:$0xff] %vm247, %v328
        %362 = vst.msk [vmem:[%s341 + $0xf2] sm:$0xff] %vm247, %v329
        %363 = vst.msk [vmem:[%s341 + $0xfa] sm:$0xff] %vm247, %v330
        %364 = vst.msk [vmem:[%s341 + $0x10a] sm:$0xff] %vm247, %v331
        %365 = vst.msk [vmem:[%s341 + $0x112] sm:$0xff] %vm247, %v332
        %366 = vst.msk [vmem:[%s341 + $0x122] sm:$0xff] %vm247, %v333
        %367 = vst.msk [vmem:[%s341 + $0x12a] sm:$0xff] %vm247, %v334
        %368 = vst.msk [vmem:[%s341 + $0x13a] sm:$0xff] %vm247, %v335
        %369 = vst.msk [vmem:[%s341 + $0x142] sm:$0xff] %vm247, %v336
        %370 = vst.msk [vmem:[%s341 + $0x152] sm:$0xff] %vm247, %v337
        %371 = vst.msk [vmem:[%s341 + $0x15a] sm:$0xff] %vm247, %v338
        %372 = vst.msk [vmem:[%s341 + $0x16a] sm:$0xff] %vm247, %v339
        %373 = vst.msk [vmem:[%s341 + $0x172] sm:$0xff] %vm247, %v340
        %v374 = vld [vmem:[#allocation2] sm:$0xff]
        %v375 = vld [vmem:[#allocation2 + $0x8] sm:$0xff]
        %v376 = vld [vmem:[#allocation2 + $0x10] sm:$0xf]
        %v377 = vld [vmem:[#allocation2 + $0x18] sm:$0xff]
        %v378 = vld [vmem:[#allocation2 + $0x20] sm:$0xff]
        %v379 = vld [vmem:[#allocation2 + $0x28] sm:$0xf]
        %v380 = vld [vmem:[#allocation2 + $0x30] sm:$0xff]
        %v381 = vld [vmem:[#allocation2 + $0x38] sm:$0xff]
        %v382 = vld [vmem:[#allocation2 + $0x40] sm:$0xf]
        %v383 = vld [vmem:[#allocation2 + $0x48] sm:$0xff]
        %v384 = vld [vmem:[#allocation2 + $0x50] sm:$0xff]
        %v385 = vld [vmem:[#allocation2 + $0x58] sm:$0xf]
        %v386 = vld [vmem:[#allocation2 + $0x60] sm:$0xff]
        %v387 = vld [vmem:[#allocation2 + $0x68] sm:$0xff]
        %v388 = vld [vmem:[#allocation2 + $0x70] sm:$0xf]
        %v389 = vld [vmem:[#allocation2 + $0x78] sm:$0xff]
        %v390 = vld [vmem:[#allocation2 + $0x80] sm:$0xff]
        %v391 = vld [vmem:[#allocation2 + $0x88] sm:$0xf]
        %v392 = vld [vmem:[#allocation2 + $0x90] sm:$0xff]
        %v393 = vld [vmem:[#allocation2 + $0x98] sm:$0xff]
        %v394 = vld [vmem:[#allocation2 + $0xa0] sm:$0xf]
        %v395 = vld [vmem:[#allocation2 + $0xa8] sm:$0xff]
        %v396 = vld [vmem:[#allocation2 + $0xb0] sm:$0xff]
        %v397 = vld [vmem:[#allocation2 + $0xb8] sm:$0xf]
        %v398 = vld [vmem:[#allocation2 + $0xc0] sm:$0xff]
        %v399 = vld [vmem:[#allocation2 + $0xc8] sm:$0xff]
        %v400 = vld [vmem:[#allocation2 + $0xd0] sm:$0xf]
        %v401 = vld [vmem:[#allocation2 + $0xd8] sm:$0xff]
        %v402 = vld [vmem:[#allocation2 + $0xe0] sm:$0xff]
        %v403 = vld [vmem:[#allocation2 + $0xe8] sm:$0xf]
        %v404 = vld [vmem:[#allocation2 + $0xf0] sm:$0xff]
        %v405 = vld [vmem:[#allocation2 + $0xf8] sm:$0xff]
        %v406 = vld [vmem:[#allocation2 + $0x100] sm:$0xf]
        %v407 = vld [vmem:[#allocation2 + $0x108] sm:$0xff]
        %v408 = vld [vmem:[#allocation2 + $0x110] sm:$0xff]
        %v409 = vld [vmem:[#allocation2 + $0x118] sm:$0xf]
        %v410 = vld [vmem:[#allocation2 + $0x120] sm:$0xff]
        %v411 = vld [vmem:[#allocation2 + $0x128] sm:$0xff]
        %v412 = vld [vmem:[#allocation2 + $0x130] sm:$0xf]
        %v413 = vld [vmem:[#allocation2 + $0x138] sm:$0xff]
        %v414 = vld [vmem:[#allocation2 + $0x140] sm:$0xff]
        %v415 = vld [vmem:[#allocation2 + $0x148] sm:$0xf]
        %v416 = vld [vmem:[#allocation2 + $0x150] sm:$0xff]
        %v417 = vld [vmem:[#allocation2 + $0x158] sm:$0xff]
        %v418 = vld [vmem:[#allocation2 + $0x160] sm:$0xf]
        %v419 = vld [vmem:[#allocation2 + $0x168] sm:$0xff]
        %v420 = vld [vmem:[#allocation2 + $0x170] sm:$0xff]
        %v421 = vld [vmem:[#allocation2 + $0x178] sm:$0xf]
        %v422 = vld [vmem:[#allocation2 + $0x180] sm:$0xff]
        %v423 = vld [vmem:[#allocation2 + $0x188] sm:$0xff]
        %v424 = vld [vmem:[#allocation2 + $0x190] sm:$0xf]
        %v425 = vld [vmem:[#allocation2 + $0x198] sm:$0xff]
        %v426 = vld [vmem:[#allocation2 + $0x1a0] sm:$0xff]
        %v427 = vld [vmem:[#allocation2 + $0x1a8] sm:$0xf]
        %v428 = vld [vmem:[#allocation2 + $0x1b0] sm:$0xff]
        %v429 = vld [vmem:[#allocation2 + $0x1b8] sm:$0xff]
        %v430 = vld [vmem:[#allocation2 + $0x1c0] sm:$0xf]
        %v431 = vld [vmem:[#allocation2 + $0x1c8] sm:$0xff]
        %v432 = vld [vmem:[#allocation2 + $0x1d0] sm:$0xff]
        %v433 = vld [vmem:[#allocation2 + $0x1d8] sm:$0xf]
        %v434 = vld [vmem:[#allocation6] sm:$0x1f]
        %v435 = vld [vmem:[#allocation6 + $0x8] sm:$0x1f]
        %v436 = vld [vmem:[#allocation6 + $0x10] sm:$0x1f]
        %v437 = vld [vmem:[#allocation6 + $0x18] sm:$0x1f]
        %v438 = vld [vmem:[#allocation6 + $0x20] sm:$0x1f]
        %v439 = vlaneseq
        %v440 = vshrl.u32 %v439, 7
        %v441 = vsub.s32 0, %v440
        %v442 = vrot.slane %v434, %v441
        %v443 = vmul.f32 %v374, %v442
        %v444 = vmul.f32 %v375, %v442
        %v445 = vmul.f32 %v377, %v442
        %v446 = vmul.f32 %v378, %v442
        %v447 = vmul.f32 %v380, %v442
        %v448 = vmul.f32 %v381, %v442
        %v449 = vmul.f32 %v383, %v442
        %v450 = vmul.f32 %v384, %v442
        %v451 = vmul.f32 %v386, %v442
        %v452 = vmul.f32 %v387, %v442
        %v453 = vmul.f32 %v389, %v442
        %v454 = vmul.f32 %v390, %v442
        %v455 = vmul.f32 %v392, %v442
        %v456 = vmul.f32 %v393, %v442
        %v457 = vmul.f32 %v395, %v442
        %v458 = vmul.f32 %v396, %v442
        %v459 = vmul.f32 %v398, %v442
        %v460 = vmul.f32 %v399, %v442
        %v461 = vmul.f32 %v401, %v442
        %v462 = vmul.f32 %v402, %v442
        %v463 = vmul.f32 %v404, %v442
        %v464 = vmul.f32 %v405, %v442
        %v465 = vmul.f32 %v407, %v442
        %v466 = vmul.f32 %v408, %v442
        %v467 = vmul.f32 %v410, %v442
        %v468 = vmul.f32 %v411, %v442
        %v469 = vmul.f32 %v413, %v442
        %v470 = vmul.f32 %v414, %v442
        %v471 = vmul.f32 %v416, %v442
        %v472 = vmul.f32 %v417, %v442
        %v473 = vmul.f32 %v419, %v442
        %v474 = vmul.f32 %v420, %v442
        %v475 = vadd.f32 %v443, 0.0
        %v476 = vadd.f32 %v444, 0.0
        %v477 = vadd.f32 %v445, 0.0
        %v478 = vadd.f32 %v446, 0.0
        %v479 = vadd.f32 %v447, 0.0
        %v480 = vadd.f32 %v448, 0.0
        %v481 = vadd.f32 %v449, 0.0
        %v482 = vadd.f32 %v450, 0.0
        %v483 = vadd.f32 %v451, 0.0
        %v484 = vadd.f32 %v452, 0.0
        %v485 = vadd.f32 %v453, 0.0
        %v486 = vadd.f32 %v454, 0.0
        %v487 = vadd.f32 %v455, 0.0
        %v488 = vadd.f32 %v456, 0.0
        %v489 = vadd.f32 %v457, 0.0
        %v490 = vadd.f32 %v458, 0.0
        %v491 = vadd.f32 %v459, 0.0
        %v492 = vadd.f32 %v460, 0.0
        %v493 = vadd.f32 %v461, 0.0
        %v494 = vadd.f32 %v462, 0.0
        %v495 = vadd.f32 %v463, 0.0
        %v496 = vadd.f32 %v464, 0.0
        %v497 = vadd.f32 %v465, 0.0
        %v498 = vadd.f32 %v466, 0.0
        %v499 = vadd.f32 %v467, 0.0
        %v500 = vadd.f32 %v468, 0.0
        %v501 = vadd.f32 %v469, 0.0
        %v502 = vadd.f32 %v470, 0.0
        %v503 = vadd.f32 %v471, 0.0
        %v504 = vadd.f32 %v472, 0.0
        %v505 = vadd.f32 %v473, 0.0
        %v506 = vadd.f32 %v474, 0.0
        %v507 = vlaneseq
        %v508 = vshrl.u32 %v507, 7
        %v509 = vsub.s32 1, %v508
        %v510 = vrot.slane %v434, %v509
        %v511 = vmul.f32 %v374, %v510
        %v512 = vmul.f32 %v375, %v510
        %v513 = vmul.f32 %v376, %v510
        %v514 = vmul.f32 %v377, %v510
        %v515 = vmul.f32 %v378, %v510
        %v516 = vmul.f32 %v379, %v510
        %v517 = vmul.f32 %v380, %v510
        %v518 = vmul.f32 %v381, %v510
        %v519 = vmul.f32 %v382, %v510
        %v520 = vmul.f32 %v383, %v510
        %v521 = vmul.f32 %v384, %v510
        %v522 = vmul.f32 %v385, %v510
        %v523 = vmul.f32 %v386, %v510
        %v524 = vmul.f32 %v387, %v510
        %v525 = vmul.f32 %v388, %v510
        %v526 = vmul.f32 %v389, %v510
        %v527 = vmul.f32 %v390, %v510
        %v528 = vmul.f32 %v391, %v510
        %v529 = vmul.f32 %v392, %v510
        %v530 = vmul.f32 %v393, %v510
        %v531 = vmul.f32 %v394, %v510
        %v532 = vmul.f32 %v395, %v510
        %v533 = vmul.f32 %v396, %v510
        %v534 = vmul.f32 %v397, %v510
        %v535 = vmul.f32 %v398, %v510
        %v536 = vmul.f32 %v399, %v510
        %v537 = vmul.f32 %v400, %v510
        %v538 = vmul.f32 %v401, %v510
        %v539 = vmul.f32 %v402, %v510
        %v540 = vmul.f32 %v403, %v510
        %v541 = vmul.f32 %v404, %v510
        %v542 = vmul.f32 %v405, %v510
        %v543 = vmul.f32 %v406, %v510
        %v544 = vmul.f32 %v407, %v510
        %v545 = vmul.f32 %v408, %v510
        %v546 = vmul.f32 %v409, %v510
        %v547 = vmul.f32 %v410, %v510
        %v548 = vmul.f32 %v411, %v510
        %v549 = vmul.f32 %v412, %v510
        %v550 = vmul.f32 %v413, %v510
        %v551 = vmul.f32 %v414, %v510
        %v552 = vmul.f32 %v415, %v510
        %v553 = vmul.f32 %v416, %v510
        %v554 = vmul.f32 %v417, %v510
        %v555 = vmul.f32 %v418, %v510
        %v556 = vmul.f32 %v419, %v510
        %v557 = vmul.f32 %v420, %v510
        %v558 = vmul.f32 %v421, %v510
        %vm607 = vcmask 1046528
        %v608 = vrot.slane %v511, 1
        %v609 = vrot.slane %v512, 1
        %v610 = vsel %vm607, %v608, %v609
        %v611 = vrot.slane %v513, 1
        %v612 = vsel %vm607, %v609, %v611
        %v613 = vrot.slane %v514, 1
        %v614 = vrot.slane %v515, 1
        %v615 = vsel %vm607, %v613, %v614
        %v616 = vrot.slane %v516, 1
        %v617 = vsel %vm607, %v614, %v616
        %v618 = vrot.slane %v517, 1
        %v619 = vrot.slane %v518, 1
        %v620 = vsel %vm607, %v618, %v619
        %v621 = vrot.slane %v519, 1
        %v622 = vsel %vm607, %v619, %v621
        %v623 = vrot.slane %v520, 1
        %v624 = vrot.slane %v521, 1
        %v625 = vsel %vm607, %v623, %v624
        %v626 = vrot.slane %v522, 1
        %v627 = vsel %vm607, %v624, %v626
        %v628 = vrot.slane %v523, 1
        %v629 = vrot.slane %v524, 1
        %v630 = vsel %vm607, %v628, %v629
        %v631 = vrot.slane %v525, 1
        %v632 = vsel %vm607, %v629, %v631
        %v633 = vrot.slane %v526, 1
        %v634 = vrot.slane %v527, 1
        %v635 = vsel %vm607, %v633, %v634
        %v636 = vrot.slane %v528, 1
        %v637 = vsel %vm607, %v634, %v636
        %v638 = vrot.slane %v529, 1
        %v639 = vrot.slane %v530, 1
        %v640 = vsel %vm607, %v638, %v639
        %v641 = vrot.slane %v531, 1
        %v642 = vsel %vm607, %v639, %v641
        %v643 = vrot.slane %v532, 1
        %v644 = vrot.slane %v533, 1
        %v645 = vsel %vm607, %v643, %v644
        %v646 = vrot.slane %v534, 1
        %v647 = vsel %vm607, %v644, %v646
        %v648 = vrot.slane %v535, 1
        %v649 = vrot.slane %v536, 1
        %v650 = vsel %vm607, %v648, %v649
        %v651 = vrot.slane %v537, 1
        %v652 = vsel %vm607, %v649, %v651
        %v653 = vrot.slane %v538, 1
        %v654 = vrot.slane %v539, 1
        %v655 = vsel %vm607, %v653, %v654
        %v656 = vrot.slane %v540, 1
        %v657 = vsel %vm607, %v654, %v656
        %v658 = vrot.slane %v541, 1
        %v659 = vrot.slane %v542, 1
        %v660 = vsel %vm607, %v658, %v659
        %v661 = vrot.slane %v543, 1
        %v662 = vsel %vm607, %v659, %v661
        %v663 = vrot.slane %v544, 1
        %v664 = vrot.slane %v545, 1
        %v665 = vsel %vm607, %v663, %v664
        %v666 = vrot.slane %v546, 1
        %v667 = vsel %vm607, %v664, %v666
        %v668 = vrot.slane %v547, 1
        %v669 = vrot.slane %v548, 1
        %v670 = vsel %vm607, %v668, %v669
        %v671 = vrot.slane %v549, 1
        %v672 = vsel %vm607, %v669, %v671
        %v673 = vrot.slane %v550, 1
        %v674 = vrot.slane %v551, 1
        %v675 = vsel %vm607, %v673, %v674
        %v676 = vrot.slane %v552, 1
        %v677 = vsel %vm607, %v674, %v676
        %v678 = vrot.slane %v553, 1
        %v679 = vrot.slane %v554, 1
        %v680 = vsel %vm607, %v678, %v679
        %v681 = vrot.slane %v555, 1
        %v682 = vsel %vm607, %v679, %v681
        %v683 = vrot.slane %v556, 1
        %v684 = vrot.slane %v557, 1
        %v685 = vsel %vm607, %v683, %v684
        %v686 = vrot.slane %v558, 1
        %v687 = vsel %vm607, %v684, %v686
        %v720 = vadd.f32 %v475, %v610
        %v721 = vadd.f32 %v476, %v612
        %v722 = vadd.f32 %v477, %v615
        %v723 = vadd.f32 %v478, %v617
        %v724 = vadd.f32 %v479, %v620
        %v725 = vadd.f32 %v480, %v622
        %v726 = vadd.f32 %v481, %v625
        %v727 = vadd.f32 %v482, %v627
        %v728 = vadd.f32 %v483, %v630
        %v729 = vadd.f32 %v484, %v632
        %v730 = vadd.f32 %v485, %v635
        %v731 = vadd.f32 %v486, %v637
        %v732 = vadd.f32 %v487, %v640
        %v733 = vadd.f32 %v488, %v642
        %v734 = vadd.f32 %v489, %v645
        %v735 = vadd.f32 %v490, %v647
        %v736 = vadd.f32 %v491, %v650
        %v737 = vadd.f32 %v492, %v652
        %v738 = vadd.f32 %v493, %v655
        %v739 = vadd.f32 %v494, %v657
        %v740 = vadd.f32 %v495, %v660
        %v741 = vadd.f32 %v496, %v662
        %v742 = vadd.f32 %v497, %v665
        %v743 = vadd.f32 %v498, %v667
        %v744 = vadd.f32 %v499, %v670
        %v745 = vadd.f32 %v500, %v672
        %v746 = vadd.f32 %v501, %v675
        %v747 = vadd.f32 %v502, %v677
        %v748 = vadd.f32 %v503, %v680
        %v749 = vadd.f32 %v504, %v682
        %v750 = vadd.f32 %v505, %v685
        %v751 = vadd.f32 %v506, %v687
        %v752 = vlaneseq
        %v753 = vshrl.u32 %v752, 7
        %v754 = vsub.s32 2, %v753
        %v755 = vrot.slane %v434, %v754
        %v756 = vmul.f32 %v374, %v755
        %v757 = vmul.f32 %v375, %v755
        %v758 = vmul.f32 %v376, %v755
        %v759 = vmul.f32 %v377, %v755
        %v760 = vmul.f32 %v378, %v755
        %v761 = vmul.f32 %v379, %v755
        %v762 = vmul.f32 %v380, %v755
        %v763 = vmul.f32 %v381, %v755
        %v764 = vmul.f32 %v382, %v755
        %v765 = vmul.f32 %v383, %v755
        %v766 = vmul.f32 %v384, %v755
        %v767 = vmul.f32 %v385, %v755
        %v768 = vmul.f32 %v386, %v755
        %v769 = vmul.f32 %v387, %v755
        %v770 = vmul.f32 %v388, %v755
        %v771 = vmul.f32 %v389, %v755
        %v772 = vmul.f32 %v390, %v755
        %v773 = vmul.f32 %v391, %v755
        %v774 = vmul.f32 %v392, %v755
        %v775 = vmul.f32 %v393, %v755
        %v776 = vmul.f32 %v394, %v755
        %v777 = vmul.f32 %v395, %v755
        %v778 = vmul.f32 %v396, %v755
        %v779 = vmul.f32 %v397, %v755
        %v780 = vmul.f32 %v398, %v755
        %v781 = vmul.f32 %v399, %v755
        %v782 = vmul.f32 %v400, %v755
        %v783 = vmul.f32 %v401, %v755
        %v784 = vmul.f32 %v402, %v755
        %v785 = vmul.f32 %v403, %v755
        %v786 = vmul.f32 %v404, %v755
        %v787 = vmul.f32 %v405, %v755
        %v788 = vmul.f32 %v406, %v755
        %v789 = vmul.f32 %v407, %v755
        %v790 = vmul.f32 %v408, %v755
        %v791 = vmul.f32 %v409, %v755
        %v792 = vmul.f32 %v410, %v755
        %v793 = vmul.f32 %v411, %v755
        %v794 = vmul.f32 %v412, %v755
        %v795 = vmul.f32 %v413, %v755
        %v796 = vmul.f32 %v414, %v755
        %v797 = vmul.f32 %v415, %v755
        %v798 = vmul.f32 %v416, %v755
        %v799 = vmul.f32 %v417, %v755
        %v800 = vmul.f32 %v418, %v755
        %v801 = vmul.f32 %v419, %v755
        %v802 = vmul.f32 %v420, %v755
        %v803 = vmul.f32 %v421, %v755
        %vm852 = vcmask 1045504
        %v853 = vrot.slane %v756, 2
        %v854 = vrot.slane %v757, 2
        %v855 = vsel %vm852, %v853, %v854
        %v856 = vrot.slane %v758, 2
        %v857 = vsel %vm852, %v854, %v856
        %v858 = vrot.slane %v759, 2
        %v859 = vrot.slane %v760, 2
        %v860 = vsel %vm852, %v858, %v859
        %v861 = vrot.slane %v761, 2
        %v862 = vsel %vm852, %v859, %v861
        %v863 = vrot.slane %v762, 2
        %v864 = vrot.slane %v763, 2
        %v865 = vsel %vm852, %v863, %v864
        %v866 = vrot.slane %v764, 2
        %v867 = vsel %vm852, %v864, %v866
        %v868 = vrot.slane %v765, 2
        %v869 = vrot.slane %v766, 2
        %v870 = vsel %vm852, %v868, %v869
        %v871 = vrot.slane %v767, 2
        %v872 = vsel %vm852, %v869, %v871
        %v873 = vrot.slane %v768, 2
        %v874 = vrot.slane %v769, 2
        %v875 = vsel %vm852, %v873, %v874
        %v876 = vrot.slane %v770, 2
        %v877 = vsel %vm852, %v874, %v876
        %v878 = vrot.slane %v771, 2
        %v879 = vrot.slane %v772, 2
        %v880 = vsel %vm852, %v878, %v879
        %v881 = vrot.slane %v773, 2
        %v882 = vsel %vm852, %v879, %v881
        %v883 = vrot.slane %v774, 2
        %v884 = vrot.slane %v775, 2
        %v885 = vsel %vm852, %v883, %v884
        %v886 = vrot.slane %v776, 2
        %v887 = vsel %vm852, %v884, %v886
        %v888 = vrot.slane %v777, 2
        %v889 = vrot.slane %v778, 2
        %v890 = vsel %vm852, %v888, %v889
        %v891 = vrot.slane %v779, 2
        %v892 = vsel %vm852, %v889, %v891
        %v893 = vrot.slane %v780, 2
        %v894 = vrot.slane %v781, 2
        %v895 = vsel %vm852, %v893, %v894
        %v896 = vrot.slane %v782, 2
        %v897 = vsel %vm852, %v894, %v896
        %v898 = vrot.slane %v783, 2
        %v899 = vrot.slane %v784, 2
        %v900 = vsel %vm852, %v898, %v899
        %v901 = vrot.slane %v785, 2
        %v902 = vsel %vm852, %v899, %v901
        %v903 = vrot.slane %v786, 2
        %v904 = vrot.slane %v787, 2
        %v905 = vsel %vm852, %v903, %v904
        %v906 = vrot.slane %v788, 2
        %v907 = vsel %vm852, %v904, %v906
        %v908 = vrot.slane %v789, 2
        %v909 = vrot.slane %v790, 2
        %v910 = vsel %vm852, %v908, %v909
        %v911 = vrot.slane %v791, 2
        %v912 = vsel %vm852, %v909, %v911
        %v913 = vrot.slane %v792, 2
        %v914 = vrot.slane %v793, 2
        %v915 = vsel %vm852, %v913, %v914
        %v916 = vrot.slane %v794, 2
        %v917 = vsel %vm852, %v914, %v916
        %v918 = vrot.slane %v795, 2
        %v919 = vrot.slane %v796, 2
        %v920 = vsel %vm852, %v918, %v919
        %v921 = vrot.slane %v797, 2
        %v922 = vsel %vm852, %v919, %v921
        %v923 = vrot.slane %v798, 2
        %v924 = vrot.slane %v799, 2
        %v925 = vsel %vm852, %v923, %v924
        %v926 = vrot.slane %v800, 2
        %v927 = vsel %vm852, %v924, %v926
        %v928 = vrot.slane %v801, 2
        %v929 = vrot.slane %v802, 2
        %v930 = vsel %vm852, %v928, %v929
        %v931 = vrot.slane %v803, 2
        %v932 = vsel %vm852, %v929, %v931
        %v965 = vadd.f32 %v720, %v855
        %v966 = vadd.f32 %v721, %v857
        %v967 = vadd.f32 %v722, %v860
        %v968 = vadd.f32 %v723, %v862
        %v969 = vadd.f32 %v724, %v865
        %v970 = vadd.f32 %v725, %v867
        %v971 = vadd.f32 %v726, %v870
        %v972 = vadd.f32 %v727, %v872
        %v973 = vadd.f32 %v728, %v875
        %v974 = vadd.f32 %v729, %v877
        %v975 = vadd.f32 %v730, %v880
        %v976 = vadd.f32 %v731, %v882
        %v977 = vadd.f32 %v732, %v885
        %v978 = vadd.f32 %v733, %v887
        %v979 = vadd.f32 %v734, %v890
        %v980 = vadd.f32 %v735, %v892
        %v981 = vadd.f32 %v736, %v895
        %v982 = vadd.f32 %v737, %v897
        %v983 = vadd.f32 %v738, %v900
        %v984 = vadd.f32 %v739, %v902
        %v985 = vadd.f32 %v740, %v905
        %v986 = vadd.f32 %v741, %v907
        %v987 = vadd.f32 %v742, %v910
        %v988 = vadd.f32 %v743, %v912
        %v989 = vadd.f32 %v744, %v915
        %v990 = vadd.f32 %v745, %v917
        %v991 = vadd.f32 %v746, %v920
        %v992 = vadd.f32 %v747, %v922
        %v993 = vadd.f32 %v748, %v925
        %v994 = vadd.f32 %v749, %v927
        %v995 = vadd.f32 %v750, %v930
        %v996 = vadd.f32 %v751, %v932
        %v997 = vlaneseq
        %v998 = vshrl.u32 %v997, 7
        %v999 = vsub.s32 3, %v998
        %v1000 = vrot.slane %v434, %v999
        %v1001 = vmul.f32 %v374, %v1000
        %v1002 = vmul.f32 %v375, %v1000
        %v1003 = vmul.f32 %v376, %v1000
        %v1004 = vmul.f32 %v377, %v1000
        %v1005 = vmul.f32 %v378, %v1000
        %v1006 = vmul.f32 %v379, %v1000
        %v1007 = vmul.f32 %v380, %v1000
        %v1008 = vmul.f32 %v381, %v1000
        %v1009 = vmul.f32 %v382, %v1000
        %v1010 = vmul.f32 %v383, %v1000
        %v1011 = vmul.f32 %v384, %v1000
        %v1012 = vmul.f32 %v385, %v1000
        %v1013 = vmul.f32 %v386, %v1000
        %v1014 = vmul.f32 %v387, %v1000
        %v1015 = vmul.f32 %v388, %v1000
        %v1016 = vmul.f32 %v389, %v1000
        %v1017 = vmul.f32 %v390, %v1000
        %v1018 = vmul.f32 %v391, %v1000
        %v1019 = vmul.f32 %v392, %v1000
        %v1020 = vmul.f32 %v393, %v1000
        %v1021 = vmul.f32 %v394, %v1000
        %v1022 = vmul.f32 %v395, %v1000
        %v1023 = vmul.f32 %v396, %v1000
        %v1024 = vmul.f32 %v397, %v1000
        %v1025 = vmul.f32 %v398, %v1000
        %v1026 = vmul.f32 %v399, %v1000
        %v1027 = vmul.f32 %v400, %v1000
        %v1028 = vmul.f32 %v401, %v1000
        %v1029 = vmul.f32 %v402, %v1000
        %v1030 = vmul.f32 %v403, %v1000
        %v1031 = vmul.f32 %v404, %v1000
        %v1032 = vmul.f32 %v405, %v1000
        %v1033 = vmul.f32 %v406, %v1000
        %v1034 = vmul.f32 %v407, %v1000
        %v1035 = vmul.f32 %v408, %v1000
        %v1036 = vmul.f32 %v409, %v1000
        %v1037 = vmul.f32 %v410, %v1000
        %v1038 = vmul.f32 %v411, %v1000
        %v1039 = vmul.f32 %v412, %v1000
        %v1040 = vmul.f32 %v413, %v1000
        %v1041 = vmul.f32 %v414, %v1000
        %v1042 = vmul.f32 %v415, %v1000
        %v1043 = vmul.f32 %v416, %v1000
        %v1044 = vmul.f32 %v417, %v1000
        %v1045 = vmul.f32 %v418, %v1000
        %v1046 = vmul.f32 %v419, %v1000
        %v1047 = vmul.f32 %v420, %v1000
        %v1048 = vmul.f32 %v421, %v1000
        %vm1097 = vcmask 1044480
        %v1098 = vrot.slane %v1001, 3
        %v1099 = vrot.slane %v1002, 3
        %v1100 = vsel %vm1097, %v1098, %v1099
        %v1101 = vrot.slane %v1003, 3
        %v1102 = vsel %vm1097, %v1099, %v1101
        %v1103 = vrot.slane %v1004, 3
        %v1104 = vrot.slane %v1005, 3
        %v1105 = vsel %vm1097, %v1103, %v1104
        %v1106 = vrot.slane %v1006, 3
        %v1107 = vsel %vm1097, %v1104, %v1106
        %v1108 = vrot.slane %v1007, 3
        %v1109 = vrot.slane %v1008, 3
        %v1110 = vsel %vm1097, %v1108, %v1109
        %v1111 = vrot.slane %v1009, 3
        %v1112 = vsel %vm1097, %v1109, %v1111
        %v1113 = vrot.slane %v1010, 3
        %v1114 = vrot.slane %v1011, 3
        %v1115 = vsel %vm1097, %v1113, %v1114
        %v1116 = vrot.slane %v1012, 3
        %v1117 = vsel %vm1097, %v1114, %v1116
        %v1118 = vrot.slane %v1013, 3
        %v1119 = vrot.slane %v1014, 3
        %v1120 = vsel %vm1097, %v1118, %v1119
        %v1121 = vrot.slane %v1015, 3
        %v1122 = vsel %vm1097, %v1119, %v1121
        %v1123 = vrot.slane %v1016, 3
        %v1124 = vrot.slane %v1017, 3
        %v1125 = vsel %vm1097, %v1123, %v1124
        %v1126 = vrot.slane %v1018, 3
        %v1127 = vsel %vm1097, %v1124, %v1126
        %v1128 = vrot.slane %v1019, 3
        %v1129 = vrot.slane %v1020, 3
        %v1130 = vsel %vm1097, %v1128, %v1129
        %v1131 = vrot.slane %v1021, 3
        %v1132 = vsel %vm1097, %v1129, %v1131
        %v1133 = vrot.slane %v1022, 3
        %v1134 = vrot.slane %v1023, 3
        %v1135 = vsel %vm1097, %v1133, %v1134
        %v1136 = vrot.slane %v1024, 3
        %v1137 = vsel %vm1097, %v1134, %v1136
        %v1138 = vrot.slane %v1025, 3
        %v1139 = vrot.slane %v1026, 3
        %v1140 = vsel %vm1097, %v1138, %v1139
        %v1141 = vrot.slane %v1027, 3
        %v1142 = vsel %vm1097, %v1139, %v1141
        %v1143 = vrot.slane %v1028, 3
        %v1144 = vrot.slane %v1029, 3
        %v1145 = vsel %vm1097, %v1143, %v1144
        %v1146 = vrot.slane %v1030, 3
        %v1147 = vsel %vm1097, %v1144, %v1146
        %v1148 = vrot.slane %v1031, 3
        %v1149 = vrot.slane %v1032, 3
        %v1150 = vsel %vm1097, %v1148, %v1149
        %v1151 = vrot.slane %v1033, 3
        %v1152 = vsel %vm1097, %v1149, %v1151
        %v1153 = vrot.slane %v1034, 3
        %v1154 = vrot.slane %v1035, 3
        %v1155 = vsel %vm1097, %v1153, %v1154
        %v1156 = vrot.slane %v1036, 3
        %v1157 = vsel %vm1097, %v1154, %v1156
        %v1158 = vrot.slane %v1037, 3
        %v1159 = vrot.slane %v1038, 3
        %v1160 = vsel %vm1097, %v1158, %v1159
        %v1161 = vrot.slane %v1039, 3
        %v1162 = vsel %vm1097, %v1159, %v1161
        %v1163 = vrot.slane %v1040, 3
        %v1164 = vrot.slane %v1041, 3
        %v1165 = vsel %vm1097, %v1163, %v1164
        %v1166 = vrot.slane %v1042, 3
        %v1167 = vsel %vm1097, %v1164, %v1166
        %v1168 = vrot.slane %v1043, 3
        %v1169 = vrot.slane %v1044, 3
        %v1170 = vsel %vm1097, %v1168, %v1169
        %v1171 = vrot.slane %v1045, 3
        %v1172 = vsel %vm1097, %v1169, %v1171
        %v1173 = vrot.slane %v1046, 3
        %v1174 = vrot.slane %v1047, 3
        %v1175 = vsel %vm1097, %v1173, %v1174
        %v1176 = vrot.slane %v1048, 3
        %v1177 = vsel %vm1097, %v1174, %v1176
        %v1210 = vadd.f32 %v965, %v1100
        %v1211 = vadd.f32 %v966, %v1102
        %v1212 = vadd.f32 %v967, %v1105
        %v1213 = vadd.f32 %v968, %v1107
        %v1214 = vadd.f32 %v969, %v1110
        %v1215 = vadd.f32 %v970, %v1112
        %v1216 = vadd.f32 %v971, %v1115
        %v1217 = vadd.f32 %v972, %v1117
        %v1218 = vadd.f32 %v973, %v1120
        %v1219 = vadd.f32 %v974, %v1122
        %v1220 = vadd.f32 %v975, %v1125
        %v1221 = vadd.f32 %v976, %v1127
        %v1222 = vadd.f32 %v977, %v1130
        %v1223 = vadd.f32 %v978, %v1132
        %v1224 = vadd.f32 %v979, %v1135
        %v1225 = vadd.f32 %v980, %v1137
        %v1226 = vadd.f32 %v981, %v1140
        %v1227 = vadd.f32 %v982, %v1142
        %v1228 = vadd.f32 %v983, %v1145
        %v1229 = vadd.f32 %v984, %v1147
        %v1230 = vadd.f32 %v985, %v1150
        %v1231 = vadd.f32 %v986, %v1152
        %v1232 = vadd.f32 %v987, %v1155
        %v1233 = vadd.f32 %v988, %v1157
        %v1234 = vadd.f32 %v989, %v1160
        %v1235 = vadd.f32 %v990, %v1162
        %v1236 = vadd.f32 %v991, %v1165
        %v1237 = vadd.f32 %v992, %v1167
        %v1238 = vadd.f32 %v993, %v1170
        %v1239 = vadd.f32 %v994, %v1172
        %v1240 = vadd.f32 %v995, %v1175
        %v1241 = vadd.f32 %v996, %v1177
        %v1242 = vlaneseq
        %v1243 = vshrl.u32 %v1242, 7
        %v1244 = vsub.s32 4, %v1243
        %v1245 = vrot.slane %v434, %v1244
        %v1246 = vmul.f32 %v374, %v1245
        %v1247 = vmul.f32 %v375, %v1245
        %v1248 = vmul.f32 %v376, %v1245
        %v1249 = vmul.f32 %v377, %v1245
        %v1250 = vmul.f32 %v378, %v1245
        %v1251 = vmul.f32 %v379, %v1245
        %v1252 = vmul.f32 %v380, %v1245
        %v1253 = vmul.f32 %v381, %v1245
        %v1254 = vmul.f32 %v382, %v1245
        %v1255 = vmul.f32 %v383, %v1245
        %v1256 = vmul.f32 %v384, %v1245
        %v1257 = vmul.f32 %v385, %v1245
        %v1258 = vmul.f32 %v386, %v1245
        %v1259 = vmul.f32 %v387, %v1245
        %v1260 = vmul.f32 %v388, %v1245
        %v1261 = vmul.f32 %v389, %v1245
        %v1262 = vmul.f32 %v390, %v1245
        %v1263 = vmul.f32 %v391, %v1245
        %v1264 = vmul.f32 %v392, %v1245
        %v1265 = vmul.f32 %v393, %v1245
        %v1266 = vmul.f32 %v394, %v1245
        %v1267 = vmul.f32 %v395, %v1245
        %v1268 = vmul.f32 %v396, %v1245
        %v1269 = vmul.f32 %v397, %v1245
        %v1270 = vmul.f32 %v398, %v1245
        %v1271 = vmul.f32 %v399, %v1245
        %v1272 = vmul.f32 %v400, %v1245
        %v1273 = vmul.f32 %v401, %v1245
        %v1274 = vmul.f32 %v402, %v1245
        %v1275 = vmul.f32 %v403, %v1245
        %v1276 = vmul.f32 %v404, %v1245
        %v1277 = vmul.f32 %v405, %v1245
        %v1278 = vmul.f32 %v406, %v1245
        %v1279 = vmul.f32 %v407, %v1245
        %v1280 = vmul.f32 %v408, %v1245
        %v1281 = vmul.f32 %v409, %v1245
        %v1282 = vmul.f32 %v410, %v1245
        %v1283 = vmul.f32 %v411, %v1245
        %v1284 = vmul.f32 %v412, %v1245
        %v1285 = vmul.f32 %v413, %v1245
        %v1286 = vmul.f32 %v414, %v1245
        %v1287 = vmul.f32 %v415, %v1245
        %v1288 = vmul.f32 %v416, %v1245
        %v1289 = vmul.f32 %v417, %v1245
        %v1290 = vmul.f32 %v418, %v1245
        %v1291 = vmul.f32 %v419, %v1245
        %v1292 = vmul.f32 %v420, %v1245
        %v1293 = vmul.f32 %v421, %v1245
        %vm1342 = vcmask 1043456
        %v1343 = vrot.slane %v1246, 4
        %v1344 = vrot.slane %v1247, 4
        %v1345 = vsel %vm1342, %v1343, %v1344
        %v1346 = vrot.slane %v1248, 4
        %v1347 = vsel %vm1342, %v1344, %v1346
        %v1348 = vrot.slane %v1249, 4
        %v1349 = vrot.slane %v1250, 4
        %v1350 = vsel %vm1342, %v1348, %v1349
        %v1351 = vrot.slane %v1251, 4
        %v1352 = vsel %vm1342, %v1349, %v1351
        %v1353 = vrot.slane %v1252, 4
        %v1354 = vrot.slane %v1253, 4
        %v1355 = vsel %vm1342, %v1353, %v1354
        %v1356 = vrot.slane %v1254, 4
        %v1357 = vsel %vm1342, %v1354, %v1356
        %v1358 = vrot.slane %v1255, 4
        %v1359 = vrot.slane %v1256, 4
        %v1360 = vsel %vm1342, %v1358, %v1359
        %v1361 = vrot.slane %v1257, 4
        %v1362 = vsel %vm1342, %v1359, %v1361
        %v1363 = vrot.slane %v1258, 4
        %v1364 = vrot.slane %v1259, 4
        %v1365 = vsel %vm1342, %v1363, %v1364
        %v1366 = vrot.slane %v1260, 4
        %v1367 = vsel %vm1342, %v1364, %v1366
        %v1368 = vrot.slane %v1261, 4
        %v1369 = vrot.slane %v1262, 4
        %v1370 = vsel %vm1342, %v1368, %v1369
        %v1371 = vrot.slane %v1263, 4
        %v1372 = vsel %vm1342, %v1369, %v1371
        %v1373 = vrot.slane %v1264, 4
        %v1374 = vrot.slane %v1265, 4
        %v1375 = vsel %vm1342, %v1373, %v1374
        %v1376 = vrot.slane %v1266, 4
        %v1377 = vsel %vm1342, %v1374, %v1376
        %v1378 = vrot.slane %v1267, 4
        %v1379 = vrot.slane %v1268, 4
        %v1380 = vsel %vm1342, %v1378, %v1379
        %v1381 = vrot.slane %v1269, 4
        %v1382 = vsel %vm1342, %v1379, %v1381
        %v1383 = vrot.slane %v1270, 4
        %v1384 = vrot.slane %v1271, 4
        %v1385 = vsel %vm1342, %v1383, %v1384
        %v1386 = vrot.slane %v1272, 4
        %v1387 = vsel %vm1342, %v1384, %v1386
        %v1388 = vrot.slane %v1273, 4
        %v1389 = vrot.slane %v1274, 4
        %v1390 = vsel %vm1342, %v1388, %v1389
        %v1391 = vrot.slane %v1275, 4
        %v1392 = vsel %vm1342, %v1389, %v1391
        %v1393 = vrot.slane %v1276, 4
        %v1394 = vrot.slane %v1277, 4
        %v1395 = vsel %vm1342, %v1393, %v1394
        %v1396 = vrot.slane %v1278, 4
        %v1397 = vsel %vm1342, %v1394, %v1396
        %v1398 = vrot.slane %v1279, 4
        %v1399 = vrot.slane %v1280, 4
        %v1400 = vsel %vm1342, %v1398, %v1399
        %v1401 = vrot.slane %v1281, 4
        %v1402 = vsel %vm1342, %v1399, %v1401
        %v1403 = vrot.slane %v1282, 4
        %v1404 = vrot.slane %v1283, 4
        %v1405 = vsel %vm1342, %v1403, %v1404
        %v1406 = vrot.slane %v1284, 4
        %v1407 = vsel %vm1342, %v1404, %v1406
        %v1408 = vrot.slane %v1285, 4
        %v1409 = vrot.slane %v1286, 4
        %v1410 = vsel %vm1342, %v1408, %v1409
        %v1411 = vrot.slane %v1287, 4
        %v1412 = vsel %vm1342, %v1409, %v1411
        %v1413 = vrot.slane %v1288, 4
        %v1414 = vrot.slane %v1289, 4
        %v1415 = vsel %vm1342, %v1413, %v1414
        %v1416 = vrot.slane %v1290, 4
        %v1417 = vsel %vm1342, %v1414, %v1416
        %v1418 = vrot.slane %v1291, 4
        %v1419 = vrot.slane %v1292, 4
        %v1420 = vsel %vm1342, %v1418, %v1419
        %v1421 = vrot.slane %v1293, 4
        %v1422 = vsel %vm1342, %v1419, %v1421
        %v1455 = vadd.f32 %v1210, %v1345
        %v1456 = vadd.f32 %v1211, %v1347
        %v1457 = vadd.f32 %v1212, %v1350
        %v1458 = vadd.f32 %v1213, %v1352
        %v1459 = vadd.f32 %v1214, %v1355
        %v1460 = vadd.f32 %v1215, %v1357
        %v1461 = vadd.f32 %v1216, %v1360
        %v1462 = vadd.f32 %v1217, %v1362
        %v1463 = vadd.f32 %v1218, %v1365
        %v1464 = vadd.f32 %v1219, %v1367
        %v1465 = vadd.f32 %v1220, %v1370
        %v1466 = vadd.f32 %v1221, %v1372
        %v1467 = vadd.f32 %v1222, %v1375
        %v1468 = vadd.f32 %v1223, %v1377
        %v1469 = vadd.f32 %v1224, %v1380
        %v1470 = vadd.f32 %v1225, %v1382
        %v1471 = vadd.f32 %v1226, %v1385
        %v1472 = vadd.f32 %v1227, %v1387
        %v1473 = vadd.f32 %v1228, %v1390
        %v1474 = vadd.f32 %v1229, %v1392
        %v1475 = vadd.f32 %v1230, %v1395
        %v1476 = vadd.f32 %v1231, %v1397
        %v1477 = vadd.f32 %v1232, %v1400
        %v1478 = vadd.f32 %v1233, %v1402
        %v1479 = vadd.f32 %v1234, %v1405
        %v1480 = vadd.f32 %v1235, %v1407
        %v1481 = vadd.f32 %v1236, %v1410
        %v1482 = vadd.f32 %v1237, %v1412
        %v1483 = vadd.f32 %v1238, %v1415
        %v1484 = vadd.f32 %v1239, %v1417
        %v1485 = vadd.f32 %v1240, %v1420
        %v1486 = vadd.f32 %v1241, %v1422
        %v1487 = vlaneseq
        %v1488 = vshrl.u32 %v1487, 7
        %v1489 = vsub.s32 0, %v1488
        %v1490 = vrot.slane %v435, %v1489
        %v1491 = vmul.f32 %v377, %v1490
        %v1492 = vmul.f32 %v378, %v1490
        %v1493 = vmul.f32 %v380, %v1490
        %v1494 = vmul.f32 %v381, %v1490
        %v1495 = vmul.f32 %v383, %v1490
        %v1496 = vmul.f32 %v384, %v1490
        %v1497 = vmul.f32 %v386, %v1490
        %v1498 = vmul.f32 %v387, %v1490
        %v1499 = vmul.f32 %v389, %v1490
        %v1500 = vmul.f32 %v390, %v1490
        %v1501 = vmul.f32 %v392, %v1490
        %v1502 = vmul.f32 %v393, %v1490
        %v1503 = vmul.f32 %v395, %v1490
        %v1504 = vmul.f32 %v396, %v1490
        %v1505 = vmul.f32 %v398, %v1490
        %v1506 = vmul.f32 %v399, %v1490
        %v1507 = vmul.f32 %v401, %v1490
        %v1508 = vmul.f32 %v402, %v1490
        %v1509 = vmul.f32 %v404, %v1490
        %v1510 = vmul.f32 %v405, %v1490
        %v1511 = vmul.f32 %v407, %v1490
        %v1512 = vmul.f32 %v408, %v1490
        %v1513 = vmul.f32 %v410, %v1490
        %v1514 = vmul.f32 %v411, %v1490
        %v1515 = vmul.f32 %v413, %v1490
        %v1516 = vmul.f32 %v414, %v1490
        %v1517 = vmul.f32 %v416, %v1490
        %v1518 = vmul.f32 %v417, %v1490
        %v1519 = vmul.f32 %v419, %v1490
        %v1520 = vmul.f32 %v420, %v1490
        %v1521 = vmul.f32 %v422, %v1490
        %v1522 = vmul.f32 %v423, %v1490
        %v1523 = vadd.f32 %v1455, %v1491
        %v1524 = vadd.f32 %v1456, %v1492
        %v1525 = vadd.f32 %v1457, %v1493
        %v1526 = vadd.f32 %v1458, %v1494
        %v1527 = vadd.f32 %v1459, %v1495
        %v1528 = vadd.f32 %v1460, %v1496
        %v1529 = vadd.f32 %v1461, %v1497
        %v1530 = vadd.f32 %v1462, %v1498
        %v1531 = vadd.f32 %v1463, %v1499
        %v1532 = vadd.f32 %v1464, %v1500
        %v1533 = vadd.f32 %v1465, %v1501
        %v1534 = vadd.f32 %v1466, %v1502
        %v1535 = vadd.f32 %v1467, %v1503
        %v1536 = vadd.f32 %v1468, %v1504
        %v1537 = vadd.f32 %v1469, %v1505
        %v1538 = vadd.f32 %v1470, %v1506
        %v1539 = vadd.f32 %v1471, %v1507
        %v1540 = vadd.f32 %v1472, %v1508
        %v1541 = vadd.f32 %v1473, %v1509
        %v1542 = vadd.f32 %v1474, %v1510
        %v1543 = vadd.f32 %v1475, %v1511
        %v1544 = vadd.f32 %v1476, %v1512
        %v1545 = vadd.f32 %v1477, %v1513
        %v1546 = vadd.f32 %v1478, %v1514
        %v1547 = vadd.f32 %v1479, %v1515
        %v1548 = vadd.f32 %v1480, %v1516
        %v1549 = vadd.f32 %v1481, %v1517
        %v1550 = vadd.f32 %v1482, %v1518
        %v1551 = vadd.f32 %v1483, %v1519
        %v1552 = vadd.f32 %v1484, %v1520
        %v1553 = vadd.f32 %v1485, %v1521
        %v1554 = vadd.f32 %v1486, %v1522
        %v1555 = vlaneseq
        %v1556 = vshrl.u32 %v1555, 7
        %v1557 = vsub.s32 1, %v1556
        %v1558 = vrot.slane %v435, %v1557
        %v1559 = vmul.f32 %v377, %v1558
        %v1560 = vmul.f32 %v378, %v1558
        %v1561 = vmul.f32 %v379, %v1558
        %v1562 = vmul.f32 %v380, %v1558
        %v1563 = vmul.f32 %v381, %v1558
        %v1564 = vmul.f32 %v382, %v1558
        %v1565 = vmul.f32 %v383, %v1558
        %v1566 = vmul.f32 %v384, %v1558
        %v1567 = vmul.f32 %v385, %v1558
        %v1568 = vmul.f32 %v386, %v1558
        %v1569 = vmul.f32 %v387, %v1558
        %v1570 = vmul.f32 %v388, %v1558
        %v1571 = vmul.f32 %v389, %v1558
        %v1572 = vmul.f32 %v390, %v1558
        %v1573 = vmul.f32 %v391, %v1558
        %v1574 = vmul.f32 %v392, %v1558
        %v1575 = vmul.f32 %v393, %v1558
        %v1576 = vmul.f32 %v394, %v1558
        %v1577 = vmul.f32 %v395, %v1558
        %v1578 = vmul.f32 %v396, %v1558
        %v1579 = vmul.f32 %v397, %v1558
        %v1580 = vmul.f32 %v398, %v1558
        %v1581 = vmul.f32 %v399, %v1558
        %v1582 = vmul.f32 %v400, %v1558
        %v1583 = vmul.f32 %v401, %v1558
        %v1584 = vmul.f32 %v402, %v1558
        %v1585 = vmul.f32 %v403, %v1558
        %v1586 = vmul.f32 %v404, %v1558
        %v1587 = vmul.f32 %v405, %v1558
        %v1588 = vmul.f32 %v406, %v1558
        %v1589 = vmul.f32 %v407, %v1558
        %v1590 = vmul.f32 %v408, %v1558
        %v1591 = vmul.f32 %v409, %v1558
        %v1592 = vmul.f32 %v410, %v1558
        %v1593 = vmul.f32 %v411, %v1558
        %v1594 = vmul.f32 %v412, %v1558
        %v1595 = vmul.f32 %v413, %v1558
        %v1596 = vmul.f32 %v414, %v1558
        %v1597 = vmul.f32 %v415, %v1558
        %v1598 = vmul.f32 %v416, %v1558
        %v1599 = vmul.f32 %v417, %v1558
        %v1600 = vmul.f32 %v418, %v1558
        %v1601 = vmul.f32 %v419, %v1558
        %v1602 = vmul.f32 %v420, %v1558
        %v1603 = vmul.f32 %v421, %v1558
        %v1604 = vmul.f32 %v422, %v1558
        %v1605 = vmul.f32 %v423, %v1558
        %v1606 = vmul.f32 %v424, %v1558
        %v1655 = vrot.slane %v1559, 1
        %v1656 = vrot.slane %v1560, 1
        %v1657 = vsel %vm607, %v1655, %v1656
        %v1658 = vrot.slane %v1561, 1
        %v1659 = vsel %vm607, %v1656, %v1658
        %v1660 = vrot.slane %v1562, 1
        %v1661 = vrot.slane %v1563, 1
        %v1662 = vsel %vm607, %v1660, %v1661
        %v1663 = vrot.slane %v1564, 1
        %v1664 = vsel %vm607, %v1661, %v1663
        %v1665 = vrot.slane %v1565, 1
        %v1666 = vrot.slane %v1566, 1
        %v1667 = vsel %vm607, %v1665, %v1666
        %v1668 = vrot.slane %v1567, 1
        %v1669 = vsel %vm607, %v1666, %v1668
        %v1670 = vrot.slane %v1568, 1
        %v1671 = vrot.slane %v1569, 1
        %v1672 = vsel %vm607, %v1670, %v1671
        %v1673 = vrot.slane %v1570, 1
        %v1674 = vsel %vm607, %v1671, %v1673
        %v1675 = vrot.slane %v1571, 1
        %v1676 = vrot.slane %v1572, 1
        %v1677 = vsel %vm607, %v1675, %v1676
        %v1678 = vrot.slane %v1573, 1
        %v1679 = vsel %vm607, %v1676, %v1678
        %v1680 = vrot.slane %v1574, 1
        %v1681 = vrot.slane %v1575, 1
        %v1682 = vsel %vm607, %v1680, %v1681
        %v1683 = vrot.slane %v1576, 1
        %v1684 = vsel %vm607, %v1681, %v1683
        %v1685 = vrot.slane %v1577, 1
        %v1686 = vrot.slane %v1578, 1
        %v1687 = vsel %vm607, %v1685, %v1686
        %v1688 = vrot.slane %v1579, 1
        %v1689 = vsel %vm607, %v1686, %v1688
        %v1690 = vrot.slane %v1580, 1
        %v1691 = vrot.slane %v1581, 1
        %v1692 = vsel %vm607, %v1690, %v1691
        %v1693 = vrot.slane %v1582, 1
        %v1694 = vsel %vm607, %v1691, %v1693
        %v1695 = vrot.slane %v1583, 1
        %v1696 = vrot.slane %v1584, 1
        %v1697 = vsel %vm607, %v1695, %v1696
        %v1698 = vrot.slane %v1585, 1
        %v1699 = vsel %vm607, %v1696, %v1698
        %v1700 = vrot.slane %v1586, 1
        %v1701 = vrot.slane %v1587, 1
        %v1702 = vsel %vm607, %v1700, %v1701
        %v1703 = vrot.slane %v1588, 1
        %v1704 = vsel %vm607, %v1701, %v1703
        %v1705 = vrot.slane %v1589, 1
        %v1706 = vrot.slane %v1590, 1
        %v1707 = vsel %vm607, %v1705, %v1706
        %v1708 = vrot.slane %v1591, 1
        %v1709 = vsel %vm607, %v1706, %v1708
        %v1710 = vrot.slane %v1592, 1
        %v1711 = vrot.slane %v1593, 1
        %v1712 = vsel %vm607, %v1710, %v1711
        %v1713 = vrot.slane %v1594, 1
        %v1714 = vsel %vm607, %v1711, %v1713
        %v1715 = vrot.slane %v1595, 1
        %v1716 = vrot.slane %v1596, 1
        %v1717 = vsel %vm607, %v1715, %v1716
        %v1718 = vrot.slane %v1597, 1
        %v1719 = vsel %vm607, %v1716, %v1718
        %v1720 = vrot.slane %v1598, 1
        %v1721 = vrot.slane %v1599, 1
        %v1722 = vsel %vm607, %v1720, %v1721
        %v1723 = vrot.slane %v1600, 1
        %v1724 = vsel %vm607, %v1721, %v1723
        %v1725 = vrot.slane %v1601, 1
        %v1726 = vrot.slane %v1602, 1
        %v1727 = vsel %vm607, %v1725, %v1726
        %v1728 = vrot.slane %v1603, 1
        %v1729 = vsel %vm607, %v1726, %v1728
        %v1730 = vrot.slane %v1604, 1
        %v1731 = vrot.slane %v1605, 1
        %v1732 = vsel %vm607, %v1730, %v1731
        %v1733 = vrot.slane %v1606, 1
        %v1734 = vsel %vm607, %v1731, %v1733
        %v1767 = vadd.f32 %v1523, %v1657
        %v1768 = vadd.f32 %v1524, %v1659
        %v1769 = vadd.f32 %v1525, %v1662
        %v1770 = vadd.f32 %v1526, %v1664
        %v1771 = vadd.f32 %v1527, %v1667
        %v1772 = vadd.f32 %v1528, %v1669
        %v1773 = vadd.f32 %v1529, %v1672
        %v1774 = vadd.f32 %v1530, %v1674
        %v1775 = vadd.f32 %v1531, %v1677
        %v1776 = vadd.f32 %v1532, %v1679
        %v1777 = vadd.f32 %v1533, %v1682
        %v1778 = vadd.f32 %v1534, %v1684
        %v1779 = vadd.f32 %v1535, %v1687
        %v1780 = vadd.f32 %v1536, %v1689
        %v1781 = vadd.f32 %v1537, %v1692
        %v1782 = vadd.f32 %v1538, %v1694
        %v1783 = vadd.f32 %v1539, %v1697
        %v1784 = vadd.f32 %v1540, %v1699
        %v1785 = vadd.f32 %v1541, %v1702
        %v1786 = vadd.f32 %v1542, %v1704
        %v1787 = vadd.f32 %v1543, %v1707
        %v1788 = vadd.f32 %v1544, %v1709
        %v1789 = vadd.f32 %v1545, %v1712
        %v1790 = vadd.f32 %v1546, %v1714
        %v1791 = vadd.f32 %v1547, %v1717
        %v1792 = vadd.f32 %v1548, %v1719
        %v1793 = vadd.f32 %v1549, %v1722
        %v1794 = vadd.f32 %v1550, %v1724
        %v1795 = vadd.f32 %v1551, %v1727
        %v1796 = vadd.f32 %v1552, %v1729
        %v1797 = vadd.f32 %v1553, %v1732
        %v1798 = vadd.f32 %v1554, %v1734
        %v1799 = vlaneseq
        %v1800 = vshrl.u32 %v1799, 7
        %v1801 = vsub.s32 2, %v1800
        %v1802 = vrot.slane %v435, %v1801
        %v1803 = vmul.f32 %v377, %v1802
        %v1804 = vmul.f32 %v378, %v1802
        %v1805 = vmul.f32 %v379, %v1802
        %v1806 = vmul.f32 %v380, %v1802
        %v1807 = vmul.f32 %v381, %v1802
        %v1808 = vmul.f32 %v382, %v1802
        %v1809 = vmul.f32 %v383, %v1802
        %v1810 = vmul.f32 %v384, %v1802
        %v1811 = vmul.f32 %v385, %v1802
        %v1812 = vmul.f32 %v386, %v1802
        %v1813 = vmul.f32 %v387, %v1802
        %v1814 = vmul.f32 %v388, %v1802
        %v1815 = vmul.f32 %v389, %v1802
        %v1816 = vmul.f32 %v390, %v1802
        %v1817 = vmul.f32 %v391, %v1802
        %v1818 = vmul.f32 %v392, %v1802
        %v1819 = vmul.f32 %v393, %v1802
        %v1820 = vmul.f32 %v394, %v1802
        %v1821 = vmul.f32 %v395, %v1802
        %v1822 = vmul.f32 %v396, %v1802
        %v1823 = vmul.f32 %v397, %v1802
        %v1824 = vmul.f32 %v398, %v1802
        %v1825 = vmul.f32 %v399, %v1802
        %v1826 = vmul.f32 %v400, %v1802
        %v1827 = vmul.f32 %v401, %v1802
        %v1828 = vmul.f32 %v402, %v1802
        %v1829 = vmul.f32 %v403, %v1802
        %v1830 = vmul.f32 %v404, %v1802
        %v1831 = vmul.f32 %v405, %v1802
        %v1832 = vmul.f32 %v406, %v1802
        %v1833 = vmul.f32 %v407, %v1802
        %v1834 = vmul.f32 %v408, %v1802
        %v1835 = vmul.f32 %v409, %v1802
        %v1836 = vmul.f32 %v410, %v1802
        %v1837 = vmul.f32 %v411, %v1802
        %v1838 = vmul.f32 %v412, %v1802
        %v1839 = vmul.f32 %v413, %v1802
        %v1840 = vmul.f32 %v414, %v1802
        %v1841 = vmul.f32 %v415, %v1802
        %v1842 = vmul.f32 %v416, %v1802
        %v1843 = vmul.f32 %v417, %v1802
        %v1844 = vmul.f32 %v418, %v1802
        %v1845 = vmul.f32 %v419, %v1802
        %v1846 = vmul.f32 %v420, %v1802
        %v1847 = vmul.f32 %v421, %v1802
        %v1848 = vmul.f32 %v422, %v1802
        %v1849 = vmul.f32 %v423, %v1802
        %v1850 = vmul.f32 %v424, %v1802
        %v1899 = vrot.slane %v1803, 2
        %v1900 = vrot.slane %v1804, 2
        %v1901 = vsel %vm852, %v1899, %v1900
        %v1902 = vrot.slane %v1805, 2
        %v1903 = vsel %vm852, %v1900, %v1902
        %v1904 = vrot.slane %v1806, 2
        %v1905 = vrot.slane %v1807, 2
        %v1906 = vsel %vm852, %v1904, %v1905
        %v1907 = vrot.slane %v1808, 2
        %v1908 = vsel %vm852, %v1905, %v1907
        %v1909 = vrot.slane %v1809, 2
        %v1910 = vrot.slane %v1810, 2
        %v1911 = vsel %vm852, %v1909, %v1910
        %v1912 = vrot.slane %v1811, 2
        %v1913 = vsel %vm852, %v1910, %v1912
        %v1914 = vrot.slane %v1812, 2
        %v1915 = vrot.slane %v1813, 2
        %v1916 = vsel %vm852, %v1914, %v1915
        %v1917 = vrot.slane %v1814, 2
        %v1918 = vsel %vm852, %v1915, %v1917
        %v1919 = vrot.slane %v1815, 2
        %v1920 = vrot.slane %v1816, 2
        %v1921 = vsel %vm852, %v1919, %v1920
        %v1922 = vrot.slane %v1817, 2
        %v1923 = vsel %vm852, %v1920, %v1922
        %v1924 = vrot.slane %v1818, 2
        %v1925 = vrot.slane %v1819, 2
        %v1926 = vsel %vm852, %v1924, %v1925
        %v1927 = vrot.slane %v1820, 2
        %v1928 = vsel %vm852, %v1925, %v1927
        %v1929 = vrot.slane %v1821, 2
        %v1930 = vrot.slane %v1822, 2
        %v1931 = vsel %vm852, %v1929, %v1930
        %v1932 = vrot.slane %v1823, 2
        %v1933 = vsel %vm852, %v1930, %v1932
        %v1934 = vrot.slane %v1824, 2
        %v1935 = vrot.slane %v1825, 2
        %v1936 = vsel %vm852, %v1934, %v1935
        %v1937 = vrot.slane %v1826, 2
        %v1938 = vsel %vm852, %v1935, %v1937
        %v1939 = vrot.slane %v1827, 2
        %v1940 = vrot.slane %v1828, 2
        %v1941 = vsel %vm852, %v1939, %v1940
        %v1942 = vrot.slane %v1829, 2
        %v1943 = vsel %vm852, %v1940, %v1942
        %v1944 = vrot.slane %v1830, 2
        %v1945 = vrot.slane %v1831, 2
        %v1946 = vsel %vm852, %v1944, %v1945
        %v1947 = vrot.slane %v1832, 2
        %v1948 = vsel %vm852, %v1945, %v1947
        %v1949 = vrot.slane %v1833, 2
        %v1950 = vrot.slane %v1834, 2
        %v1951 = vsel %vm852, %v1949, %v1950
        %v1952 = vrot.slane %v1835, 2
        %v1953 = vsel %vm852, %v1950, %v1952
        %v1954 = vrot.slane %v1836, 2
        %v1955 = vrot.slane %v1837, 2
        %v1956 = vsel %vm852, %v1954, %v1955
        %v1957 = vrot.slane %v1838, 2
        %v1958 = vsel %vm852, %v1955, %v1957
        %v1959 = vrot.slane %v1839, 2
        %v1960 = vrot.slane %v1840, 2
        %v1961 = vsel %vm852, %v1959, %v1960
        %v1962 = vrot.slane %v1841, 2
        %v1963 = vsel %vm852, %v1960, %v1962
        %v1964 = vrot.slane %v1842, 2
        %v1965 = vrot.slane %v1843, 2
        %v1966 = vsel %vm852, %v1964, %v1965
        %v1967 = vrot.slane %v1844, 2
        %v1968 = vsel %vm852, %v1965, %v1967
        %v1969 = vrot.slane %v1845, 2
        %v1970 = vrot.slane %v1846, 2
        %v1971 = vsel %vm852, %v1969, %v1970
        %v1972 = vrot.slane %v1847, 2
        %v1973 = vsel %vm852, %v1970, %v1972
        %v1974 = vrot.slane %v1848, 2
        %v1975 = vrot.slane %v1849, 2
        %v1976 = vsel %vm852, %v1974, %v1975
        %v1977 = vrot.slane %v1850, 2
        %v1978 = vsel %vm852, %v1975, %v1977
        %v2011 = vadd.f32 %v1767, %v1901
        %v2012 = vadd.f32 %v1768, %v1903
        %v2013 = vadd.f32 %v1769, %v1906
        %v2014 = vadd.f32 %v1770, %v1908
        %v2015 = vadd.f32 %v1771, %v1911
        %v2016 = vadd.f32 %v1772, %v1913
        %v2017 = vadd.f32 %v1773, %v1916
        %v2018 = vadd.f32 %v1774, %v1918
        %v2019 = vadd.f32 %v1775, %v1921
        %v2020 = vadd.f32 %v1776, %v1923
        %v2021 = vadd.f32 %v1777, %v1926
        %v2022 = vadd.f32 %v1778, %v1928
        %v2023 = vadd.f32 %v1779, %v1931
        %v2024 = vadd.f32 %v1780, %v1933
        %v2025 = vadd.f32 %v1781, %v1936
        %v2026 = vadd.f32 %v1782, %v1938
        %v2027 = vadd.f32 %v1783, %v1941
        %v2028 = vadd.f32 %v1784, %v1943
        %v2029 = vadd.f32 %v1785, %v1946
        %v2030 = vadd.f32 %v1786, %v1948
        %v2031 = vadd.f32 %v1787, %v1951
        %v2032 = vadd.f32 %v1788, %v1953
        %v2033 = vadd.f32 %v1789, %v1956
        %v2034 = vadd.f32 %v1790, %v1958
        %v2035 = vadd.f32 %v1791, %v1961
        %v2036 = vadd.f32 %v1792, %v1963
        %v2037 = vadd.f32 %v1793, %v1966
        %v2038 = vadd.f32 %v1794, %v1968
        %v2039 = vadd.f32 %v1795, %v1971
        %v2040 = vadd.f32 %v1796, %v1973
        %v2041 = vadd.f32 %v1797, %v1976
        %v2042 = vadd.f32 %v1798, %v1978
        %v2043 = vlaneseq
        %v2044 = vshrl.u32 %v2043, 7
        %v2045 = vsub.s32 3, %v2044
        %v2046 = vrot.slane %v435, %v2045
        %v2047 = vmul.f32 %v377, %v2046
        %v2048 = vmul.f32 %v378, %v2046
        %v2049 = vmul.f32 %v379, %v2046
        %v2050 = vmul.f32 %v380, %v2046
        %v2051 = vmul.f32 %v381, %v2046
        %v2052 = vmul.f32 %v382, %v2046
        %v2053 = vmul.f32 %v383, %v2046
        %v2054 = vmul.f32 %v384, %v2046
        %v2055 = vmul.f32 %v385, %v2046
        %v2056 = vmul.f32 %v386, %v2046
        %v2057 = vmul.f32 %v387, %v2046
        %v2058 = vmul.f32 %v388, %v2046
        %v2059 = vmul.f32 %v389, %v2046
        %v2060 = vmul.f32 %v390, %v2046
        %v2061 = vmul.f32 %v391, %v2046
        %v2062 = vmul.f32 %v392, %v2046
        %v2063 = vmul.f32 %v393, %v2046
        %v2064 = vmul.f32 %v394, %v2046
        %v2065 = vmul.f32 %v395, %v2046
        %v2066 = vmul.f32 %v396, %v2046
        %v2067 = vmul.f32 %v397, %v2046
        %v2068 = vmul.f32 %v398, %v2046
        %v2069 = vmul.f32 %v399, %v2046
        %v2070 = vmul.f32 %v400, %v2046
        %v2071 = vmul.f32 %v401, %v2046
        %v2072 = vmul.f32 %v402, %v2046
        %v2073 = vmul.f32 %v403, %v2046
        %v2074 = vmul.f32 %v404, %v2046
        %v2075 = vmul.f32 %v405, %v2046
        %v2076 = vmul.f32 %v406, %v2046
        %v2077 = vmul.f32 %v407, %v2046
        %v2078 = vmul.f32 %v408, %v2046
        %v2079 = vmul.f32 %v409, %v2046
        %v2080 = vmul.f32 %v410, %v2046
        %v2081 = vmul.f32 %v411, %v2046
        %v2082 = vmul.f32 %v412, %v2046
        %v2083 = vmul.f32 %v413, %v2046
        %v2084 = vmul.f32 %v414, %v2046
        %v2085 = vmul.f32 %v415, %v2046
        %v2086 = vmul.f32 %v416, %v2046
        %v2087 = vmul.f32 %v417, %v2046
        %v2088 = vmul.f32 %v418, %v2046
        %v2089 = vmul.f32 %v419, %v2046
        %v2090 = vmul.f32 %v420, %v2046
        %v2091 = vmul.f32 %v421, %v2046
        %v2092 = vmul.f32 %v422, %v2046
        %v2093 = vmul.f32 %v423, %v2046
        %v2094 = vmul.f32 %v424, %v2046
        %v2143 = vrot.slane %v2047, 3
        %v2144 = vrot.slane %v2048, 3
        %v2145 = vsel %vm1097, %v2143, %v2144
        %v2146 = vrot.slane %v2049, 3
        %v2147 = vsel %vm1097, %v2144, %v2146
        %v2148 = vrot.slane %v2050, 3
        %v2149 = vrot.slane %v2051, 3
        %v2150 = vsel %vm1097, %v2148, %v2149
        %v2151 = vrot.slane %v2052, 3
        %v2152 = vsel %vm1097, %v2149, %v2151
        %v2153 = vrot.slane %v2053, 3
        %v2154 = vrot.slane %v2054, 3
        %v2155 = vsel %vm1097, %v2153, %v2154
        %v2156 = vrot.slane %v2055, 3
        %v2157 = vsel %vm1097, %v2154, %v2156
        %v2158 = vrot.slane %v2056, 3
        %v2159 = vrot.slane %v2057, 3
        %v2160 = vsel %vm1097, %v2158, %v2159
        %v2161 = vrot.slane %v2058, 3
        %v2162 = vsel %vm1097, %v2159, %v2161
        %v2163 = vrot.slane %v2059, 3
        %v2164 = vrot.slane %v2060, 3
        %v2165 = vsel %vm1097, %v2163, %v2164
        %v2166 = vrot.slane %v2061, 3
        %v2167 = vsel %vm1097, %v2164, %v2166
        %v2168 = vrot.slane %v2062, 3
        %v2169 = vrot.slane %v2063, 3
        %v2170 = vsel %vm1097, %v2168, %v2169
        %v2171 = vrot.slane %v2064, 3
        %v2172 = vsel %vm1097, %v2169, %v2171
        %v2173 = vrot.slane %v2065, 3
        %v2174 = vrot.slane %v2066, 3
        %v2175 = vsel %vm1097, %v2173, %v2174
        %v2176 = vrot.slane %v2067, 3
        %v2177 = vsel %vm1097, %v2174, %v2176
        %v2178 = vrot.slane %v2068, 3
        %v2179 = vrot.slane %v2069, 3
        %v2180 = vsel %vm1097, %v2178, %v2179
        %v2181 = vrot.slane %v2070, 3
        %v2182 = vsel %vm1097, %v2179, %v2181
        %v2183 = vrot.slane %v2071, 3
        %v2184 = vrot.slane %v2072, 3
        %v2185 = vsel %vm1097, %v2183, %v2184
        %v2186 = vrot.slane %v2073, 3
        %v2187 = vsel %vm1097, %v2184, %v2186
        %v2188 = vrot.slane %v2074, 3
        %v2189 = vrot.slane %v2075, 3
        %v2190 = vsel %vm1097, %v2188, %v2189
        %v2191 = vrot.slane %v2076, 3
        %v2192 = vsel %vm1097, %v2189, %v2191
        %v2193 = vrot.slane %v2077, 3
        %v2194 = vrot.slane %v2078, 3
        %v2195 = vsel %vm1097, %v2193, %v2194
        %v2196 = vrot.slane %v2079, 3
        %v2197 = vsel %vm1097, %v2194, %v2196
        %v2198 = vrot.slane %v2080, 3
        %v2199 = vrot.slane %v2081, 3
        %v2200 = vsel %vm1097, %v2198, %v2199
        %v2201 = vrot.slane %v2082, 3
        %v2202 = vsel %vm1097, %v2199, %v2201
        %v2203 = vrot.slane %v2083, 3
        %v2204 = vrot.slane %v2084, 3
        %v2205 = vsel %vm1097, %v2203, %v2204
        %v2206 = vrot.slane %v2085, 3
        %v2207 = vsel %vm1097, %v2204, %v2206
        %v2208 = vrot.slane %v2086, 3
        %v2209 = vrot.slane %v2087, 3
        %v2210 = vsel %vm1097, %v2208, %v2209
        %v2211 = vrot.slane %v2088, 3
        %v2212 = vsel %vm1097, %v2209, %v2211
        %v2213 = vrot.slane %v2089, 3
        %v2214 = vrot.slane %v2090, 3
        %v2215 = vsel %vm1097, %v2213, %v2214
        %v2216 = vrot.slane %v2091, 3
        %v2217 = vsel %vm1097, %v2214, %v2216
        %v2218 = vrot.slane %v2092, 3
        %v2219 = vrot.slane %v2093, 3
        %v2220 = vsel %vm1097, %v2218, %v2219
        %v2221 = vrot.slane %v2094, 3
        %v2222 = vsel %vm1097, %v2219, %v2221
        %v2255 = vadd.f32 %v2011, %v2145
        %v2256 = vadd.f32 %v2012, %v2147
        %v2257 = vadd.f32 %v2013, %v2150
        %v2258 = vadd.f32 %v2014, %v2152
        %v2259 = vadd.f32 %v2015, %v2155
        %v2260 = vadd.f32 %v2016, %v2157
        %v2261 = vadd.f32 %v2017, %v2160
        %v2262 = vadd.f32 %v2018, %v2162
        %v2263 = vadd.f32 %v2019, %v2165
        %v2264 = vadd.f32 %v2020, %v2167
        %v2265 = vadd.f32 %v2021, %v2170
        %v2266 = vadd.f32 %v2022, %v2172
        %v2267 = vadd.f32 %v2023, %v2175
        %v2268 = vadd.f32 %v2024, %v2177
        %v2269 = vadd.f32 %v2025, %v2180
        %v2270 = vadd.f32 %v2026, %v2182
        %v2271 = vadd.f32 %v2027, %v2185
        %v2272 = vadd.f32 %v2028, %v2187
        %v2273 = vadd.f32 %v2029, %v2190
        %v2274 = vadd.f32 %v2030, %v2192
        %v2275 = vadd.f32 %v2031, %v2195
        %v2276 = vadd.f32 %v2032, %v2197
        %v2277 = vadd.f32 %v2033, %v2200
        %v2278 = vadd.f32 %v2034, %v2202
        %v2279 = vadd.f32 %v2035, %v2205
        %v2280 = vadd.f32 %v2036, %v2207
        %v2281 = vadd.f32 %v2037, %v2210
        %v2282 = vadd.f32 %v2038, %v2212
        %v2283 = vadd.f32 %v2039, %v2215
        %v2284 = vadd.f32 %v2040, %v2217
        %v2285 = vadd.f32 %v2041, %v2220
        %v2286 = vadd.f32 %v2042, %v2222
        %v2287 = vlaneseq
        %v2288 = vshrl.u32 %v2287, 7
        %v2289 = vsub.s32 4, %v2288
        %v2290 = vrot.slane %v435, %v2289
        %v2291 = vmul.f32 %v377, %v2290
        %v2292 = vmul.f32 %v378, %v2290
        %v2293 = vmul.f32 %v379, %v2290
        %v2294 = vmul.f32 %v380, %v2290
        %v2295 = vmul.f32 %v381, %v2290
        %v2296 = vmul.f32 %v382, %v2290
        %v2297 = vmul.f32 %v383, %v2290
        %v2298 = vmul.f32 %v384, %v2290
        %v2299 = vmul.f32 %v385, %v2290
        %v2300 = vmul.f32 %v386, %v2290
        %v2301 = vmul.f32 %v387, %v2290
        %v2302 = vmul.f32 %v388, %v2290
        %v2303 = vmul.f32 %v389, %v2290
        %v2304 = vmul.f32 %v390, %v2290
        %v2305 = vmul.f32 %v391, %v2290
        %v2306 = vmul.f32 %v392, %v2290
        %v2307 = vmul.f32 %v393, %v2290
        %v2308 = vmul.f32 %v394, %v2290
        %v2309 = vmul.f32 %v395, %v2290
        %v2310 = vmul.f32 %v396, %v2290
        %v2311 = vmul.f32 %v397, %v2290
        %v2312 = vmul.f32 %v398, %v2290
        %v2313 = vmul.f32 %v399, %v2290
        %v2314 = vmul.f32 %v400, %v2290
        %v2315 = vmul.f32 %v401, %v2290
        %v2316 = vmul.f32 %v402, %v2290
        %v2317 = vmul.f32 %v403, %v2290
        %v2318 = vmul.f32 %v404, %v2290
        %v2319 = vmul.f32 %v405, %v2290
        %v2320 = vmul.f32 %v406, %v2290
        %v2321 = vmul.f32 %v407, %v2290
        %v2322 = vmul.f32 %v408, %v2290
        %v2323 = vmul.f32 %v409, %v2290
        %v2324 = vmul.f32 %v410, %v2290
        %v2325 = vmul.f32 %v411, %v2290
        %v2326 = vmul.f32 %v412, %v2290
        %v2327 = vmul.f32 %v413, %v2290
        %v2328 = vmul.f32 %v414, %v2290
        %v2329 = vmul.f32 %v415, %v2290
        %v2330 = vmul.f32 %v416, %v2290
        %v2331 = vmul.f32 %v417, %v2290
        %v2332 = vmul.f32 %v418, %v2290
        %v2333 = vmul.f32 %v419, %v2290
        %v2334 = vmul.f32 %v420, %v2290
        %v2335 = vmul.f32 %v421, %v2290
        %v2336 = vmul.f32 %v422, %v2290
        %v2337 = vmul.f32 %v423, %v2290
        %v2338 = vmul.f32 %v424, %v2290
        %v2387 = vrot.slane %v2291, 4
        %v2388 = vrot.slane %v2292, 4
        %v2389 = vsel %vm1342, %v2387, %v2388
        %v2390 = vrot.slane %v2293, 4
        %v2391 = vsel %vm1342, %v2388, %v2390
        %v2392 = vrot.slane %v2294, 4
        %v2393 = vrot.slane %v2295, 4
        %v2394 = vsel %vm1342, %v2392, %v2393
        %v2395 = vrot.slane %v2296, 4
        %v2396 = vsel %vm1342, %v2393, %v2395
        %v2397 = vrot.slane %v2297, 4
        %v2398 = vrot.slane %v2298, 4
        %v2399 = vsel %vm1342, %v2397, %v2398
        %v2400 = vrot.slane %v2299, 4
        %v2401 = vsel %vm1342, %v2398, %v2400
        %v2402 = vrot.slane %v2300, 4
        %v2403 = vrot.slane %v2301, 4
        %v2404 = vsel %vm1342, %v2402, %v2403
        %v2405 = vrot.slane %v2302, 4
        %v2406 = vsel %vm1342, %v2403, %v2405
        %v2407 = vrot.slane %v2303, 4
        %v2408 = vrot.slane %v2304, 4
        %v2409 = vsel %vm1342, %v2407, %v2408
        %v2410 = vrot.slane %v2305, 4
        %v2411 = vsel %vm1342, %v2408, %v2410
        %v2412 = vrot.slane %v2306, 4
        %v2413 = vrot.slane %v2307, 4
        %v2414 = vsel %vm1342, %v2412, %v2413
        %v2415 = vrot.slane %v2308, 4
        %v2416 = vsel %vm1342, %v2413, %v2415
        %v2417 = vrot.slane %v2309, 4
        %v2418 = vrot.slane %v2310, 4
        %v2419 = vsel %vm1342, %v2417, %v2418
        %v2420 = vrot.slane %v2311, 4
        %v2421 = vsel %vm1342, %v2418, %v2420
        %v2422 = vrot.slane %v2312, 4
        %v2423 = vrot.slane %v2313, 4
        %v2424 = vsel %vm1342, %v2422, %v2423
        %v2425 = vrot.slane %v2314, 4
        %v2426 = vsel %vm1342, %v2423, %v2425
        %v2427 = vrot.slane %v2315, 4
        %v2428 = vrot.slane %v2316, 4
        %v2429 = vsel %vm1342, %v2427, %v2428
        %v2430 = vrot.slane %v2317, 4
        %v2431 = vsel %vm1342, %v2428, %v2430
        %v2432 = vrot.slane %v2318, 4
        %v2433 = vrot.slane %v2319, 4
        %v2434 = vsel %vm1342, %v2432, %v2433
        %v2435 = vrot.slane %v2320, 4
        %v2436 = vsel %vm1342, %v2433, %v2435
        %v2437 = vrot.slane %v2321, 4
        %v2438 = vrot.slane %v2322, 4
        %v2439 = vsel %vm1342, %v2437, %v2438
        %v2440 = vrot.slane %v2323, 4
        %v2441 = vsel %vm1342, %v2438, %v2440
        %v2442 = vrot.slane %v2324, 4
        %v2443 = vrot.slane %v2325, 4
        %v2444 = vsel %vm1342, %v2442, %v2443
        %v2445 = vrot.slane %v2326, 4
        %v2446 = vsel %vm1342, %v2443, %v2445
        %v2447 = vrot.slane %v2327, 4
        %v2448 = vrot.slane %v2328, 4
        %v2449 = vsel %vm1342, %v2447, %v2448
        %v2450 = vrot.slane %v2329, 4
        %v2451 = vsel %vm1342, %v2448, %v2450
        %v2452 = vrot.slane %v2330, 4
        %v2453 = vrot.slane %v2331, 4
        %v2454 = vsel %vm1342, %v2452, %v2453
        %v2455 = vrot.slane %v2332, 4
        %v2456 = vsel %vm1342, %v2453, %v2455
        %v2457 = vrot.slane %v2333, 4
        %v2458 = vrot.slane %v2334, 4
        %v2459 = vsel %vm1342, %v2457, %v2458
        %v2460 = vrot.slane %v2335, 4
        %v2461 = vsel %vm1342, %v2458, %v2460
        %v2462 = vrot.slane %v2336, 4
        %v2463 = vrot.slane %v2337, 4
        %v2464 = vsel %vm1342, %v2462, %v2463
        %v2465 = vrot.slane %v2338, 4
        %v2466 = vsel %vm1342, %v2463, %v2465
        %v2499 = vadd.f32 %v2255, %v2389
        %v2500 = vadd.f32 %v2256, %v2391
        %v2501 = vadd.f32 %v2257, %v2394
        %v2502 = vadd.f32 %v2258, %v2396
        %v2503 = vadd.f32 %v2259, %v2399
        %v2504 = vadd.f32 %v2260, %v2401
        %v2505 = vadd.f32 %v2261, %v2404
        %v2506 = vadd.f32 %v2262, %v2406
        %v2507 = vadd.f32 %v2263, %v2409
        %v2508 = vadd.f32 %v2264, %v2411
        %v2509 = vadd.f32 %v2265, %v2414
        %v2510 = vadd.f32 %v2266, %v2416
        %v2511 = vadd.f32 %v2267, %v2419
        %v2512 = vadd.f32 %v2268, %v2421
        %v2513 = vadd.f32 %v2269, %v2424
        %v2514 = vadd.f32 %v2270, %v2426
        %v2515 = vadd.f32 %v2271, %v2429
        %v2516 = vadd.f32 %v2272, %v2431
        %v2517 = vadd.f32 %v2273, %v2434
        %v2518 = vadd.f32 %v2274, %v2436
        %v2519 = vadd.f32 %v2275, %v2439
        %v2520 = vadd.f32 %v2276, %v2441
        %v2521 = vadd.f32 %v2277, %v2444
        %v2522 = vadd.f32 %v2278, %v2446
        %v2523 = vadd.f32 %v2279, %v2449
        %v2524 = vadd.f32 %v2280, %v2451
        %v2525 = vadd.f32 %v2281, %v2454
        %v2526 = vadd.f32 %v2282, %v2456
        %v2527 = vadd.f32 %v2283, %v2459
        %v2528 = vadd.f32 %v2284, %v2461
        %v2529 = vadd.f32 %v2285, %v2464
        %v2530 = vadd.f32 %v2286, %v2466
        %v2531 = vlaneseq
        %v2532 = vshrl.u32 %v2531, 7
        %v2533 = vsub.s32 0, %v2532
        %v2534 = vrot.slane %v436, %v2533
        %v2535 = vmul.f32 %v380, %v2534
        %v2536 = vmul.f32 %v381, %v2534
        %v2537 = vmul.f32 %v383, %v2534
        %v2538 = vmul.f32 %v384, %v2534
        %v2539 = vmul.f32 %v386, %v2534
        %v2540 = vmul.f32 %v387, %v2534
        %v2541 = vmul.f32 %v389, %v2534
        %v2542 = vmul.f32 %v390, %v2534
        %v2543 = vmul.f32 %v392, %v2534
        %v2544 = vmul.f32 %v393, %v2534
        %v2545 = vmul.f32 %v395, %v2534
        %v2546 = vmul.f32 %v396, %v2534
        %v2547 = vmul.f32 %v398, %v2534
        %v2548 = vmul.f32 %v399, %v2534
        %v2549 = vmul.f32 %v401, %v2534
        %v2550 = vmul.f32 %v402, %v2534
        %v2551 = vmul.f32 %v404, %v2534
        %v2552 = vmul.f32 %v405, %v2534
        %v2553 = vmul.f32 %v407, %v2534
        %v2554 = vmul.f32 %v408, %v2534
        %v2555 = vmul.f32 %v410, %v2534
        %v2556 = vmul.f32 %v411, %v2534
        %v2557 = vmul.f32 %v413, %v2534
        %v2558 = vmul.f32 %v414, %v2534
        %v2559 = vmul.f32 %v416, %v2534
        %v2560 = vmul.f32 %v417, %v2534
        %v2561 = vmul.f32 %v419, %v2534
        %v2562 = vmul.f32 %v420, %v2534
        %v2563 = vmul.f32 %v422, %v2534
        %v2564 = vmul.f32 %v423, %v2534
        %v2565 = vmul.f32 %v425, %v2534
        %v2566 = vmul.f32 %v426, %v2534
        %v2567 = vadd.f32 %v2499, %v2535
        %v2568 = vadd.f32 %v2500, %v2536
        %v2569 = vadd.f32 %v2501, %v2537
        %v2570 = vadd.f32 %v2502, %v2538
        %v2571 = vadd.f32 %v2503, %v2539
        %v2572 = vadd.f32 %v2504, %v2540
        %v2573 = vadd.f32 %v2505, %v2541
        %v2574 = vadd.f32 %v2506, %v2542
        %v2575 = vadd.f32 %v2507, %v2543
        %v2576 = vadd.f32 %v2508, %v2544
        %v2577 = vadd.f32 %v2509, %v2545
        %v2578 = vadd.f32 %v2510, %v2546
        %v2579 = vadd.f32 %v2511, %v2547
        %v2580 = vadd.f32 %v2512, %v2548
        %v2581 = vadd.f32 %v2513, %v2549
        %v2582 = vadd.f32 %v2514, %v2550
        %v2583 = vadd.f32 %v2515, %v2551
        %v2584 = vadd.f32 %v2516, %v2552
        %v2585 = vadd.f32 %v2517, %v2553
        %v2586 = vadd.f32 %v2518, %v2554
        %v2587 = vadd.f32 %v2519, %v2555
        %v2588 = vadd.f32 %v2520, %v2556
        %v2589 = vadd.f32 %v2521, %v2557
        %v2590 = vadd.f32 %v2522, %v2558
        %v2591 = vadd.f32 %v2523, %v2559
        %v2592 = vadd.f32 %v2524, %v2560
        %v2593 = vadd.f32 %v2525, %v2561
        %v2594 = vadd.f32 %v2526, %v2562
        %v2595 = vadd.f32 %v2527, %v2563
        %v2596 = vadd.f32 %v2528, %v2564
        %v2597 = vadd.f32 %v2529, %v2565
        %v2598 = vadd.f32 %v2530, %v2566
        %v2599 = vlaneseq
        %v2600 = vshrl.u32 %v2599, 7
        %v2601 = vsub.s32 1, %v2600
        %v2602 = vrot.slane %v436, %v2601
        %v2603 = vmul.f32 %v380, %v2602
        %v2604 = vmul.f32 %v381, %v2602
        %v2605 = vmul.f32 %v382, %v2602
        %v2606 = vmul.f32 %v383, %v2602
        %v2607 = vmul.f32 %v384, %v2602
        %v2608 = vmul.f32 %v385, %v2602
        %v2609 = vmul.f32 %v386, %v2602
        %v2610 = vmul.f32 %v387, %v2602
        %v2611 = vmul.f32 %v388, %v2602
        %v2612 = vmul.f32 %v389, %v2602
        %v2613 = vmul.f32 %v390, %v2602
        %v2614 = vmul.f32 %v391, %v2602
        %v2615 = vmul.f32 %v392, %v2602
        %v2616 = vmul.f32 %v393, %v2602
        %v2617 = vmul.f32 %v394, %v2602
        %v2618 = vmul.f32 %v395, %v2602
        %v2619 = vmul.f32 %v396, %v2602
        %v2620 = vmul.f32 %v397, %v2602
        %v2621 = vmul.f32 %v398, %v2602
        %v2622 = vmul.f32 %v399, %v2602
        %v2623 = vmul.f32 %v400, %v2602
        %v2624 = vmul.f32 %v401, %v2602
        %v2625 = vmul.f32 %v402, %v2602
        %v2626 = vmul.f32 %v403, %v2602
        %v2627 = vmul.f32 %v404, %v2602
        %v2628 = vmul.f32 %v405, %v2602
        %v2629 = vmul.f32 %v406, %v2602
        %v2630 = vmul.f32 %v407, %v2602
        %v2631 = vmul.f32 %v408, %v2602
        %v2632 = vmul.f32 %v409, %v2602
        %v2633 = vmul.f32 %v410, %v2602
        %v2634 = vmul.f32 %v411, %v2602
        %v2635 = vmul.f32 %v412, %v2602
        %v2636 = vmul.f32 %v413, %v2602
        %v2637 = vmul.f32 %v414, %v2602
        %v2638 = vmul.f32 %v415, %v2602
        %v2639 = vmul.f32 %v416, %v2602
        %v2640 = vmul.f32 %v417, %v2602
        %v2641 = vmul.f32 %v418, %v2602
        %v2642 = vmul.f32 %v419, %v2602
        %v2643 = vmul.f32 %v420, %v2602
        %v2644 = vmul.f32 %v421, %v2602
        %v2645 = vmul.f32 %v422, %v2602
        %v2646 = vmul.f32 %v423, %v2602
        %v2647 = vmul.f32 %v424, %v2602
        %v2648 = vmul.f32 %v425, %v2602
        %v2649 = vmul.f32 %v426, %v2602
        %v2650 = vmul.f32 %v427, %v2602
        %v2699 = vrot.slane %v2603, 1
        %v2700 = vrot.slane %v2604, 1
        %v2701 = vsel %vm607, %v2699, %v2700
        %v2702 = vrot.slane %v2605, 1
        %v2703 = vsel %vm607, %v2700, %v2702
        %v2704 = vrot.slane %v2606, 1
        %v2705 = vrot.slane %v2607, 1
        %v2706 = vsel %vm607, %v2704, %v2705
        %v2707 = vrot.slane %v2608, 1
        %v2708 = vsel %vm607, %v2705, %v2707
        %v2709 = vrot.slane %v2609, 1
        %v2710 = vrot.slane %v2610, 1
        %v2711 = vsel %vm607, %v2709, %v2710
        %v2712 = vrot.slane %v2611, 1
        %v2713 = vsel %vm607, %v2710, %v2712
        %v2714 = vrot.slane %v2612, 1
        %v2715 = vrot.slane %v2613, 1
        %v2716 = vsel %vm607, %v2714, %v2715
        %v2717 = vrot.slane %v2614, 1
        %v2718 = vsel %vm607, %v2715, %v2717
        %v2719 = vrot.slane %v2615, 1
        %v2720 = vrot.slane %v2616, 1
        %v2721 = vsel %vm607, %v2719, %v2720
        %v2722 = vrot.slane %v2617, 1
        %v2723 = vsel %vm607, %v2720, %v2722
        %v2724 = vrot.slane %v2618, 1
        %v2725 = vrot.slane %v2619, 1
        %v2726 = vsel %vm607, %v2724, %v2725
        %v2727 = vrot.slane %v2620, 1
        %v2728 = vsel %vm607, %v2725, %v2727
        %v2729 = vrot.slane %v2621, 1
        %v2730 = vrot.slane %v2622, 1
        %v2731 = vsel %vm607, %v2729, %v2730
        %v2732 = vrot.slane %v2623, 1
        %v2733 = vsel %vm607, %v2730, %v2732
        %v2734 = vrot.slane %v2624, 1
        %v2735 = vrot.slane %v2625, 1
        %v2736 = vsel %vm607, %v2734, %v2735
        %v2737 = vrot.slane %v2626, 1
        %v2738 = vsel %vm607, %v2735, %v2737
        %v2739 = vrot.slane %v2627, 1
        %v2740 = vrot.slane %v2628, 1
        %v2741 = vsel %vm607, %v2739, %v2740
        %v2742 = vrot.slane %v2629, 1
        %v2743 = vsel %vm607, %v2740, %v2742
        %v2744 = vrot.slane %v2630, 1
        %v2745 = vrot.slane %v2631, 1
        %v2746 = vsel %vm607, %v2744, %v2745
        %v2747 = vrot.slane %v2632, 1
        %v2748 = vsel %vm607, %v2745, %v2747
        %v2749 = vrot.slane %v2633, 1
        %v2750 = vrot.slane %v2634, 1
        %v2751 = vsel %vm607, %v2749, %v2750
        %v2752 = vrot.slane %v2635, 1
        %v2753 = vsel %vm607, %v2750, %v2752
        %v2754 = vrot.slane %v2636, 1
        %v2755 = vrot.slane %v2637, 1
        %v2756 = vsel %vm607, %v2754, %v2755
        %v2757 = vrot.slane %v2638, 1
        %v2758 = vsel %vm607, %v2755, %v2757
        %v2759 = vrot.slane %v2639, 1
        %v2760 = vrot.slane %v2640, 1
        %v2761 = vsel %vm607, %v2759, %v2760
        %v2762 = vrot.slane %v2641, 1
        %v2763 = vsel %vm607, %v2760, %v2762
        %v2764 = vrot.slane %v2642, 1
        %v2765 = vrot.slane %v2643, 1
        %v2766 = vsel %vm607, %v2764, %v2765
        %v2767 = vrot.slane %v2644, 1
        %v2768 = vsel %vm607, %v2765, %v2767
        %v2769 = vrot.slane %v2645, 1
        %v2770 = vrot.slane %v2646, 1
        %v2771 = vsel %vm607, %v2769, %v2770
        %v2772 = vrot.slane %v2647, 1
        %v2773 = vsel %vm607, %v2770, %v2772
        %v2774 = vrot.slane %v2648, 1
        %v2775 = vrot.slane %v2649, 1
        %v2776 = vsel %vm607, %v2774, %v2775
        %v2777 = vrot.slane %v2650, 1
        %v2778 = vsel %vm607, %v2775, %v2777
        %v2811 = vadd.f32 %v2567, %v2701
        %v2812 = vadd.f32 %v2568, %v2703
        %v2813 = vadd.f32 %v2569, %v2706
        %v2814 = vadd.f32 %v2570, %v2708
        %v2815 = vadd.f32 %v2571, %v2711
        %v2816 = vadd.f32 %v2572, %v2713
        %v2817 = vadd.f32 %v2573, %v2716
        %v2818 = vadd.f32 %v2574, %v2718
        %v2819 = vadd.f32 %v2575, %v2721
        %v2820 = vadd.f32 %v2576, %v2723
        %v2821 = vadd.f32 %v2577, %v2726
        %v2822 = vadd.f32 %v2578, %v2728
        %v2823 = vadd.f32 %v2579, %v2731
        %v2824 = vadd.f32 %v2580, %v2733
        %v2825 = vadd.f32 %v2581, %v2736
        %v2826 = vadd.f32 %v2582, %v2738
        %v2827 = vadd.f32 %v2583, %v2741
        %v2828 = vadd.f32 %v2584, %v2743
        %v2829 = vadd.f32 %v2585, %v2746
        %v2830 = vadd.f32 %v2586, %v2748
        %v2831 = vadd.f32 %v2587, %v2751
        %v2832 = vadd.f32 %v2588, %v2753
        %v2833 = vadd.f32 %v2589, %v2756
        %v2834 = vadd.f32 %v2590, %v2758
        %v2835 = vadd.f32 %v2591, %v2761
        %v2836 = vadd.f32 %v2592, %v2763
        %v2837 = vadd.f32 %v2593, %v2766
        %v2838 = vadd.f32 %v2594, %v2768
        %v2839 = vadd.f32 %v2595, %v2771
        %v2840 = vadd.f32 %v2596, %v2773
        %v2841 = vadd.f32 %v2597, %v2776
        %v2842 = vadd.f32 %v2598, %v2778
        %v2843 = vlaneseq
        %v2844 = vshrl.u32 %v2843, 7
        %v2845 = vsub.s32 2, %v2844
        %v2846 = vrot.slane %v436, %v2845
        %v2847 = vmul.f32 %v380, %v2846
        %v2848 = vmul.f32 %v381, %v2846
        %v2849 = vmul.f32 %v382, %v2846
        %v2850 = vmul.f32 %v383, %v2846
        %v2851 = vmul.f32 %v384, %v2846
        %v2852 = vmul.f32 %v385, %v2846
        %v2853 = vmul.f32 %v386, %v2846
        %v2854 = vmul.f32 %v387, %v2846
        %v2855 = vmul.f32 %v388, %v2846
        %v2856 = vmul.f32 %v389, %v2846
        %v2857 = vmul.f32 %v390, %v2846
        %v2858 = vmul.f32 %v391, %v2846
        %v2859 = vmul.f32 %v392, %v2846
        %v2860 = vmul.f32 %v393, %v2846
        %v2861 = vmul.f32 %v394, %v2846
        %v2862 = vmul.f32 %v395, %v2846
        %v2863 = vmul.f32 %v396, %v2846
        %v2864 = vmul.f32 %v397, %v2846
        %v2865 = vmul.f32 %v398, %v2846
        %v2866 = vmul.f32 %v399, %v2846
        %v2867 = vmul.f32 %v400, %v2846
        %v2868 = vmul.f32 %v401, %v2846
        %v2869 = vmul.f32 %v402, %v2846
        %v2870 = vmul.f32 %v403, %v2846
        %v2871 = vmul.f32 %v404, %v2846
        %v2872 = vmul.f32 %v405, %v2846
        %v2873 = vmul.f32 %v406, %v2846
        %v2874 = vmul.f32 %v407, %v2846
        %v2875 = vmul.f32 %v408, %v2846
        %v2876 = vmul.f32 %v409, %v2846
        %v2877 = vmul.f32 %v410, %v2846
        %v2878 = vmul.f32 %v411, %v2846
        %v2879 = vmul.f32 %v412, %v2846
        %v2880 = vmul.f32 %v413, %v2846
        %v2881 = vmul.f32 %v414, %v2846
        %v2882 = vmul.f32 %v415, %v2846
        %v2883 = vmul.f32 %v416, %v2846
        %v2884 = vmul.f32 %v417, %v2846
        %v2885 = vmul.f32 %v418, %v2846
        %v2886 = vmul.f32 %v419, %v2846
        %v2887 = vmul.f32 %v420, %v2846
        %v2888 = vmul.f32 %v421, %v2846
        %v2889 = vmul.f32 %v422, %v2846
        %v2890 = vmul.f32 %v423, %v2846
        %v2891 = vmul.f32 %v424, %v2846
        %v2892 = vmul.f32 %v425, %v2846
        %v2893 = vmul.f32 %v426, %v2846
        %v2894 = vmul.f32 %v427, %v2846
        %v2943 = vrot.slane %v2847, 2
        %v2944 = vrot.slane %v2848, 2
        %v2945 = vsel %vm852, %v2943, %v2944
        %v2946 = vrot.slane %v2849, 2
        %v2947 = vsel %vm852, %v2944, %v2946
        %v2948 = vrot.slane %v2850, 2
        %v2949 = vrot.slane %v2851, 2
        %v2950 = vsel %vm852, %v2948, %v2949
        %v2951 = vrot.slane %v2852, 2
        %v2952 = vsel %vm852, %v2949, %v2951
        %v2953 = vrot.slane %v2853, 2
        %v2954 = vrot.slane %v2854, 2
        %v2955 = vsel %vm852, %v2953, %v2954
        %v2956 = vrot.slane %v2855, 2
        %v2957 = vsel %vm852, %v2954, %v2956
        %v2958 = vrot.slane %v2856, 2
        %v2959 = vrot.slane %v2857, 2
        %v2960 = vsel %vm852, %v2958, %v2959
        %v2961 = vrot.slane %v2858, 2
        %v2962 = vsel %vm852, %v2959, %v2961
        %v2963 = vrot.slane %v2859, 2
        %v2964 = vrot.slane %v2860, 2
        %v2965 = vsel %vm852, %v2963, %v2964
        %v2966 = vrot.slane %v2861, 2
        %v2967 = vsel %vm852, %v2964, %v2966
        %v2968 = vrot.slane %v2862, 2
        %v2969 = vrot.slane %v2863, 2
        %v2970 = vsel %vm852, %v2968, %v2969
        %v2971 = vrot.slane %v2864, 2
        %v2972 = vsel %vm852, %v2969, %v2971
        %v2973 = vrot.slane %v2865, 2
        %v2974 = vrot.slane %v2866, 2
        %v2975 = vsel %vm852, %v2973, %v2974
        %v2976 = vrot.slane %v2867, 2
        %v2977 = vsel %vm852, %v2974, %v2976
        %v2978 = vrot.slane %v2868, 2
        %v2979 = vrot.slane %v2869, 2
        %v2980 = vsel %vm852, %v2978, %v2979
        %v2981 = vrot.slane %v2870, 2
        %v2982 = vsel %vm852, %v2979, %v2981
        %v2983 = vrot.slane %v2871, 2
        %v2984 = vrot.slane %v2872, 2
        %v2985 = vsel %vm852, %v2983, %v2984
        %v2986 = vrot.slane %v2873, 2
        %v2987 = vsel %vm852, %v2984, %v2986
        %v2988 = vrot.slane %v2874, 2
        %v2989 = vrot.slane %v2875, 2
        %v2990 = vsel %vm852, %v2988, %v2989
        %v2991 = vrot.slane %v2876, 2
        %v2992 = vsel %vm852, %v2989, %v2991
        %v2993 = vrot.slane %v2877, 2
        %v2994 = vrot.slane %v2878, 2
        %v2995 = vsel %vm852, %v2993, %v2994
        %v2996 = vrot.slane %v2879, 2
        %v2997 = vsel %vm852, %v2994, %v2996
        %v2998 = vrot.slane %v2880, 2
        %v2999 = vrot.slane %v2881, 2
        %v3000 = vsel %vm852, %v2998, %v2999
        %v3001 = vrot.slane %v2882, 2
        %v3002 = vsel %vm852, %v2999, %v3001
        %v3003 = vrot.slane %v2883, 2
        %v3004 = vrot.slane %v2884, 2
        %v3005 = vsel %vm852, %v3003, %v3004
        %v3006 = vrot.slane %v2885, 2
        %v3007 = vsel %vm852, %v3004, %v3006
        %v3008 = vrot.slane %v2886, 2
        %v3009 = vrot.slane %v2887, 2
        %v3010 = vsel %vm852, %v3008, %v3009
        %v3011 = vrot.slane %v2888, 2
        %v3012 = vsel %vm852, %v3009, %v3011
        %v3013 = vrot.slane %v2889, 2
        %v3014 = vrot.slane %v2890, 2
        %v3015 = vsel %vm852, %v3013, %v3014
        %v3016 = vrot.slane %v2891, 2
        %v3017 = vsel %vm852, %v3014, %v3016
        %v3018 = vrot.slane %v2892, 2
        %v3019 = vrot.slane %v2893, 2
        %v3020 = vsel %vm852, %v3018, %v3019
        %v3021 = vrot.slane %v2894, 2
        %v3022 = vsel %vm852, %v3019, %v3021
        %v3055 = vadd.f32 %v2811, %v2945
        %v3056 = vadd.f32 %v2812, %v2947
        %v3057 = vadd.f32 %v2813, %v2950
        %v3058 = vadd.f32 %v2814, %v2952
        %v3059 = vadd.f32 %v2815, %v2955
        %v3060 = vadd.f32 %v2816, %v2957
        %v3061 = vadd.f32 %v2817, %v2960
        %v3062 = vadd.f32 %v2818, %v2962
        %v3063 = vadd.f32 %v2819, %v2965
        %v3064 = vadd.f32 %v2820, %v2967
        %v3065 = vadd.f32 %v2821, %v2970
        %v3066 = vadd.f32 %v2822, %v2972
        %v3067 = vadd.f32 %v2823, %v2975
        %v3068 = vadd.f32 %v2824, %v2977
        %v3069 = vadd.f32 %v2825, %v2980
        %v3070 = vadd.f32 %v2826, %v2982
        %v3071 = vadd.f32 %v2827, %v2985
        %v3072 = vadd.f32 %v2828, %v2987
        %v3073 = vadd.f32 %v2829, %v2990
        %v3074 = vadd.f32 %v2830, %v2992
        %v3075 = vadd.f32 %v2831, %v2995
        %v3076 = vadd.f32 %v2832, %v2997
        %v3077 = vadd.f32 %v2833, %v3000
        %v3078 = vadd.f32 %v2834, %v3002
        %v3079 = vadd.f32 %v2835, %v3005
        %v3080 = vadd.f32 %v2836, %v3007
        %v3081 = vadd.f32 %v2837, %v3010
        %v3082 = vadd.f32 %v2838, %v3012
        %v3083 = vadd.f32 %v2839, %v3015
        %v3084 = vadd.f32 %v2840, %v3017
        %v3085 = vadd.f32 %v2841, %v3020
        %v3086 = vadd.f32 %v2842, %v3022
        %v3087 = vlaneseq
        %v3088 = vshrl.u32 %v3087, 7
        %v3089 = vsub.s32 3, %v3088
        %v3090 = vrot.slane %v436, %v3089
        %v3091 = vmul.f32 %v380, %v3090
        %v3092 = vmul.f32 %v381, %v3090
        %v3093 = vmul.f32 %v382, %v3090
        %v3094 = vmul.f32 %v383, %v3090
        %v3095 = vmul.f32 %v384, %v3090
        %v3096 = vmul.f32 %v385, %v3090
        %v3097 = vmul.f32 %v386, %v3090
        %v3098 = vmul.f32 %v387, %v3090
        %v3099 = vmul.f32 %v388, %v3090
        %v3100 = vmul.f32 %v389, %v3090
        %v3101 = vmul.f32 %v390, %v3090
        %v3102 = vmul.f32 %v391, %v3090
        %v3103 = vmul.f32 %v392, %v3090
        %v3104 = vmul.f32 %v393, %v3090
        %v3105 = vmul.f32 %v394, %v3090
        %v3106 = vmul.f32 %v395, %v3090
        %v3107 = vmul.f32 %v396, %v3090
        %v3108 = vmul.f32 %v397, %v3090
        %v3109 = vmul.f32 %v398, %v3090
        %v3110 = vmul.f32 %v399, %v3090
        %v3111 = vmul.f32 %v400, %v3090
        %v3112 = vmul.f32 %v401, %v3090
        %v3113 = vmul.f32 %v402, %v3090
        %v3114 = vmul.f32 %v403, %v3090
        %v3115 = vmul.f32 %v404, %v3090
        %v3116 = vmul.f32 %v405, %v3090
        %v3117 = vmul.f32 %v406, %v3090
        %v3118 = vmul.f32 %v407, %v3090
        %v3119 = vmul.f32 %v408, %v3090
        %v3120 = vmul.f32 %v409, %v3090
        %v3121 = vmul.f32 %v410, %v3090
        %v3122 = vmul.f32 %v411, %v3090
        %v3123 = vmul.f32 %v412, %v3090
        %v3124 = vmul.f32 %v413, %v3090
        %v3125 = vmul.f32 %v414, %v3090
        %v3126 = vmul.f32 %v415, %v3090
        %v3127 = vmul.f32 %v416, %v3090
        %v3128 = vmul.f32 %v417, %v3090
        %v3129 = vmul.f32 %v418, %v3090
        %v3130 = vmul.f32 %v419, %v3090
        %v3131 = vmul.f32 %v420, %v3090
        %v3132 = vmul.f32 %v421, %v3090
        %v3133 = vmul.f32 %v422, %v3090
        %v3134 = vmul.f32 %v423, %v3090
        %v3135 = vmul.f32 %v424, %v3090
        %v3136 = vmul.f32 %v425, %v3090
        %v3137 = vmul.f32 %v426, %v3090
        %v3138 = vmul.f32 %v427, %v3090
        %v3187 = vrot.slane %v3091, 3
        %v3188 = vrot.slane %v3092, 3
        %v3189 = vsel %vm1097, %v3187, %v3188
        %v3190 = vrot.slane %v3093, 3
        %v3191 = vsel %vm1097, %v3188, %v3190
        %v3192 = vrot.slane %v3094, 3
        %v3193 = vrot.slane %v3095, 3
        %v3194 = vsel %vm1097, %v3192, %v3193
        %v3195 = vrot.slane %v3096, 3
        %v3196 = vsel %vm1097, %v3193, %v3195
        %v3197 = vrot.slane %v3097, 3
        %v3198 = vrot.slane %v3098, 3
        %v3199 = vsel %vm1097, %v3197, %v3198
        %v3200 = vrot.slane %v3099, 3
        %v3201 = vsel %vm1097, %v3198, %v3200
        %v3202 = vrot.slane %v3100, 3
        %v3203 = vrot.slane %v3101, 3
        %v3204 = vsel %vm1097, %v3202, %v3203
        %v3205 = vrot.slane %v3102, 3
        %v3206 = vsel %vm1097, %v3203, %v3205
        %v3207 = vrot.slane %v3103, 3
        %v3208 = vrot.slane %v3104, 3
        %v3209 = vsel %vm1097, %v3207, %v3208
        %v3210 = vrot.slane %v3105, 3
        %v3211 = vsel %vm1097, %v3208, %v3210
        %v3212 = vrot.slane %v3106, 3
        %v3213 = vrot.slane %v3107, 3
        %v3214 = vsel %vm1097, %v3212, %v3213
        %v3215 = vrot.slane %v3108, 3
        %v3216 = vsel %vm1097, %v3213, %v3215
        %v3217 = vrot.slane %v3109, 3
        %v3218 = vrot.slane %v3110, 3
        %v3219 = vsel %vm1097, %v3217, %v3218
        %v3220 = vrot.slane %v3111, 3
        %v3221 = vsel %vm1097, %v3218, %v3220
        %v3222 = vrot.slane %v3112, 3
        %v3223 = vrot.slane %v3113, 3
        %v3224 = vsel %vm1097, %v3222, %v3223
        %v3225 = vrot.slane %v3114, 3
        %v3226 = vsel %vm1097, %v3223, %v3225
        %v3227 = vrot.slane %v3115, 3
        %v3228 = vrot.slane %v3116, 3
        %v3229 = vsel %vm1097, %v3227, %v3228
        %v3230 = vrot.slane %v3117, 3
        %v3231 = vsel %vm1097, %v3228, %v3230
        %v3232 = vrot.slane %v3118, 3
        %v3233 = vrot.slane %v3119, 3
        %v3234 = vsel %vm1097, %v3232, %v3233
        %v3235 = vrot.slane %v3120, 3
        %v3236 = vsel %vm1097, %v3233, %v3235
        %v3237 = vrot.slane %v3121, 3
        %v3238 = vrot.slane %v3122, 3
        %v3239 = vsel %vm1097, %v3237, %v3238
        %v3240 = vrot.slane %v3123, 3
        %v3241 = vsel %vm1097, %v3238, %v3240
        %v3242 = vrot.slane %v3124, 3
        %v3243 = vrot.slane %v3125, 3
        %v3244 = vsel %vm1097, %v3242, %v3243
        %v3245 = vrot.slane %v3126, 3
        %v3246 = vsel %vm1097, %v3243, %v3245
        %v3247 = vrot.slane %v3127, 3
        %v3248 = vrot.slane %v3128, 3
        %v3249 = vsel %vm1097, %v3247, %v3248
        %v3250 = vrot.slane %v3129, 3
        %v3251 = vsel %vm1097, %v3248, %v3250
        %v3252 = vrot.slane %v3130, 3
        %v3253 = vrot.slane %v3131, 3
        %v3254 = vsel %vm1097, %v3252, %v3253
        %v3255 = vrot.slane %v3132, 3
        %v3256 = vsel %vm1097, %v3253, %v3255
        %v3257 = vrot.slane %v3133, 3
        %v3258 = vrot.slane %v3134, 3
        %v3259 = vsel %vm1097, %v3257, %v3258
        %v3260 = vrot.slane %v3135, 3
        %v3261 = vsel %vm1097, %v3258, %v3260
        %v3262 = vrot.slane %v3136, 3
        %v3263 = vrot.slane %v3137, 3
        %v3264 = vsel %vm1097, %v3262, %v3263
        %v3265 = vrot.slane %v3138, 3
        %v3266 = vsel %vm1097, %v3263, %v3265
        %v3299 = vadd.f32 %v3055, %v3189
        %v3300 = vadd.f32 %v3056, %v3191
        %v3301 = vadd.f32 %v3057, %v3194
        %v3302 = vadd.f32 %v3058, %v3196
        %v3303 = vadd.f32 %v3059, %v3199
        %v3304 = vadd.f32 %v3060, %v3201
        %v3305 = vadd.f32 %v3061, %v3204
        %v3306 = vadd.f32 %v3062, %v3206
        %v3307 = vadd.f32 %v3063, %v3209
        %v3308 = vadd.f32 %v3064, %v3211
        %v3309 = vadd.f32 %v3065, %v3214
        %v3310 = vadd.f32 %v3066, %v3216
        %v3311 = vadd.f32 %v3067, %v3219
        %v3312 = vadd.f32 %v3068, %v3221
        %v3313 = vadd.f32 %v3069, %v3224
        %v3314 = vadd.f32 %v3070, %v3226
        %v3315 = vadd.f32 %v3071, %v3229
        %v3316 = vadd.f32 %v3072, %v3231
        %v3317 = vadd.f32 %v3073, %v3234
        %v3318 = vadd.f32 %v3074, %v3236
        %v3319 = vadd.f32 %v3075, %v3239
        %v3320 = vadd.f32 %v3076, %v3241
        %v3321 = vadd.f32 %v3077, %v3244
        %v3322 = vadd.f32 %v3078, %v3246
        %v3323 = vadd.f32 %v3079, %v3249
        %v3324 = vadd.f32 %v3080, %v3251
        %v3325 = vadd.f32 %v3081, %v3254
        %v3326 = vadd.f32 %v3082, %v3256
        %v3327 = vadd.f32 %v3083, %v3259
        %v3328 = vadd.f32 %v3084, %v3261
        %v3329 = vadd.f32 %v3085, %v3264
        %v3330 = vadd.f32 %v3086, %v3266
        %v3331 = vlaneseq
        %v3332 = vshrl.u32 %v3331, 7
        %v3333 = vsub.s32 4, %v3332
        %v3334 = vrot.slane %v436, %v3333
        %v3335 = vmul.f32 %v380, %v3334
        %v3336 = vmul.f32 %v381, %v3334
        %v3337 = vmul.f32 %v382, %v3334
        %v3338 = vmul.f32 %v383, %v3334
        %v3339 = vmul.f32 %v384, %v3334
        %v3340 = vmul.f32 %v385, %v3334
        %v3341 = vmul.f32 %v386, %v3334
        %v3342 = vmul.f32 %v387, %v3334
        %v3343 = vmul.f32 %v388, %v3334
        %v3344 = vmul.f32 %v389, %v3334
        %v3345 = vmul.f32 %v390, %v3334
        %v3346 = vmul.f32 %v391, %v3334
        %v3347 = vmul.f32 %v392, %v3334
        %v3348 = vmul.f32 %v393, %v3334
        %v3349 = vmul.f32 %v394, %v3334
        %v3350 = vmul.f32 %v395, %v3334
        %v3351 = vmul.f32 %v396, %v3334
        %v3352 = vmul.f32 %v397, %v3334
        %v3353 = vmul.f32 %v398, %v3334
        %v3354 = vmul.f32 %v399, %v3334
        %v3355 = vmul.f32 %v400, %v3334
        %v3356 = vmul.f32 %v401, %v3334
        %v3357 = vmul.f32 %v402, %v3334
        %v3358 = vmul.f32 %v403, %v3334
        %v3359 = vmul.f32 %v404, %v3334
        %v3360 = vmul.f32 %v405, %v3334
        %v3361 = vmul.f32 %v406, %v3334
        %v3362 = vmul.f32 %v407, %v3334
        %v3363 = vmul.f32 %v408, %v3334
        %v3364 = vmul.f32 %v409, %v3334
        %v3365 = vmul.f32 %v410, %v3334
        %v3366 = vmul.f32 %v411, %v3334
        %v3367 = vmul.f32 %v412, %v3334
        %v3368 = vmul.f32 %v413, %v3334
        %v3369 = vmul.f32 %v414, %v3334
        %v3370 = vmul.f32 %v415, %v3334
        %v3371 = vmul.f32 %v416, %v3334
        %v3372 = vmul.f32 %v417, %v3334
        %v3373 = vmul.f32 %v418, %v3334
        %v3374 = vmul.f32 %v419, %v3334
        %v3375 = vmul.f32 %v420, %v3334
        %v3376 = vmul.f32 %v421, %v3334
        %v3377 = vmul.f32 %v422, %v3334
        %v3378 = vmul.f32 %v423, %v3334
        %v3379 = vmul.f32 %v424, %v3334
        %v3380 = vmul.f32 %v425, %v3334
        %v3381 = vmul.f32 %v426, %v3334
        %v3382 = vmul.f32 %v427, %v3334
        %v3431 = vrot.slane %v3335, 4
        %v3432 = vrot.slane %v3336, 4
        %v3433 = vsel %vm1342, %v3431, %v3432
        %v3434 = vrot.slane %v3337, 4
        %v3435 = vsel %vm1342, %v3432, %v3434
        %v3436 = vrot.slane %v3338, 4
        %v3437 = vrot.slane %v3339, 4
        %v3438 = vsel %vm1342, %v3436, %v3437
        %v3439 = vrot.slane %v3340, 4
        %v3440 = vsel %vm1342, %v3437, %v3439
        %v3441 = vrot.slane %v3341, 4
        %v3442 = vrot.slane %v3342, 4
        %v3443 = vsel %vm1342, %v3441, %v3442
        %v3444 = vrot.slane %v3343, 4
        %v3445 = vsel %vm1342, %v3442, %v3444
        %v3446 = vrot.slane %v3344, 4
        %v3447 = vrot.slane %v3345, 4
        %v3448 = vsel %vm1342, %v3446, %v3447
        %v3449 = vrot.slane %v3346, 4
        %v3450 = vsel %vm1342, %v3447, %v3449
        %v3451 = vrot.slane %v3347, 4
        %v3452 = vrot.slane %v3348, 4
        %v3453 = vsel %vm1342, %v3451, %v3452
        %v3454 = vrot.slane %v3349, 4
        %v3455 = vsel %vm1342, %v3452, %v3454
        %v3456 = vrot.slane %v3350, 4
        %v3457 = vrot.slane %v3351, 4
        %v3458 = vsel %vm1342, %v3456, %v3457
        %v3459 = vrot.slane %v3352, 4
        %v3460 = vsel %vm1342, %v3457, %v3459
        %v3461 = vrot.slane %v3353, 4
        %v3462 = vrot.slane %v3354, 4
        %v3463 = vsel %vm1342, %v3461, %v3462
        %v3464 = vrot.slane %v3355, 4
        %v3465 = vsel %vm1342, %v3462, %v3464
        %v3466 = vrot.slane %v3356, 4
        %v3467 = vrot.slane %v3357, 4
        %v3468 = vsel %vm1342, %v3466, %v3467
        %v3469 = vrot.slane %v3358, 4
        %v3470 = vsel %vm1342, %v3467, %v3469
        %v3471 = vrot.slane %v3359, 4
        %v3472 = vrot.slane %v3360, 4
        %v3473 = vsel %vm1342, %v3471, %v3472
        %v3474 = vrot.slane %v3361, 4
        %v3475 = vsel %vm1342, %v3472, %v3474
        %v3476 = vrot.slane %v3362, 4
        %v3477 = vrot.slane %v3363, 4
        %v3478 = vsel %vm1342, %v3476, %v3477
        %v3479 = vrot.slane %v3364, 4
        %v3480 = vsel %vm1342, %v3477, %v3479
        %v3481 = vrot.slane %v3365, 4
        %v3482 = vrot.slane %v3366, 4
        %v3483 = vsel %vm1342, %v3481, %v3482
        %v3484 = vrot.slane %v3367, 4
        %v3485 = vsel %vm1342, %v3482, %v3484
        %v3486 = vrot.slane %v3368, 4
        %v3487 = vrot.slane %v3369, 4
        %v3488 = vsel %vm1342, %v3486, %v3487
        %v3489 = vrot.slane %v3370, 4
        %v3490 = vsel %vm1342, %v3487, %v3489
        %v3491 = vrot.slane %v3371, 4
        %v3492 = vrot.slane %v3372, 4
        %v3493 = vsel %vm1342, %v3491, %v3492
        %v3494 = vrot.slane %v3373, 4
        %v3495 = vsel %vm1342, %v3492, %v3494
        %v3496 = vrot.slane %v3374, 4
        %v3497 = vrot.slane %v3375, 4
        %v3498 = vsel %vm1342, %v3496, %v3497
        %v3499 = vrot.slane %v3376, 4
        %v3500 = vsel %vm1342, %v3497, %v3499
        %v3501 = vrot.slane %v3377, 4
        %v3502 = vrot.slane %v3378, 4
        %v3503 = vsel %vm1342, %v3501, %v3502
        %v3504 = vrot.slane %v3379, 4
        %v3505 = vsel %vm1342, %v3502, %v3504
        %v3506 = vrot.slane %v3380, 4
        %v3507 = vrot.slane %v3381, 4
        %v3508 = vsel %vm1342, %v3506, %v3507
        %v3509 = vrot.slane %v3382, 4
        %v3510 = vsel %vm1342, %v3507, %v3509
        %v3543 = vadd.f32 %v3299, %v3433
        %v3544 = vadd.f32 %v3300, %v3435
        %v3545 = vadd.f32 %v3301, %v3438
        %v3546 = vadd.f32 %v3302, %v3440
        %v3547 = vadd.f32 %v3303, %v3443
        %v3548 = vadd.f32 %v3304, %v3445
        %v3549 = vadd.f32 %v3305, %v3448
        %v3550 = vadd.f32 %v3306, %v3450
        %v3551 = vadd.f32 %v3307, %v3453
        %v3552 = vadd.f32 %v3308, %v3455
        %v3553 = vadd.f32 %v3309, %v3458
        %v3554 = vadd.f32 %v3310, %v3460
        %v3555 = vadd.f32 %v3311, %v3463
        %v3556 = vadd.f32 %v3312, %v3465
        %v3557 = vadd.f32 %v3313, %v3468
        %v3558 = vadd.f32 %v3314, %v3470
        %v3559 = vadd.f32 %v3315, %v3473
        %v3560 = vadd.f32 %v3316, %v3475
        %v3561 = vadd.f32 %v3317, %v3478
        %v3562 = vadd.f32 %v3318, %v3480
        %v3563 = vadd.f32 %v3319, %v3483
        %v3564 = vadd.f32 %v3320, %v3485
        %v3565 = vadd.f32 %v3321, %v3488
        %v3566 = vadd.f32 %v3322, %v3490
        %v3567 = vadd.f32 %v3323, %v3493
        %v3568 = vadd.f32 %v3324, %v3495
        %v3569 = vadd.f32 %v3325, %v3498
        %v3570 = vadd.f32 %v3326, %v3500
        %v3571 = vadd.f32 %v3327, %v3503
        %v3572 = vadd.f32 %v3328, %v3505
        %v3573 = vadd.f32 %v3329, %v3508
        %v3574 = vadd.f32 %v3330, %v3510
        %v3575 = vlaneseq
        %v3576 = vshrl.u32 %v3575, 7
        %v3577 = vsub.s32 0, %v3576
        %v3578 = vrot.slane %v437, %v3577
        %v3579 = vmul.f32 %v383, %v3578
        %v3580 = vmul.f32 %v384, %v3578
        %v3581 = vmul.f32 %v386, %v3578
        %v3582 = vmul.f32 %v387, %v3578
        %v3583 = vmul.f32 %v389, %v3578
        %v3584 = vmul.f32 %v390, %v3578
        %v3585 = vmul.f32 %v392, %v3578
        %v3586 = vmul.f32 %v393, %v3578
        %v3587 = vmul.f32 %v395, %v3578
        %v3588 = vmul.f32 %v396, %v3578
        %v3589 = vmul.f32 %v398, %v3578
        %v3590 = vmul.f32 %v399, %v3578
        %v3591 = vmul.f32 %v401, %v3578
        %v3592 = vmul.f32 %v402, %v3578
        %v3593 = vmul.f32 %v404, %v3578
        %v3594 = vmul.f32 %v405, %v3578
        %v3595 = vmul.f32 %v407, %v3578
        %v3596 = vmul.f32 %v408, %v3578
        %v3597 = vmul.f32 %v410, %v3578
        %v3598 = vmul.f32 %v411, %v3578
        %v3599 = vmul.f32 %v413, %v3578
        %v3600 = vmul.f32 %v414, %v3578
        %v3601 = vmul.f32 %v416, %v3578
        %v3602 = vmul.f32 %v417, %v3578
        %v3603 = vmul.f32 %v419, %v3578
        %v3604 = vmul.f32 %v420, %v3578
        %v3605 = vmul.f32 %v422, %v3578
        %v3606 = vmul.f32 %v423, %v3578
        %v3607 = vmul.f32 %v425, %v3578
        %v3608 = vmul.f32 %v426, %v3578
        %v3609 = vmul.f32 %v428, %v3578
        %v3610 = vmul.f32 %v429, %v3578
        %v3611 = vadd.f32 %v3543, %v3579
        %v3612 = vadd.f32 %v3544, %v3580
        %v3613 = vadd.f32 %v3545, %v3581
        %v3614 = vadd.f32 %v3546, %v3582
        %v3615 = vadd.f32 %v3547, %v3583
        %v3616 = vadd.f32 %v3548, %v3584
        %v3617 = vadd.f32 %v3549, %v3585
        %v3618 = vadd.f32 %v3550, %v3586
        %v3619 = vadd.f32 %v3551, %v3587
        %v3620 = vadd.f32 %v3552, %v3588
        %v3621 = vadd.f32 %v3553, %v3589
        %v3622 = vadd.f32 %v3554, %v3590
        %v3623 = vadd.f32 %v3555, %v3591
        %v3624 = vadd.f32 %v3556, %v3592
        %v3625 = vadd.f32 %v3557, %v3593
        %v3626 = vadd.f32 %v3558, %v3594
        %v3627 = vadd.f32 %v3559, %v3595
        %v3628 = vadd.f32 %v3560, %v3596
        %v3629 = vadd.f32 %v3561, %v3597
        %v3630 = vadd.f32 %v3562, %v3598
        %v3631 = vadd.f32 %v3563, %v3599
        %v3632 = vadd.f32 %v3564, %v3600
        %v3633 = vadd.f32 %v3565, %v3601
        %v3634 = vadd.f32 %v3566, %v3602
        %v3635 = vadd.f32 %v3567, %v3603
        %v3636 = vadd.f32 %v3568, %v3604
        %v3637 = vadd.f32 %v3569, %v3605
        %v3638 = vadd.f32 %v3570, %v3606
        %v3639 = vadd.f32 %v3571, %v3607
        %v3640 = vadd.f32 %v3572, %v3608
        %v3641 = vadd.f32 %v3573, %v3609
        %v3642 = vadd.f32 %v3574, %v3610
        %v3643 = vlaneseq
        %v3644 = vshrl.u32 %v3643, 7
        %v3645 = vsub.s32 1, %v3644
        %v3646 = vrot.slane %v437, %v3645
        %v3647 = vmul.f32 %v383, %v3646
        %v3648 = vmul.f32 %v384, %v3646
        %v3649 = vmul.f32 %v385, %v3646
        %v3650 = vmul.f32 %v386, %v3646
        %v3651 = vmul.f32 %v387, %v3646
        %v3652 = vmul.f32 %v388, %v3646
        %v3653 = vmul.f32 %v389, %v3646
        %v3654 = vmul.f32 %v390, %v3646
        %v3655 = vmul.f32 %v391, %v3646
        %v3656 = vmul.f32 %v392, %v3646
        %v3657 = vmul.f32 %v393, %v3646
        %v3658 = vmul.f32 %v394, %v3646
        %v3659 = vmul.f32 %v395, %v3646
        %v3660 = vmul.f32 %v396, %v3646
        %v3661 = vmul.f32 %v397, %v3646
        %v3662 = vmul.f32 %v398, %v3646
        %v3663 = vmul.f32 %v399, %v3646
        %v3664 = vmul.f32 %v400, %v3646
        %v3665 = vmul.f32 %v401, %v3646
        %v3666 = vmul.f32 %v402, %v3646
        %v3667 = vmul.f32 %v403, %v3646
        %v3668 = vmul.f32 %v404, %v3646
        %v3669 = vmul.f32 %v405, %v3646
        %v3670 = vmul.f32 %v406, %v3646
        %v3671 = vmul.f32 %v407, %v3646
        %v3672 = vmul.f32 %v408, %v3646
        %v3673 = vmul.f32 %v409, %v3646
        %v3674 = vmul.f32 %v410, %v3646
        %v3675 = vmul.f32 %v411, %v3646
        %v3676 = vmul.f32 %v412, %v3646
        %v3677 = vmul.f32 %v413, %v3646
        %v3678 = vmul.f32 %v414, %v3646
        %v3679 = vmul.f32 %v415, %v3646
        %v3680 = vmul.f32 %v416, %v3646
        %v3681 = vmul.f32 %v417, %v3646
        %v3682 = vmul.f32 %v418, %v3646
        %v3683 = vmul.f32 %v419, %v3646
        %v3684 = vmul.f32 %v420, %v3646
        %v3685 = vmul.f32 %v421, %v3646
        %v3686 = vmul.f32 %v422, %v3646
        %v3687 = vmul.f32 %v423, %v3646
        %v3688 = vmul.f32 %v424, %v3646
        %v3689 = vmul.f32 %v425, %v3646
        %v3690 = vmul.f32 %v426, %v3646
        %v3691 = vmul.f32 %v427, %v3646
        %v3692 = vmul.f32 %v428, %v3646
        %v3693 = vmul.f32 %v429, %v3646
        %v3694 = vmul.f32 %v430, %v3646
        %v3743 = vrot.slane %v3647, 1
        %v3744 = vrot.slane %v3648, 1
        %v3745 = vsel %vm607, %v3743, %v3744
        %v3746 = vrot.slane %v3649, 1
        %v3747 = vsel %vm607, %v3744, %v3746
        %v3748 = vrot.slane %v3650, 1
        %v3749 = vrot.slane %v3651, 1
        %v3750 = vsel %vm607, %v3748, %v3749
        %v3751 = vrot.slane %v3652, 1
        %v3752 = vsel %vm607, %v3749, %v3751
        %v3753 = vrot.slane %v3653, 1
        %v3754 = vrot.slane %v3654, 1
        %v3755 = vsel %vm607, %v3753, %v3754
        %v3756 = vrot.slane %v3655, 1
        %v3757 = vsel %vm607, %v3754, %v3756
        %v3758 = vrot.slane %v3656, 1
        %v3759 = vrot.slane %v3657, 1
        %v3760 = vsel %vm607, %v3758, %v3759
        %v3761 = vrot.slane %v3658, 1
        %v3762 = vsel %vm607, %v3759, %v3761
        %v3763 = vrot.slane %v3659, 1
        %v3764 = vrot.slane %v3660, 1
        %v3765 = vsel %vm607, %v3763, %v3764
        %v3766 = vrot.slane %v3661, 1
        %v3767 = vsel %vm607, %v3764, %v3766
        %v3768 = vrot.slane %v3662, 1
        %v3769 = vrot.slane %v3663, 1
        %v3770 = vsel %vm607, %v3768, %v3769
        %v3771 = vrot.slane %v3664, 1
        %v3772 = vsel %vm607, %v3769, %v3771
        %v3773 = vrot.slane %v3665, 1
        %v3774 = vrot.slane %v3666, 1
        %v3775 = vsel %vm607, %v3773, %v3774
        %v3776 = vrot.slane %v3667, 1
        %v3777 = vsel %vm607, %v3774, %v3776
        %v3778 = vrot.slane %v3668, 1
        %v3779 = vrot.slane %v3669, 1
        %v3780 = vsel %vm607, %v3778, %v3779
        %v3781 = vrot.slane %v3670, 1
        %v3782 = vsel %vm607, %v3779, %v3781
        %v3783 = vrot.slane %v3671, 1
        %v3784 = vrot.slane %v3672, 1
        %v3785 = vsel %vm607, %v3783, %v3784
        %v3786 = vrot.slane %v3673, 1
        %v3787 = vsel %vm607, %v3784, %v3786
        %v3788 = vrot.slane %v3674, 1
        %v3789 = vrot.slane %v3675, 1
        %v3790 = vsel %vm607, %v3788, %v3789
        %v3791 = vrot.slane %v3676, 1
        %v3792 = vsel %vm607, %v3789, %v3791
        %v3793 = vrot.slane %v3677, 1
        %v3794 = vrot.slane %v3678, 1
        %v3795 = vsel %vm607, %v3793, %v3794
        %v3796 = vrot.slane %v3679, 1
        %v3797 = vsel %vm607, %v3794, %v3796
        %v3798 = vrot.slane %v3680, 1
        %v3799 = vrot.slane %v3681, 1
        %v3800 = vsel %vm607, %v3798, %v3799
        %v3801 = vrot.slane %v3682, 1
        %v3802 = vsel %vm607, %v3799, %v3801
        %v3803 = vrot.slane %v3683, 1
        %v3804 = vrot.slane %v3684, 1
        %v3805 = vsel %vm607, %v3803, %v3804
        %v3806 = vrot.slane %v3685, 1
        %v3807 = vsel %vm607, %v3804, %v3806
        %v3808 = vrot.slane %v3686, 1
        %v3809 = vrot.slane %v3687, 1
        %v3810 = vsel %vm607, %v3808, %v3809
        %v3811 = vrot.slane %v3688, 1
        %v3812 = vsel %vm607, %v3809, %v3811
        %v3813 = vrot.slane %v3689, 1
        %v3814 = vrot.slane %v3690, 1
        %v3815 = vsel %vm607, %v3813, %v3814
        %v3816 = vrot.slane %v3691, 1
        %v3817 = vsel %vm607, %v3814, %v3816
        %v3818 = vrot.slane %v3692, 1
        %v3819 = vrot.slane %v3693, 1
        %v3820 = vsel %vm607, %v3818, %v3819
        %v3821 = vrot.slane %v3694, 1
        %v3822 = vsel %vm607, %v3819, %v3821
        %v3855 = vadd.f32 %v3611, %v3745
        %v3856 = vadd.f32 %v3612, %v3747
        %v3857 = vadd.f32 %v3613, %v3750
        %v3858 = vadd.f32 %v3614, %v3752
        %v3859 = vadd.f32 %v3615, %v3755
        %v3860 = vadd.f32 %v3616, %v3757
        %v3861 = vadd.f32 %v3617, %v3760
        %v3862 = vadd.f32 %v3618, %v3762
        %v3863 = vadd.f32 %v3619, %v3765
        %v3864 = vadd.f32 %v3620, %v3767
        %v3865 = vadd.f32 %v3621, %v3770
        %v3866 = vadd.f32 %v3622, %v3772
        %v3867 = vadd.f32 %v3623, %v3775
        %v3868 = vadd.f32 %v3624, %v3777
        %v3869 = vadd.f32 %v3625, %v3780
        %v3870 = vadd.f32 %v3626, %v3782
        %v3871 = vadd.f32 %v3627, %v3785
        %v3872 = vadd.f32 %v3628, %v3787
        %v3873 = vadd.f32 %v3629, %v3790
        %v3874 = vadd.f32 %v3630, %v3792
        %v3875 = vadd.f32 %v3631, %v3795
        %v3876 = vadd.f32 %v3632, %v3797
        %v3877 = vadd.f32 %v3633, %v3800
        %v3878 = vadd.f32 %v3634, %v3802
        %v3879 = vadd.f32 %v3635, %v3805
        %v3880 = vadd.f32 %v3636, %v3807
        %v3881 = vadd.f32 %v3637, %v3810
        %v3882 = vadd.f32 %v3638, %v3812
        %v3883 = vadd.f32 %v3639, %v3815
        %v3884 = vadd.f32 %v3640, %v3817
        %v3885 = vadd.f32 %v3641, %v3820
        %v3886 = vadd.f32 %v3642, %v3822
        %v3887 = vlaneseq
        %v3888 = vshrl.u32 %v3887, 7
        %v3889 = vsub.s32 2, %v3888
        %v3890 = vrot.slane %v437, %v3889
        %v3891 = vmul.f32 %v383, %v3890
        %v3892 = vmul.f32 %v384, %v3890
        %v3893 = vmul.f32 %v385, %v3890
        %v3894 = vmul.f32 %v386, %v3890
        %v3895 = vmul.f32 %v387, %v3890
        %v3896 = vmul.f32 %v388, %v3890
        %v3897 = vmul.f32 %v389, %v3890
        %v3898 = vmul.f32 %v390, %v3890
        %v3899 = vmul.f32 %v391, %v3890
        %v3900 = vmul.f32 %v392, %v3890
        %v3901 = vmul.f32 %v393, %v3890
        %v3902 = vmul.f32 %v394, %v3890
        %v3903 = vmul.f32 %v395, %v3890
        %v3904 = vmul.f32 %v396, %v3890
        %v3905 = vmul.f32 %v397, %v3890
        %v3906 = vmul.f32 %v398, %v3890
        %v3907 = vmul.f32 %v399, %v3890
        %v3908 = vmul.f32 %v400, %v3890
        %v3909 = vmul.f32 %v401, %v3890
        %v3910 = vmul.f32 %v402, %v3890
        %v3911 = vmul.f32 %v403, %v3890
        %v3912 = vmul.f32 %v404, %v3890
        %v3913 = vmul.f32 %v405, %v3890
        %v3914 = vmul.f32 %v406, %v3890
        %v3915 = vmul.f32 %v407, %v3890
        %v3916 = vmul.f32 %v408, %v3890
        %v3917 = vmul.f32 %v409, %v3890
        %v3918 = vmul.f32 %v410, %v3890
        %v3919 = vmul.f32 %v411, %v3890
        %v3920 = vmul.f32 %v412, %v3890
        %v3921 = vmul.f32 %v413, %v3890
        %v3922 = vmul.f32 %v414, %v3890
        %v3923 = vmul.f32 %v415, %v3890
        %v3924 = vmul.f32 %v416, %v3890
        %v3925 = vmul.f32 %v417, %v3890
        %v3926 = vmul.f32 %v418, %v3890
        %v3927 = vmul.f32 %v419, %v3890
        %v3928 = vmul.f32 %v420, %v3890
        %v3929 = vmul.f32 %v421, %v3890
        %v3930 = vmul.f32 %v422, %v3890
        %v3931 = vmul.f32 %v423, %v3890
        %v3932 = vmul.f32 %v424, %v3890
        %v3933 = vmul.f32 %v425, %v3890
        %v3934 = vmul.f32 %v426, %v3890
        %v3935 = vmul.f32 %v427, %v3890
        %v3936 = vmul.f32 %v428, %v3890
        %v3937 = vmul.f32 %v429, %v3890
        %v3938 = vmul.f32 %v430, %v3890
        %v3987 = vrot.slane %v3891, 2
        %v3988 = vrot.slane %v3892, 2
        %v3989 = vsel %vm852, %v3987, %v3988
        %v3990 = vrot.slane %v3893, 2
        %v3991 = vsel %vm852, %v3988, %v3990
        %v3992 = vrot.slane %v3894, 2
        %v3993 = vrot.slane %v3895, 2
        %v3994 = vsel %vm852, %v3992, %v3993
        %v3995 = vrot.slane %v3896, 2
        %v3996 = vsel %vm852, %v3993, %v3995
        %v3997 = vrot.slane %v3897, 2
        %v3998 = vrot.slane %v3898, 2
        %v3999 = vsel %vm852, %v3997, %v3998
        %v4000 = vrot.slane %v3899, 2
        %v4001 = vsel %vm852, %v3998, %v4000
        %v4002 = vrot.slane %v3900, 2
        %v4003 = vrot.slane %v3901, 2
        %v4004 = vsel %vm852, %v4002, %v4003
        %v4005 = vrot.slane %v3902, 2
        %v4006 = vsel %vm852, %v4003, %v4005
        %v4007 = vrot.slane %v3903, 2
        %v4008 = vrot.slane %v3904, 2
        %v4009 = vsel %vm852, %v4007, %v4008
        %v4010 = vrot.slane %v3905, 2
        %v4011 = vsel %vm852, %v4008, %v4010
        %v4012 = vrot.slane %v3906, 2
        %v4013 = vrot.slane %v3907, 2
        %v4014 = vsel %vm852, %v4012, %v4013
        %v4015 = vrot.slane %v3908, 2
        %v4016 = vsel %vm852, %v4013, %v4015
        %v4017 = vrot.slane %v3909, 2
        %v4018 = vrot.slane %v3910, 2
        %v4019 = vsel %vm852, %v4017, %v4018
        %v4020 = vrot.slane %v3911, 2
        %v4021 = vsel %vm852, %v4018, %v4020
        %v4022 = vrot.slane %v3912, 2
        %v4023 = vrot.slane %v3913, 2
        %v4024 = vsel %vm852, %v4022, %v4023
        %v4025 = vrot.slane %v3914, 2
        %v4026 = vsel %vm852, %v4023, %v4025
        %v4027 = vrot.slane %v3915, 2
        %v4028 = vrot.slane %v3916, 2
        %v4029 = vsel %vm852, %v4027, %v4028
        %v4030 = vrot.slane %v3917, 2
        %v4031 = vsel %vm852, %v4028, %v4030
        %v4032 = vrot.slane %v3918, 2
        %v4033 = vrot.slane %v3919, 2
        %v4034 = vsel %vm852, %v4032, %v4033
        %v4035 = vrot.slane %v3920, 2
        %v4036 = vsel %vm852, %v4033, %v4035
        %v4037 = vrot.slane %v3921, 2
        %v4038 = vrot.slane %v3922, 2
        %v4039 = vsel %vm852, %v4037, %v4038
        %v4040 = vrot.slane %v3923, 2
        %v4041 = vsel %vm852, %v4038, %v4040
        %v4042 = vrot.slane %v3924, 2
        %v4043 = vrot.slane %v3925, 2
        %v4044 = vsel %vm852, %v4042, %v4043
        %v4045 = vrot.slane %v3926, 2
        %v4046 = vsel %vm852, %v4043, %v4045
        %v4047 = vrot.slane %v3927, 2
        %v4048 = vrot.slane %v3928, 2
        %v4049 = vsel %vm852, %v4047, %v4048
        %v4050 = vrot.slane %v3929, 2
        %v4051 = vsel %vm852, %v4048, %v4050
        %v4052 = vrot.slane %v3930, 2
        %v4053 = vrot.slane %v3931, 2
        %v4054 = vsel %vm852, %v4052, %v4053
        %v4055 = vrot.slane %v3932, 2
        %v4056 = vsel %vm852, %v4053, %v4055
        %v4057 = vrot.slane %v3933, 2
        %v4058 = vrot.slane %v3934, 2
        %v4059 = vsel %vm852, %v4057, %v4058
        %v4060 = vrot.slane %v3935, 2
        %v4061 = vsel %vm852, %v4058, %v4060
        %v4062 = vrot.slane %v3936, 2
        %v4063 = vrot.slane %v3937, 2
        %v4064 = vsel %vm852, %v4062, %v4063
        %v4065 = vrot.slane %v3938, 2
        %v4066 = vsel %vm852, %v4063, %v4065
        %v4099 = vadd.f32 %v3855, %v3989
        %v4100 = vadd.f32 %v3856, %v3991
        %v4101 = vadd.f32 %v3857, %v3994
        %v4102 = vadd.f32 %v3858, %v3996
        %v4103 = vadd.f32 %v3859, %v3999
        %v4104 = vadd.f32 %v3860, %v4001
        %v4105 = vadd.f32 %v3861, %v4004
        %v4106 = vadd.f32 %v3862, %v4006
        %v4107 = vadd.f32 %v3863, %v4009
        %v4108 = vadd.f32 %v3864, %v4011
        %v4109 = vadd.f32 %v3865, %v4014
        %v4110 = vadd.f32 %v3866, %v4016
        %v4111 = vadd.f32 %v3867, %v4019
        %v4112 = vadd.f32 %v3868, %v4021
        %v4113 = vadd.f32 %v3869, %v4024
        %v4114 = vadd.f32 %v3870, %v4026
        %v4115 = vadd.f32 %v3871, %v4029
        %v4116 = vadd.f32 %v3872, %v4031
        %v4117 = vadd.f32 %v3873, %v4034
        %v4118 = vadd.f32 %v3874, %v4036
        %v4119 = vadd.f32 %v3875, %v4039
        %v4120 = vadd.f32 %v3876, %v4041
        %v4121 = vadd.f32 %v3877, %v4044
        %v4122 = vadd.f32 %v3878, %v4046
        %v4123 = vadd.f32 %v3879, %v4049
        %v4124 = vadd.f32 %v3880, %v4051
        %v4125 = vadd.f32 %v3881, %v4054
        %v4126 = vadd.f32 %v3882, %v4056
        %v4127 = vadd.f32 %v3883, %v4059
        %v4128 = vadd.f32 %v3884, %v4061
        %v4129 = vadd.f32 %v3885, %v4064
        %v4130 = vadd.f32 %v3886, %v4066
        %v4131 = vlaneseq
        %v4132 = vshrl.u32 %v4131, 7
        %v4133 = vsub.s32 3, %v4132
        %v4134 = vrot.slane %v437, %v4133
        %v4135 = vmul.f32 %v383, %v4134
        %v4136 = vmul.f32 %v384, %v4134
        %v4137 = vmul.f32 %v385, %v4134
        %v4138 = vmul.f32 %v386, %v4134
        %v4139 = vmul.f32 %v387, %v4134
        %v4140 = vmul.f32 %v388, %v4134
        %v4141 = vmul.f32 %v389, %v4134
        %v4142 = vmul.f32 %v390, %v4134
        %v4143 = vmul.f32 %v391, %v4134
        %v4144 = vmul.f32 %v392, %v4134
        %v4145 = vmul.f32 %v393, %v4134
        %v4146 = vmul.f32 %v394, %v4134
        %v4147 = vmul.f32 %v395, %v4134
        %v4148 = vmul.f32 %v396, %v4134
        %v4149 = vmul.f32 %v397, %v4134
        %v4150 = vmul.f32 %v398, %v4134
        %v4151 = vmul.f32 %v399, %v4134
        %v4152 = vmul.f32 %v400, %v4134
        %v4153 = vmul.f32 %v401, %v4134
        %v4154 = vmul.f32 %v402, %v4134
        %v4155 = vmul.f32 %v403, %v4134
        %v4156 = vmul.f32 %v404, %v4134
        %v4157 = vmul.f32 %v405, %v4134
        %v4158 = vmul.f32 %v406, %v4134
        %v4159 = vmul.f32 %v407, %v4134
        %v4160 = vmul.f32 %v408, %v4134
        %v4161 = vmul.f32 %v409, %v4134
        %v4162 = vmul.f32 %v410, %v4134
        %v4163 = vmul.f32 %v411, %v4134
        %v4164 = vmul.f32 %v412, %v4134
        %v4165 = vmul.f32 %v413, %v4134
        %v4166 = vmul.f32 %v414, %v4134
        %v4167 = vmul.f32 %v415, %v4134
        %v4168 = vmul.f32 %v416, %v4134
        %v4169 = vmul.f32 %v417, %v4134
        %v4170 = vmul.f32 %v418, %v4134
        %v4171 = vmul.f32 %v419, %v4134
        %v4172 = vmul.f32 %v420, %v4134
        %v4173 = vmul.f32 %v421, %v4134
        %v4174 = vmul.f32 %v422, %v4134
        %v4175 = vmul.f32 %v423, %v4134
        %v4176 = vmul.f32 %v424, %v4134
        %v4177 = vmul.f32 %v425, %v4134
        %v4178 = vmul.f32 %v426, %v4134
        %v4179 = vmul.f32 %v427, %v4134
        %v4180 = vmul.f32 %v428, %v4134
        %v4181 = vmul.f32 %v429, %v4134
        %v4182 = vmul.f32 %v430, %v4134
        %v4231 = vrot.slane %v4135, 3
        %v4232 = vrot.slane %v4136, 3
        %v4233 = vsel %vm1097, %v4231, %v4232
        %v4234 = vrot.slane %v4137, 3
        %v4235 = vsel %vm1097, %v4232, %v4234
        %v4236 = vrot.slane %v4138, 3
        %v4237 = vrot.slane %v4139, 3
        %v4238 = vsel %vm1097, %v4236, %v4237
        %v4239 = vrot.slane %v4140, 3
        %v4240 = vsel %vm1097, %v4237, %v4239
        %v4241 = vrot.slane %v4141, 3
        %v4242 = vrot.slane %v4142, 3
        %v4243 = vsel %vm1097, %v4241, %v4242
        %v4244 = vrot.slane %v4143, 3
        %v4245 = vsel %vm1097, %v4242, %v4244
        %v4246 = vrot.slane %v4144, 3
        %v4247 = vrot.slane %v4145, 3
        %v4248 = vsel %vm1097, %v4246, %v4247
        %v4249 = vrot.slane %v4146, 3
        %v4250 = vsel %vm1097, %v4247, %v4249
        %v4251 = vrot.slane %v4147, 3
        %v4252 = vrot.slane %v4148, 3
        %v4253 = vsel %vm1097, %v4251, %v4252
        %v4254 = vrot.slane %v4149, 3
        %v4255 = vsel %vm1097, %v4252, %v4254
        %v4256 = vrot.slane %v4150, 3
        %v4257 = vrot.slane %v4151, 3
        %v4258 = vsel %vm1097, %v4256, %v4257
        %v4259 = vrot.slane %v4152, 3
        %v4260 = vsel %vm1097, %v4257, %v4259
        %v4261 = vrot.slane %v4153, 3
        %v4262 = vrot.slane %v4154, 3
        %v4263 = vsel %vm1097, %v4261, %v4262
        %v4264 = vrot.slane %v4155, 3
        %v4265 = vsel %vm1097, %v4262, %v4264
        %v4266 = vrot.slane %v4156, 3
        %v4267 = vrot.slane %v4157, 3
        %v4268 = vsel %vm1097, %v4266, %v4267
        %v4269 = vrot.slane %v4158, 3
        %v4270 = vsel %vm1097, %v4267, %v4269
        %v4271 = vrot.slane %v4159, 3
        %v4272 = vrot.slane %v4160, 3
        %v4273 = vsel %vm1097, %v4271, %v4272
        %v4274 = vrot.slane %v4161, 3
        %v4275 = vsel %vm1097, %v4272, %v4274
        %v4276 = vrot.slane %v4162, 3
        %v4277 = vrot.slane %v4163, 3
        %v4278 = vsel %vm1097, %v4276, %v4277
        %v4279 = vrot.slane %v4164, 3
        %v4280 = vsel %vm1097, %v4277, %v4279
        %v4281 = vrot.slane %v4165, 3
        %v4282 = vrot.slane %v4166, 3
        %v4283 = vsel %vm1097, %v4281, %v4282
        %v4284 = vrot.slane %v4167, 3
        %v4285 = vsel %vm1097, %v4282, %v4284
        %v4286 = vrot.slane %v4168, 3
        %v4287 = vrot.slane %v4169, 3
        %v4288 = vsel %vm1097, %v4286, %v4287
        %v4289 = vrot.slane %v4170, 3
        %v4290 = vsel %vm1097, %v4287, %v4289
        %v4291 = vrot.slane %v4171, 3
        %v4292 = vrot.slane %v4172, 3
        %v4293 = vsel %vm1097, %v4291, %v4292
        %v4294 = vrot.slane %v4173, 3
        %v4295 = vsel %vm1097, %v4292, %v4294
        %v4296 = vrot.slane %v4174, 3
        %v4297 = vrot.slane %v4175, 3
        %v4298 = vsel %vm1097, %v4296, %v4297
        %v4299 = vrot.slane %v4176, 3
        %v4300 = vsel %vm1097, %v4297, %v4299
        %v4301 = vrot.slane %v4177, 3
        %v4302 = vrot.slane %v4178, 3
        %v4303 = vsel %vm1097, %v4301, %v4302
        %v4304 = vrot.slane %v4179, 3
        %v4305 = vsel %vm1097, %v4302, %v4304
        %v4306 = vrot.slane %v4180, 3
        %v4307 = vrot.slane %v4181, 3
        %v4308 = vsel %vm1097, %v4306, %v4307
        %v4309 = vrot.slane %v4182, 3
        %v4310 = vsel %vm1097, %v4307, %v4309
        %v4343 = vadd.f32 %v4099, %v4233
        %v4344 = vadd.f32 %v4100, %v4235
        %v4345 = vadd.f32 %v4101, %v4238
        %v4346 = vadd.f32 %v4102, %v4240
        %v4347 = vadd.f32 %v4103, %v4243
        %v4348 = vadd.f32 %v4104, %v4245
        %v4349 = vadd.f32 %v4105, %v4248
        %v4350 = vadd.f32 %v4106, %v4250
        %v4351 = vadd.f32 %v4107, %v4253
        %v4352 = vadd.f32 %v4108, %v4255
        %v4353 = vadd.f32 %v4109, %v4258
        %v4354 = vadd.f32 %v4110, %v4260
        %v4355 = vadd.f32 %v4111, %v4263
        %v4356 = vadd.f32 %v4112, %v4265
        %v4357 = vadd.f32 %v4113, %v4268
        %v4358 = vadd.f32 %v4114, %v4270
        %v4359 = vadd.f32 %v4115, %v4273
        %v4360 = vadd.f32 %v4116, %v4275
        %v4361 = vadd.f32 %v4117, %v4278
        %v4362 = vadd.f32 %v4118, %v4280
        %v4363 = vadd.f32 %v4119, %v4283
        %v4364 = vadd.f32 %v4120, %v4285
        %v4365 = vadd.f32 %v4121, %v4288
        %v4366 = vadd.f32 %v4122, %v4290
        %v4367 = vadd.f32 %v4123, %v4293
        %v4368 = vadd.f32 %v4124, %v4295
        %v4369 = vadd.f32 %v4125, %v4298
        %v4370 = vadd.f32 %v4126, %v4300
        %v4371 = vadd.f32 %v4127, %v4303
        %v4372 = vadd.f32 %v4128, %v4305
        %v4373 = vadd.f32 %v4129, %v4308
        %v4374 = vadd.f32 %v4130, %v4310
        %v4375 = vlaneseq
        %v4376 = vshrl.u32 %v4375, 7
        %v4377 = vsub.s32 4, %v4376
        %v4378 = vrot.slane %v437, %v4377
        %v4379 = vmul.f32 %v383, %v4378
        %v4380 = vmul.f32 %v384, %v4378
        %v4381 = vmul.f32 %v385, %v4378
        %v4382 = vmul.f32 %v386, %v4378
        %v4383 = vmul.f32 %v387, %v4378
        %v4384 = vmul.f32 %v388, %v4378
        %v4385 = vmul.f32 %v389, %v4378
        %v4386 = vmul.f32 %v390, %v4378
        %v4387 = vmul.f32 %v391, %v4378
        %v4388 = vmul.f32 %v392, %v4378
        %v4389 = vmul.f32 %v393, %v4378
        %v4390 = vmul.f32 %v394, %v4378
        %v4391 = vmul.f32 %v395, %v4378
        %v4392 = vmul.f32 %v396, %v4378
        %v4393 = vmul.f32 %v397, %v4378
        %v4394 = vmul.f32 %v398, %v4378
        %v4395 = vmul.f32 %v399, %v4378
        %v4396 = vmul.f32 %v400, %v4378
        %v4397 = vmul.f32 %v401, %v4378
        %v4398 = vmul.f32 %v402, %v4378
        %v4399 = vmul.f32 %v403, %v4378
        %v4400 = vmul.f32 %v404, %v4378
        %v4401 = vmul.f32 %v405, %v4378
        %v4402 = vmul.f32 %v406, %v4378
        %v4403 = vmul.f32 %v407, %v4378
        %v4404 = vmul.f32 %v408, %v4378
        %v4405 = vmul.f32 %v409, %v4378
        %v4406 = vmul.f32 %v410, %v4378
        %v4407 = vmul.f32 %v411, %v4378
        %v4408 = vmul.f32 %v412, %v4378
        %v4409 = vmul.f32 %v413, %v4378
        %v4410 = vmul.f32 %v414, %v4378
        %v4411 = vmul.f32 %v415, %v4378
        %v4412 = vmul.f32 %v416, %v4378
        %v4413 = vmul.f32 %v417, %v4378
        %v4414 = vmul.f32 %v418, %v4378
        %v4415 = vmul.f32 %v419, %v4378
        %v4416 = vmul.f32 %v420, %v4378
        %v4417 = vmul.f32 %v421, %v4378
        %v4418 = vmul.f32 %v422, %v4378
        %v4419 = vmul.f32 %v423, %v4378
        %v4420 = vmul.f32 %v424, %v4378
        %v4421 = vmul.f32 %v425, %v4378
        %v4422 = vmul.f32 %v426, %v4378
        %v4423 = vmul.f32 %v427, %v4378
        %v4424 = vmul.f32 %v428, %v4378
        %v4425 = vmul.f32 %v429, %v4378
        %v4426 = vmul.f32 %v430, %v4378
        %v4475 = vrot.slane %v4379, 4
        %v4476 = vrot.slane %v4380, 4
        %v4477 = vsel %vm1342, %v4475, %v4476
        %v4478 = vrot.slane %v4381, 4
        %v4479 = vsel %vm1342, %v4476, %v4478
        %v4480 = vrot.slane %v4382, 4
        %v4481 = vrot.slane %v4383, 4
        %v4482 = vsel %vm1342, %v4480, %v4481
        %v4483 = vrot.slane %v4384, 4
        %v4484 = vsel %vm1342, %v4481, %v4483
        %v4485 = vrot.slane %v4385, 4
        %v4486 = vrot.slane %v4386, 4
        %v4487 = vsel %vm1342, %v4485, %v4486
        %v4488 = vrot.slane %v4387, 4
        %v4489 = vsel %vm1342, %v4486, %v4488
        %v4490 = vrot.slane %v4388, 4
        %v4491 = vrot.slane %v4389, 4
        %v4492 = vsel %vm1342, %v4490, %v4491
        %v4493 = vrot.slane %v4390, 4
        %v4494 = vsel %vm1342, %v4491, %v4493
        %v4495 = vrot.slane %v4391, 4
        %v4496 = vrot.slane %v4392, 4
        %v4497 = vsel %vm1342, %v4495, %v4496
        %v4498 = vrot.slane %v4393, 4
        %v4499 = vsel %vm1342, %v4496, %v4498
        %v4500 = vrot.slane %v4394, 4
        %v4501 = vrot.slane %v4395, 4
        %v4502 = vsel %vm1342, %v4500, %v4501
        %v4503 = vrot.slane %v4396, 4
        %v4504 = vsel %vm1342, %v4501, %v4503
        %v4505 = vrot.slane %v4397, 4
        %v4506 = vrot.slane %v4398, 4
        %v4507 = vsel %vm1342, %v4505, %v4506
        %v4508 = vrot.slane %v4399, 4
        %v4509 = vsel %vm1342, %v4506, %v4508
        %v4510 = vrot.slane %v4400, 4
        %v4511 = vrot.slane %v4401, 4
        %v4512 = vsel %vm1342, %v4510, %v4511
        %v4513 = vrot.slane %v4402, 4
        %v4514 = vsel %vm1342, %v4511, %v4513
        %v4515 = vrot.slane %v4403, 4
        %v4516 = vrot.slane %v4404, 4
        %v4517 = vsel %vm1342, %v4515, %v4516
        %v4518 = vrot.slane %v4405, 4
        %v4519 = vsel %vm1342, %v4516, %v4518
        %v4520 = vrot.slane %v4406, 4
        %v4521 = vrot.slane %v4407, 4
        %v4522 = vsel %vm1342, %v4520, %v4521
        %v4523 = vrot.slane %v4408, 4
        %v4524 = vsel %vm1342, %v4521, %v4523
        %v4525 = vrot.slane %v4409, 4
        %v4526 = vrot.slane %v4410, 4
        %v4527 = vsel %vm1342, %v4525, %v4526
        %v4528 = vrot.slane %v4411, 4
        %v4529 = vsel %vm1342, %v4526, %v4528
        %v4530 = vrot.slane %v4412, 4
        %v4531 = vrot.slane %v4413, 4
        %v4532 = vsel %vm1342, %v4530, %v4531
        %v4533 = vrot.slane %v4414, 4
        %v4534 = vsel %vm1342, %v4531, %v4533
        %v4535 = vrot.slane %v4415, 4
        %v4536 = vrot.slane %v4416, 4
        %v4537 = vsel %vm1342, %v4535, %v4536
        %v4538 = vrot.slane %v4417, 4
        %v4539 = vsel %vm1342, %v4536, %v4538
        %v4540 = vrot.slane %v4418, 4
        %v4541 = vrot.slane %v4419, 4
        %v4542 = vsel %vm1342, %v4540, %v4541
        %v4543 = vrot.slane %v4420, 4
        %v4544 = vsel %vm1342, %v4541, %v4543
        %v4545 = vrot.slane %v4421, 4
        %v4546 = vrot.slane %v4422, 4
        %v4547 = vsel %vm1342, %v4545, %v4546
        %v4548 = vrot.slane %v4423, 4
        %v4549 = vsel %vm1342, %v4546, %v4548
        %v4550 = vrot.slane %v4424, 4
        %v4551 = vrot.slane %v4425, 4
        %v4552 = vsel %vm1342, %v4550, %v4551
        %v4553 = vrot.slane %v4426, 4
        %v4554 = vsel %vm1342, %v4551, %v4553
        %v4587 = vadd.f32 %v4343, %v4477
        %v4588 = vadd.f32 %v4344, %v4479
        %v4589 = vadd.f32 %v4345, %v4482
        %v4590 = vadd.f32 %v4346, %v4484
        %v4591 = vadd.f32 %v4347, %v4487
        %v4592 = vadd.f32 %v4348, %v4489
        %v4593 = vadd.f32 %v4349, %v4492
        %v4594 = vadd.f32 %v4350, %v4494
        %v4595 = vadd.f32 %v4351, %v4497
        %v4596 = vadd.f32 %v4352, %v4499
        %v4597 = vadd.f32 %v4353, %v4502
        %v4598 = vadd.f32 %v4354, %v4504
        %v4599 = vadd.f32 %v4355, %v4507
        %v4600 = vadd.f32 %v4356, %v4509
        %v4601 = vadd.f32 %v4357, %v4512
        %v4602 = vadd.f32 %v4358, %v4514
        %v4603 = vadd.f32 %v4359, %v4517
        %v4604 = vadd.f32 %v4360, %v4519
        %v4605 = vadd.f32 %v4361, %v4522
        %v4606 = vadd.f32 %v4362, %v4524
        %v4607 = vadd.f32 %v4363, %v4527
        %v4608 = vadd.f32 %v4364, %v4529
        %v4609 = vadd.f32 %v4365, %v4532
        %v4610 = vadd.f32 %v4366, %v4534
        %v4611 = vadd.f32 %v4367, %v4537
        %v4612 = vadd.f32 %v4368, %v4539
        %v4613 = vadd.f32 %v4369, %v4542
        %v4614 = vadd.f32 %v4370, %v4544
        %v4615 = vadd.f32 %v4371, %v4547
        %v4616 = vadd.f32 %v4372, %v4549
        %v4617 = vadd.f32 %v4373, %v4552
        %v4618 = vadd.f32 %v4374, %v4554
        %v4619 = vlaneseq
        %v4620 = vshrl.u32 %v4619, 7
        %v4621 = vsub.s32 0, %v4620
        %v4622 = vrot.slane %v438, %v4621
        %v4623 = vmul.f32 %v386, %v4622
        %v4624 = vmul.f32 %v387, %v4622
        %v4625 = vmul.f32 %v389, %v4622
        %v4626 = vmul.f32 %v390, %v4622
        %v4627 = vmul.f32 %v392, %v4622
        %v4628 = vmul.f32 %v393, %v4622
        %v4629 = vmul.f32 %v395, %v4622
        %v4630 = vmul.f32 %v396, %v4622
        %v4631 = vmul.f32 %v398, %v4622
        %v4632 = vmul.f32 %v399, %v4622
        %v4633 = vmul.f32 %v401, %v4622
        %v4634 = vmul.f32 %v402, %v4622
        %v4635 = vmul.f32 %v404, %v4622
        %v4636 = vmul.f32 %v405, %v4622
        %v4637 = vmul.f32 %v407, %v4622
        %v4638 = vmul.f32 %v408, %v4622
        %v4639 = vmul.f32 %v410, %v4622
        %v4640 = vmul.f32 %v411, %v4622
        %v4641 = vmul.f32 %v413, %v4622
        %v4642 = vmul.f32 %v414, %v4622
        %v4643 = vmul.f32 %v416, %v4622
        %v4644 = vmul.f32 %v417, %v4622
        %v4645 = vmul.f32 %v419, %v4622
        %v4646 = vmul.f32 %v420, %v4622
        %v4647 = vmul.f32 %v422, %v4622
        %v4648 = vmul.f32 %v423, %v4622
        %v4649 = vmul.f32 %v425, %v4622
        %v4650 = vmul.f32 %v426, %v4622
        %v4651 = vmul.f32 %v428, %v4622
        %v4652 = vmul.f32 %v429, %v4622
        %v4653 = vmul.f32 %v431, %v4622
        %v4654 = vmul.f32 %v432, %v4622
        %v4655 = vadd.f32 %v4587, %v4623
        %v4656 = vadd.f32 %v4588, %v4624
        %v4657 = vadd.f32 %v4589, %v4625
        %v4658 = vadd.f32 %v4590, %v4626
        %v4659 = vadd.f32 %v4591, %v4627
        %v4660 = vadd.f32 %v4592, %v4628
        %v4661 = vadd.f32 %v4593, %v4629
        %v4662 = vadd.f32 %v4594, %v4630
        %v4663 = vadd.f32 %v4595, %v4631
        %v4664 = vadd.f32 %v4596, %v4632
        %v4665 = vadd.f32 %v4597, %v4633
        %v4666 = vadd.f32 %v4598, %v4634
        %v4667 = vadd.f32 %v4599, %v4635
        %v4668 = vadd.f32 %v4600, %v4636
        %v4669 = vadd.f32 %v4601, %v4637
        %v4670 = vadd.f32 %v4602, %v4638
        %v4671 = vadd.f32 %v4603, %v4639
        %v4672 = vadd.f32 %v4604, %v4640
        %v4673 = vadd.f32 %v4605, %v4641
        %v4674 = vadd.f32 %v4606, %v4642
        %v4675 = vadd.f32 %v4607, %v4643
        %v4676 = vadd.f32 %v4608, %v4644
        %v4677 = vadd.f32 %v4609, %v4645
        %v4678 = vadd.f32 %v4610, %v4646
        %v4679 = vadd.f32 %v4611, %v4647
        %v4680 = vadd.f32 %v4612, %v4648
        %v4681 = vadd.f32 %v4613, %v4649
        %v4682 = vadd.f32 %v4614, %v4650
        %v4683 = vadd.f32 %v4615, %v4651
        %v4684 = vadd.f32 %v4616, %v4652
        %v4685 = vadd.f32 %v4617, %v4653
        %v4686 = vadd.f32 %v4618, %v4654
        %v4687 = vlaneseq
        %v4688 = vshrl.u32 %v4687, 7
        %v4689 = vsub.s32 1, %v4688
        %v4690 = vrot.slane %v438, %v4689
        %v4691 = vmul.f32 %v386, %v4690
        %v4692 = vmul.f32 %v387, %v4690
        %v4693 = vmul.f32 %v388, %v4690
        %v4694 = vmul.f32 %v389, %v4690
        %v4695 = vmul.f32 %v390, %v4690
        %v4696 = vmul.f32 %v391, %v4690
        %v4697 = vmul.f32 %v392, %v4690
        %v4698 = vmul.f32 %v393, %v4690
        %v4699 = vmul.f32 %v394, %v4690
        %v4700 = vmul.f32 %v395, %v4690
        %v4701 = vmul.f32 %v396, %v4690
        %v4702 = vmul.f32 %v397, %v4690
        %v4703 = vmul.f32 %v398, %v4690
        %v4704 = vmul.f32 %v399, %v4690
        %v4705 = vmul.f32 %v400, %v4690
        %v4706 = vmul.f32 %v401, %v4690
        %v4707 = vmul.f32 %v402, %v4690
        %v4708 = vmul.f32 %v403, %v4690
        %v4709 = vmul.f32 %v404, %v4690
        %v4710 = vmul.f32 %v405, %v4690
        %v4711 = vmul.f32 %v406, %v4690
        %v4712 = vmul.f32 %v407, %v4690
        %v4713 = vmul.f32 %v408, %v4690
        %v4714 = vmul.f32 %v409, %v4690
        %v4715 = vmul.f32 %v410, %v4690
        %v4716 = vmul.f32 %v411, %v4690
        %v4717 = vmul.f32 %v412, %v4690
        %v4718 = vmul.f32 %v413, %v4690
        %v4719 = vmul.f32 %v414, %v4690
        %v4720 = vmul.f32 %v415, %v4690
        %v4721 = vmul.f32 %v416, %v4690
        %v4722 = vmul.f32 %v417, %v4690
        %v4723 = vmul.f32 %v418, %v4690
        %v4724 = vmul.f32 %v419, %v4690
        %v4725 = vmul.f32 %v420, %v4690
        %v4726 = vmul.f32 %v421, %v4690
        %v4727 = vmul.f32 %v422, %v4690
        %v4728 = vmul.f32 %v423, %v4690
        %v4729 = vmul.f32 %v424, %v4690
        %v4730 = vmul.f32 %v425, %v4690
        %v4731 = vmul.f32 %v426, %v4690
        %v4732 = vmul.f32 %v427, %v4690
        %v4733 = vmul.f32 %v428, %v4690
        %v4734 = vmul.f32 %v429, %v4690
        %v4735 = vmul.f32 %v430, %v4690
        %v4736 = vmul.f32 %v431, %v4690
        %v4737 = vmul.f32 %v432, %v4690
        %v4738 = vmul.f32 %v433, %v4690
        %v4787 = vrot.slane %v4691, 1
        %v4788 = vrot.slane %v4692, 1
        %v4789 = vsel %vm607, %v4787, %v4788
        %v4790 = vrot.slane %v4693, 1
        %v4791 = vsel %vm607, %v4788, %v4790
        %v4792 = vrot.slane %v4694, 1
        %v4793 = vrot.slane %v4695, 1
        %v4794 = vsel %vm607, %v4792, %v4793
        %v4795 = vrot.slane %v4696, 1
        %v4796 = vsel %vm607, %v4793, %v4795
        %v4797 = vrot.slane %v4697, 1
        %v4798 = vrot.slane %v4698, 1
        %v4799 = vsel %vm607, %v4797, %v4798
        %v4800 = vrot.slane %v4699, 1
        %v4801 = vsel %vm607, %v4798, %v4800
        %v4802 = vrot.slane %v4700, 1
        %v4803 = vrot.slane %v4701, 1
        %v4804 = vsel %vm607, %v4802, %v4803
        %v4805 = vrot.slane %v4702, 1
        %v4806 = vsel %vm607, %v4803, %v4805
        %v4807 = vrot.slane %v4703, 1
        %v4808 = vrot.slane %v4704, 1
        %v4809 = vsel %vm607, %v4807, %v4808
        %v4810 = vrot.slane %v4705, 1
        %v4811 = vsel %vm607, %v4808, %v4810
        %v4812 = vrot.slane %v4706, 1
        %v4813 = vrot.slane %v4707, 1
        %v4814 = vsel %vm607, %v4812, %v4813
        %v4815 = vrot.slane %v4708, 1
        %v4816 = vsel %vm607, %v4813, %v4815
        %v4817 = vrot.slane %v4709, 1
        %v4818 = vrot.slane %v4710, 1
        %v4819 = vsel %vm607, %v4817, %v4818
        %v4820 = vrot.slane %v4711, 1
        %v4821 = vsel %vm607, %v4818, %v4820
        %v4822 = vrot.slane %v4712, 1
        %v4823 = vrot.slane %v4713, 1
        %v4824 = vsel %vm607, %v4822, %v4823
        %v4825 = vrot.slane %v4714, 1
        %v4826 = vsel %vm607, %v4823, %v4825
        %v4827 = vrot.slane %v4715, 1
        %v4828 = vrot.slane %v4716, 1
        %v4829 = vsel %vm607, %v4827, %v4828
        %v4830 = vrot.slane %v4717, 1
        %v4831 = vsel %vm607, %v4828, %v4830
        %v4832 = vrot.slane %v4718, 1
        %v4833 = vrot.slane %v4719, 1
        %v4834 = vsel %vm607, %v4832, %v4833
        %v4835 = vrot.slane %v4720, 1
        %v4836 = vsel %vm607, %v4833, %v4835
        %v4837 = vrot.slane %v4721, 1
        %v4838 = vrot.slane %v4722, 1
        %v4839 = vsel %vm607, %v4837, %v4838
        %v4840 = vrot.slane %v4723, 1
        %v4841 = vsel %vm607, %v4838, %v4840
        %v4842 = vrot.slane %v4724, 1
        %v4843 = vrot.slane %v4725, 1
        %v4844 = vsel %vm607, %v4842, %v4843
        %v4845 = vrot.slane %v4726, 1
        %v4846 = vsel %vm607, %v4843, %v4845
        %v4847 = vrot.slane %v4727, 1
        %v4848 = vrot.slane %v4728, 1
        %v4849 = vsel %vm607, %v4847, %v4848
        %v4850 = vrot.slane %v4729, 1
        %v4851 = vsel %vm607, %v4848, %v4850
        %v4852 = vrot.slane %v4730, 1
        %v4853 = vrot.slane %v4731, 1
        %v4854 = vsel %vm607, %v4852, %v4853
        %v4855 = vrot.slane %v4732, 1
        %v4856 = vsel %vm607, %v4853, %v4855
        %v4857 = vrot.slane %v4733, 1
        %v4858 = vrot.slane %v4734, 1
        %v4859 = vsel %vm607, %v4857, %v4858
        %v4860 = vrot.slane %v4735, 1
        %v4861 = vsel %vm607, %v4858, %v4860
        %v4862 = vrot.slane %v4736, 1
        %v4863 = vrot.slane %v4737, 1
        %v4864 = vsel %vm607, %v4862, %v4863
        %v4865 = vrot.slane %v4738, 1
        %v4866 = vsel %vm607, %v4863, %v4865
        %v4899 = vadd.f32 %v4655, %v4789
        %v4900 = vadd.f32 %v4656, %v4791
        %v4901 = vadd.f32 %v4657, %v4794
        %v4902 = vadd.f32 %v4658, %v4796
        %v4903 = vadd.f32 %v4659, %v4799
        %v4904 = vadd.f32 %v4660, %v4801
        %v4905 = vadd.f32 %v4661, %v4804
        %v4906 = vadd.f32 %v4662, %v4806
        %v4907 = vadd.f32 %v4663, %v4809
        %v4908 = vadd.f32 %v4664, %v4811
        %v4909 = vadd.f32 %v4665, %v4814
        %v4910 = vadd.f32 %v4666, %v4816
        %v4911 = vadd.f32 %v4667, %v4819
        %v4912 = vadd.f32 %v4668, %v4821
        %v4913 = vadd.f32 %v4669, %v4824
        %v4914 = vadd.f32 %v4670, %v4826
        %v4915 = vadd.f32 %v4671, %v4829
        %v4916 = vadd.f32 %v4672, %v4831
        %v4917 = vadd.f32 %v4673, %v4834
        %v4918 = vadd.f32 %v4674, %v4836
        %v4919 = vadd.f32 %v4675, %v4839
        %v4920 = vadd.f32 %v4676, %v4841
        %v4921 = vadd.f32 %v4677, %v4844
        %v4922 = vadd.f32 %v4678, %v4846
        %v4923 = vadd.f32 %v4679, %v4849
        %v4924 = vadd.f32 %v4680, %v4851
        %v4925 = vadd.f32 %v4681, %v4854
        %v4926 = vadd.f32 %v4682, %v4856
        %v4927 = vadd.f32 %v4683, %v4859
        %v4928 = vadd.f32 %v4684, %v4861
        %v4929 = vadd.f32 %v4685, %v4864
        %v4930 = vadd.f32 %v4686, %v4866
        %v4931 = vlaneseq
        %v4932 = vshrl.u32 %v4931, 7
        %v4933 = vsub.s32 2, %v4932
        %v4934 = vrot.slane %v438, %v4933
        %v4935 = vmul.f32 %v386, %v4934
        %v4936 = vmul.f32 %v387, %v4934
        %v4937 = vmul.f32 %v388, %v4934
        %v4938 = vmul.f32 %v389, %v4934
        %v4939 = vmul.f32 %v390, %v4934
        %v4940 = vmul.f32 %v391, %v4934
        %v4941 = vmul.f32 %v392, %v4934
        %v4942 = vmul.f32 %v393, %v4934
        %v4943 = vmul.f32 %v394, %v4934
        %v4944 = vmul.f32 %v395, %v4934
        %v4945 = vmul.f32 %v396, %v4934
        %v4946 = vmul.f32 %v397, %v4934
        %v4947 = vmul.f32 %v398, %v4934
        %v4948 = vmul.f32 %v399, %v4934
        %v4949 = vmul.f32 %v400, %v4934
        %v4950 = vmul.f32 %v401, %v4934
        %v4951 = vmul.f32 %v402, %v4934
        %v4952 = vmul.f32 %v403, %v4934
        %v4953 = vmul.f32 %v404, %v4934
        %v4954 = vmul.f32 %v405, %v4934
        %v4955 = vmul.f32 %v406, %v4934
        %v4956 = vmul.f32 %v407, %v4934
        %v4957 = vmul.f32 %v408, %v4934
        %v4958 = vmul.f32 %v409, %v4934
        %v4959 = vmul.f32 %v410, %v4934
        %v4960 = vmul.f32 %v411, %v4934
        %v4961 = vmul.f32 %v412, %v4934
        %v4962 = vmul.f32 %v413, %v4934
        %v4963 = vmul.f32 %v414, %v4934
        %v4964 = vmul.f32 %v415, %v4934
        %v4965 = vmul.f32 %v416, %v4934
        %v4966 = vmul.f32 %v417, %v4934
        %v4967 = vmul.f32 %v418, %v4934
        %v4968 = vmul.f32 %v419, %v4934
        %v4969 = vmul.f32 %v420, %v4934
        %v4970 = vmul.f32 %v421, %v4934
        %v4971 = vmul.f32 %v422, %v4934
        %v4972 = vmul.f32 %v423, %v4934
        %v4973 = vmul.f32 %v424, %v4934
        %v4974 = vmul.f32 %v425, %v4934
        %v4975 = vmul.f32 %v426, %v4934
        %v4976 = vmul.f32 %v427, %v4934
        %v4977 = vmul.f32 %v428, %v4934
        %v4978 = vmul.f32 %v429, %v4934
        %v4979 = vmul.f32 %v430, %v4934
        %v4980 = vmul.f32 %v431, %v4934
        %v4981 = vmul.f32 %v432, %v4934
        %v4982 = vmul.f32 %v433, %v4934
        %v5031 = vrot.slane %v4935, 2
        %v5032 = vrot.slane %v4936, 2
        %v5033 = vsel %vm852, %v5031, %v5032
        %v5034 = vrot.slane %v4937, 2
        %v5035 = vsel %vm852, %v5032, %v5034
        %v5036 = vrot.slane %v4938, 2
        %v5037 = vrot.slane %v4939, 2
        %v5038 = vsel %vm852, %v5036, %v5037
        %v5039 = vrot.slane %v4940, 2
        %v5040 = vsel %vm852, %v5037, %v5039
        %v5041 = vrot.slane %v4941, 2
        %v5042 = vrot.slane %v4942, 2
        %v5043 = vsel %vm852, %v5041, %v5042
        %v5044 = vrot.slane %v4943, 2
        %v5045 = vsel %vm852, %v5042, %v5044
        %v5046 = vrot.slane %v4944, 2
        %v5047 = vrot.slane %v4945, 2
        %v5048 = vsel %vm852, %v5046, %v5047
        %v5049 = vrot.slane %v4946, 2
        %v5050 = vsel %vm852, %v5047, %v5049
        %v5051 = vrot.slane %v4947, 2
        %v5052 = vrot.slane %v4948, 2
        %v5053 = vsel %vm852, %v5051, %v5052
        %v5054 = vrot.slane %v4949, 2
        %v5055 = vsel %vm852, %v5052, %v5054
        %v5056 = vrot.slane %v4950, 2
        %v5057 = vrot.slane %v4951, 2
        %v5058 = vsel %vm852, %v5056, %v5057
        %v5059 = vrot.slane %v4952, 2
        %v5060 = vsel %vm852, %v5057, %v5059
        %v5061 = vrot.slane %v4953, 2
        %v5062 = vrot.slane %v4954, 2
        %v5063 = vsel %vm852, %v5061, %v5062
        %v5064 = vrot.slane %v4955, 2
        %v5065 = vsel %vm852, %v5062, %v5064
        %v5066 = vrot.slane %v4956, 2
        %v5067 = vrot.slane %v4957, 2
        %v5068 = vsel %vm852, %v5066, %v5067
        %v5069 = vrot.slane %v4958, 2
        %v5070 = vsel %vm852, %v5067, %v5069
        %v5071 = vrot.slane %v4959, 2
        %v5072 = vrot.slane %v4960, 2
        %v5073 = vsel %vm852, %v5071, %v5072
        %v5074 = vrot.slane %v4961, 2
        %v5075 = vsel %vm852, %v5072, %v5074
        %v5076 = vrot.slane %v4962, 2
        %v5077 = vrot.slane %v4963, 2
        %v5078 = vsel %vm852, %v5076, %v5077
        %v5079 = vrot.slane %v4964, 2
        %v5080 = vsel %vm852, %v5077, %v5079
        %v5081 = vrot.slane %v4965, 2
        %v5082 = vrot.slane %v4966, 2
        %v5083 = vsel %vm852, %v5081, %v5082
        %v5084 = vrot.slane %v4967, 2
        %v5085 = vsel %vm852, %v5082, %v5084
        %v5086 = vrot.slane %v4968, 2
        %v5087 = vrot.slane %v4969, 2
        %v5088 = vsel %vm852, %v5086, %v5087
        %v5089 = vrot.slane %v4970, 2
        %v5090 = vsel %vm852, %v5087, %v5089
        %v5091 = vrot.slane %v4971, 2
        %v5092 = vrot.slane %v4972, 2
        %v5093 = vsel %vm852, %v5091, %v5092
        %v5094 = vrot.slane %v4973, 2
        %v5095 = vsel %vm852, %v5092, %v5094
        %v5096 = vrot.slane %v4974, 2
        %v5097 = vrot.slane %v4975, 2
        %v5098 = vsel %vm852, %v5096, %v5097
        %v5099 = vrot.slane %v4976, 2
        %v5100 = vsel %vm852, %v5097, %v5099
        %v5101 = vrot.slane %v4977, 2
        %v5102 = vrot.slane %v4978, 2
        %v5103 = vsel %vm852, %v5101, %v5102
        %v5104 = vrot.slane %v4979, 2
        %v5105 = vsel %vm852, %v5102, %v5104
        %v5106 = vrot.slane %v4980, 2
        %v5107 = vrot.slane %v4981, 2
        %v5108 = vsel %vm852, %v5106, %v5107
        %v5109 = vrot.slane %v4982, 2
        %v5110 = vsel %vm852, %v5107, %v5109
        %v5143 = vadd.f32 %v4899, %v5033
        %v5144 = vadd.f32 %v4900, %v5035
        %v5145 = vadd.f32 %v4901, %v5038
        %v5146 = vadd.f32 %v4902, %v5040
        %v5147 = vadd.f32 %v4903, %v5043
        %v5148 = vadd.f32 %v4904, %v5045
        %v5149 = vadd.f32 %v4905, %v5048
        %v5150 = vadd.f32 %v4906, %v5050
        %v5151 = vadd.f32 %v4907, %v5053
        %v5152 = vadd.f32 %v4908, %v5055
        %v5153 = vadd.f32 %v4909, %v5058
        %v5154 = vadd.f32 %v4910, %v5060
        %v5155 = vadd.f32 %v4911, %v5063
        %v5156 = vadd.f32 %v4912, %v5065
        %v5157 = vadd.f32 %v4913, %v5068
        %v5158 = vadd.f32 %v4914, %v5070
        %v5159 = vadd.f32 %v4915, %v5073
        %v5160 = vadd.f32 %v4916, %v5075
        %v5161 = vadd.f32 %v4917, %v5078
        %v5162 = vadd.f32 %v4918, %v5080
        %v5163 = vadd.f32 %v4919, %v5083
        %v5164 = vadd.f32 %v4920, %v5085
        %v5165 = vadd.f32 %v4921, %v5088
        %v5166 = vadd.f32 %v4922, %v5090
        %v5167 = vadd.f32 %v4923, %v5093
        %v5168 = vadd.f32 %v4924, %v5095
        %v5169 = vadd.f32 %v4925, %v5098
        %v5170 = vadd.f32 %v4926, %v5100
        %v5171 = vadd.f32 %v4927, %v5103
        %v5172 = vadd.f32 %v4928, %v5105
        %v5173 = vadd.f32 %v4929, %v5108
        %v5174 = vadd.f32 %v4930, %v5110
        %v5175 = vlaneseq
        %v5176 = vshrl.u32 %v5175, 7
        %v5177 = vsub.s32 3, %v5176
        %v5178 = vrot.slane %v438, %v5177
        %v5179 = vmul.f32 %v386, %v5178
        %v5180 = vmul.f32 %v387, %v5178
        %v5181 = vmul.f32 %v388, %v5178
        %v5182 = vmul.f32 %v389, %v5178
        %v5183 = vmul.f32 %v390, %v5178
        %v5184 = vmul.f32 %v391, %v5178
        %v5185 = vmul.f32 %v392, %v5178
        %v5186 = vmul.f32 %v393, %v5178
        %v5187 = vmul.f32 %v394, %v5178
        %v5188 = vmul.f32 %v395, %v5178
        %v5189 = vmul.f32 %v396, %v5178
        %v5190 = vmul.f32 %v397, %v5178
        %v5191 = vmul.f32 %v398, %v5178
        %v5192 = vmul.f32 %v399, %v5178
        %v5193 = vmul.f32 %v400, %v5178
        %v5194 = vmul.f32 %v401, %v5178
        %v5195 = vmul.f32 %v402, %v5178
        %v5196 = vmul.f32 %v403, %v5178
        %v5197 = vmul.f32 %v404, %v5178
        %v5198 = vmul.f32 %v405, %v5178
        %v5199 = vmul.f32 %v406, %v5178
        %v5200 = vmul.f32 %v407, %v5178
        %v5201 = vmul.f32 %v408, %v5178
        %v5202 = vmul.f32 %v409, %v5178
        %v5203 = vmul.f32 %v410, %v5178
        %v5204 = vmul.f32 %v411, %v5178
        %v5205 = vmul.f32 %v412, %v5178
        %v5206 = vmul.f32 %v413, %v5178
        %v5207 = vmul.f32 %v414, %v5178
        %v5208 = vmul.f32 %v415, %v5178
        %v5209 = vmul.f32 %v416, %v5178
        %v5210 = vmul.f32 %v417, %v5178
        %v5211 = vmul.f32 %v418, %v5178
        %v5212 = vmul.f32 %v419, %v5178
        %v5213 = vmul.f32 %v420, %v5178
        %v5214 = vmul.f32 %v421, %v5178
        %v5215 = vmul.f32 %v422, %v5178
        %v5216 = vmul.f32 %v423, %v5178
        %v5217 = vmul.f32 %v424, %v5178
        %v5218 = vmul.f32 %v425, %v5178
        %v5219 = vmul.f32 %v426, %v5178
        %v5220 = vmul.f32 %v427, %v5178
        %v5221 = vmul.f32 %v428, %v5178
        %v5222 = vmul.f32 %v429, %v5178
        %v5223 = vmul.f32 %v430, %v5178
        %v5224 = vmul.f32 %v431, %v5178
        %v5225 = vmul.f32 %v432, %v5178
        %v5226 = vmul.f32 %v433, %v5178
        %v5275 = vrot.slane %v5179, 3
        %v5276 = vrot.slane %v5180, 3
        %v5277 = vsel %vm1097, %v5275, %v5276
        %v5278 = vrot.slane %v5181, 3
        %v5279 = vsel %vm1097, %v5276, %v5278
        %v5280 = vrot.slane %v5182, 3
        %v5281 = vrot.slane %v5183, 3
        %v5282 = vsel %vm1097, %v5280, %v5281
        %v5283 = vrot.slane %v5184, 3
        %v5284 = vsel %vm1097, %v5281, %v5283
        %v5285 = vrot.slane %v5185, 3
        %v5286 = vrot.slane %v5186, 3
        %v5287 = vsel %vm1097, %v5285, %v5286
        %v5288 = vrot.slane %v5187, 3
        %v5289 = vsel %vm1097, %v5286, %v5288
        %v5290 = vrot.slane %v5188, 3
        %v5291 = vrot.slane %v5189, 3
        %v5292 = vsel %vm1097, %v5290, %v5291
        %v5293 = vrot.slane %v5190, 3
        %v5294 = vsel %vm1097, %v5291, %v5293
        %v5295 = vrot.slane %v5191, 3
        %v5296 = vrot.slane %v5192, 3
        %v5297 = vsel %vm1097, %v5295, %v5296
        %v5298 = vrot.slane %v5193, 3
        %v5299 = vsel %vm1097, %v5296, %v5298
        %v5300 = vrot.slane %v5194, 3
        %v5301 = vrot.slane %v5195, 3
        %v5302 = vsel %vm1097, %v5300, %v5301
        %v5303 = vrot.slane %v5196, 3
        %v5304 = vsel %vm1097, %v5301, %v5303
        %v5305 = vrot.slane %v5197, 3
        %v5306 = vrot.slane %v5198, 3
        %v5307 = vsel %vm1097, %v5305, %v5306
        %v5308 = vrot.slane %v5199, 3
        %v5309 = vsel %vm1097, %v5306, %v5308
        %v5310 = vrot.slane %v5200, 3
        %v5311 = vrot.slane %v5201, 3
        %v5312 = vsel %vm1097, %v5310, %v5311
        %v5313 = vrot.slane %v5202, 3
        %v5314 = vsel %vm1097, %v5311, %v5313
        %v5315 = vrot.slane %v5203, 3
        %v5316 = vrot.slane %v5204, 3
        %v5317 = vsel %vm1097, %v5315, %v5316
        %v5318 = vrot.slane %v5205, 3
        %v5319 = vsel %vm1097, %v5316, %v5318
        %v5320 = vrot.slane %v5206, 3
        %v5321 = vrot.slane %v5207, 3
        %v5322 = vsel %vm1097, %v5320, %v5321
        %v5323 = vrot.slane %v5208, 3
        %v5324 = vsel %vm1097, %v5321, %v5323
        %v5325 = vrot.slane %v5209, 3
        %v5326 = vrot.slane %v5210, 3
        %v5327 = vsel %vm1097, %v5325, %v5326
        %v5328 = vrot.slane %v5211, 3
        %v5329 = vsel %vm1097, %v5326, %v5328
        %v5330 = vrot.slane %v5212, 3
        %v5331 = vrot.slane %v5213, 3
        %v5332 = vsel %vm1097, %v5330, %v5331
        %v5333 = vrot.slane %v5214, 3
        %v5334 = vsel %vm1097, %v5331, %v5333
        %v5335 = vrot.slane %v5215, 3
        %v5336 = vrot.slane %v5216, 3
        %v5337 = vsel %vm1097, %v5335, %v5336
        %v5338 = vrot.slane %v5217, 3
        %v5339 = vsel %vm1097, %v5336, %v5338
        %v5340 = vrot.slane %v5218, 3
        %v5341 = vrot.slane %v5219, 3
        %v5342 = vsel %vm1097, %v5340, %v5341
        %v5343 = vrot.slane %v5220, 3
        %v5344 = vsel %vm1097, %v5341, %v5343
        %v5345 = vrot.slane %v5221, 3
        %v5346 = vrot.slane %v5222, 3
        %v5347 = vsel %vm1097, %v5345, %v5346
        %v5348 = vrot.slane %v5223, 3
        %v5349 = vsel %vm1097, %v5346, %v5348
        %v5350 = vrot.slane %v5224, 3
        %v5351 = vrot.slane %v5225, 3
        %v5352 = vsel %vm1097, %v5350, %v5351
        %v5353 = vrot.slane %v5226, 3
        %v5354 = vsel %vm1097, %v5351, %v5353
        %v5387 = vadd.f32 %v5143, %v5277
        %v5388 = vadd.f32 %v5144, %v5279
        %v5389 = vadd.f32 %v5145, %v5282
        %v5390 = vadd.f32 %v5146, %v5284
        %v5391 = vadd.f32 %v5147, %v5287
        %v5392 = vadd.f32 %v5148, %v5289
        %v5393 = vadd.f32 %v5149, %v5292
        %v5394 = vadd.f32 %v5150, %v5294
        %v5395 = vadd.f32 %v5151, %v5297
        %v5396 = vadd.f32 %v5152, %v5299
        %v5397 = vadd.f32 %v5153, %v5302
        %v5398 = vadd.f32 %v5154, %v5304
        %v5399 = vadd.f32 %v5155, %v5307
        %v5400 = vadd.f32 %v5156, %v5309
        %v5401 = vadd.f32 %v5157, %v5312
        %v5402 = vadd.f32 %v5158, %v5314
        %v5403 = vadd.f32 %v5159, %v5317
        %v5404 = vadd.f32 %v5160, %v5319
        %v5405 = vadd.f32 %v5161, %v5322
        %v5406 = vadd.f32 %v5162, %v5324
        %v5407 = vadd.f32 %v5163, %v5327
        %v5408 = vadd.f32 %v5164, %v5329
        %v5409 = vadd.f32 %v5165, %v5332
        %v5410 = vadd.f32 %v5166, %v5334
        %v5411 = vadd.f32 %v5167, %v5337
        %v5412 = vadd.f32 %v5168, %v5339
        %v5413 = vadd.f32 %v5169, %v5342
        %v5414 = vadd.f32 %v5170, %v5344
        %v5415 = vadd.f32 %v5171, %v5347
        %v5416 = vadd.f32 %v5172, %v5349
        %v5417 = vadd.f32 %v5173, %v5352
        %v5418 = vadd.f32 %v5174, %v5354
        %v5419 = vlaneseq
        %v5420 = vshrl.u32 %v5419, 7
        %v5421 = vsub.s32 4, %v5420
        %v5422 = vrot.slane %v438, %v5421
        %v5423 = vmul.f32 %v386, %v5422
        %v5424 = vmul.f32 %v387, %v5422
        %v5425 = vmul.f32 %v388, %v5422
        %v5426 = vmul.f32 %v389, %v5422
        %v5427 = vmul.f32 %v390, %v5422
        %v5428 = vmul.f32 %v391, %v5422
        %v5429 = vmul.f32 %v392, %v5422
        %v5430 = vmul.f32 %v393, %v5422
        %v5431 = vmul.f32 %v394, %v5422
        %v5432 = vmul.f32 %v395, %v5422
        %v5433 = vmul.f32 %v396, %v5422
        %v5434 = vmul.f32 %v397, %v5422
        %v5435 = vmul.f32 %v398, %v5422
        %v5436 = vmul.f32 %v399, %v5422
        %v5437 = vmul.f32 %v400, %v5422
        %v5438 = vmul.f32 %v401, %v5422
        %v5439 = vmul.f32 %v402, %v5422
        %v5440 = vmul.f32 %v403, %v5422
        %v5441 = vmul.f32 %v404, %v5422
        %v5442 = vmul.f32 %v405, %v5422
        %v5443 = vmul.f32 %v406, %v5422
        %v5444 = vmul.f32 %v407, %v5422
        %v5445 = vmul.f32 %v408, %v5422
        %v5446 = vmul.f32 %v409, %v5422
        %v5447 = vmul.f32 %v410, %v5422
        %v5448 = vmul.f32 %v411, %v5422
        %v5449 = vmul.f32 %v412, %v5422
        %v5450 = vmul.f32 %v413, %v5422
        %v5451 = vmul.f32 %v414, %v5422
        %v5452 = vmul.f32 %v415, %v5422
        %v5453 = vmul.f32 %v416, %v5422
        %v5454 = vmul.f32 %v417, %v5422
        %v5455 = vmul.f32 %v418, %v5422
        %v5456 = vmul.f32 %v419, %v5422
        %v5457 = vmul.f32 %v420, %v5422
        %v5458 = vmul.f32 %v421, %v5422
        %v5459 = vmul.f32 %v422, %v5422
        %v5460 = vmul.f32 %v423, %v5422
        %v5461 = vmul.f32 %v424, %v5422
        %v5462 = vmul.f32 %v425, %v5422
        %v5463 = vmul.f32 %v426, %v5422
        %v5464 = vmul.f32 %v427, %v5422
        %v5465 = vmul.f32 %v428, %v5422
        %v5466 = vmul.f32 %v429, %v5422
        %v5467 = vmul.f32 %v430, %v5422
        %v5468 = vmul.f32 %v431, %v5422
        %v5469 = vmul.f32 %v432, %v5422
        %v5470 = vmul.f32 %v433, %v5422
        %v5519 = vrot.slane %v5423, 4
        %v5520 = vrot.slane %v5424, 4
        %v5521 = vsel %vm1342, %v5519, %v5520
        %v5522 = vrot.slane %v5425, 4
        %v5523 = vsel %vm1342, %v5520, %v5522
        %v5524 = vrot.slane %v5426, 4
        %v5525 = vrot.slane %v5427, 4
        %v5526 = vsel %vm1342, %v5524, %v5525
        %v5527 = vrot.slane %v5428, 4
        %v5528 = vsel %vm1342, %v5525, %v5527
        %v5529 = vrot.slane %v5429, 4
        %v5530 = vrot.slane %v5430, 4
        %v5531 = vsel %vm1342, %v5529, %v5530
        %v5532 = vrot.slane %v5431, 4
        %v5533 = vsel %vm1342, %v5530, %v5532
        %v5534 = vrot.slane %v5432, 4
        %v5535 = vrot.slane %v5433, 4
        %v5536 = vsel %vm1342, %v5534, %v5535
        %v5537 = vrot.slane %v5434, 4
        %v5538 = vsel %vm1342, %v5535, %v5537
        %v5539 = vrot.slane %v5435, 4
        %v5540 = vrot.slane %v5436, 4
        %v5541 = vsel %vm1342, %v5539, %v5540
        %v5542 = vrot.slane %v5437, 4
        %v5543 = vsel %vm1342, %v5540, %v5542
        %v5544 = vrot.slane %v5438, 4
        %v5545 = vrot.slane %v5439, 4
        %v5546 = vsel %vm1342, %v5544, %v5545
        %v5547 = vrot.slane %v5440, 4
        %v5548 = vsel %vm1342, %v5545, %v5547
        %v5549 = vrot.slane %v5441, 4
        %v5550 = vrot.slane %v5442, 4
        %v5551 = vsel %vm1342, %v5549, %v5550
        %v5552 = vrot.slane %v5443, 4
        %v5553 = vsel %vm1342, %v5550, %v5552
        %v5554 = vrot.slane %v5444, 4
        %v5555 = vrot.slane %v5445, 4
        %v5556 = vsel %vm1342, %v5554, %v5555
        %v5557 = vrot.slane %v5446, 4
        %v5558 = vsel %vm1342, %v5555, %v5557
        %v5559 = vrot.slane %v5447, 4
        %v5560 = vrot.slane %v5448, 4
        %v5561 = vsel %vm1342, %v5559, %v5560
        %v5562 = vrot.slane %v5449, 4
        %v5563 = vsel %vm1342, %v5560, %v5562
        %v5564 = vrot.slane %v5450, 4
        %v5565 = vrot.slane %v5451, 4
        %v5566 = vsel %vm1342, %v5564, %v5565
        %v5567 = vrot.slane %v5452, 4
        %v5568 = vsel %vm1342, %v5565, %v5567
        %v5569 = vrot.slane %v5453, 4
        %v5570 = vrot.slane %v5454, 4
        %v5571 = vsel %vm1342, %v5569, %v5570
        %v5572 = vrot.slane %v5455, 4
        %v5573 = vsel %vm1342, %v5570, %v5572
        %v5574 = vrot.slane %v5456, 4
        %v5575 = vrot.slane %v5457, 4
        %v5576 = vsel %vm1342, %v5574, %v5575
        %v5577 = vrot.slane %v5458, 4
        %v5578 = vsel %vm1342, %v5575, %v5577
        %v5579 = vrot.slane %v5459, 4
        %v5580 = vrot.slane %v5460, 4
        %v5581 = vsel %vm1342, %v5579, %v5580
        %v5582 = vrot.slane %v5461, 4
        %v5583 = vsel %vm1342, %v5580, %v5582
        %v5584 = vrot.slane %v5462, 4
        %v5585 = vrot.slane %v5463, 4
        %v5586 = vsel %vm1342, %v5584, %v5585
        %v5587 = vrot.slane %v5464, 4
        %v5588 = vsel %vm1342, %v5585, %v5587
        %v5589 = vrot.slane %v5465, 4
        %v5590 = vrot.slane %v5466, 4
        %v5591 = vsel %vm1342, %v5589, %v5590
        %v5592 = vrot.slane %v5467, 4
        %v5593 = vsel %vm1342, %v5590, %v5592
        %v5594 = vrot.slane %v5468, 4
        %v5595 = vrot.slane %v5469, 4
        %v5596 = vsel %vm1342, %v5594, %v5595
        %v5597 = vrot.slane %v5470, 4
        %v5598 = vsel %vm1342, %v5595, %v5597
        %v5631 = vadd.f32 %v5387, %v5521
        %v5632 = vadd.f32 %v5388, %v5523
        %v5633 = vadd.f32 %v5389, %v5526
        %v5634 = vadd.f32 %v5390, %v5528
        %v5635 = vadd.f32 %v5391, %v5531
        %v5636 = vadd.f32 %v5392, %v5533
        %v5637 = vadd.f32 %v5393, %v5536
        %v5638 = vadd.f32 %v5394, %v5538
        %v5639 = vadd.f32 %v5395, %v5541
        %v5640 = vadd.f32 %v5396, %v5543
        %v5641 = vadd.f32 %v5397, %v5546
        %v5642 = vadd.f32 %v5398, %v5548
        %v5643 = vadd.f32 %v5399, %v5551
        %v5644 = vadd.f32 %v5400, %v5553
        %v5645 = vadd.f32 %v5401, %v5556
        %v5646 = vadd.f32 %v5402, %v5558
        %v5647 = vadd.f32 %v5403, %v5561
        %v5648 = vadd.f32 %v5404, %v5563
        %v5649 = vadd.f32 %v5405, %v5566
        %v5650 = vadd.f32 %v5406, %v5568
        %v5651 = vadd.f32 %v5407, %v5571
        %v5652 = vadd.f32 %v5408, %v5573
        %v5653 = vadd.f32 %v5409, %v5576
        %v5654 = vadd.f32 %v5410, %v5578
        %v5655 = vadd.f32 %v5411, %v5581
        %v5656 = vadd.f32 %v5412, %v5583
        %v5657 = vadd.f32 %v5413, %v5586
        %v5658 = vadd.f32 %v5414, %v5588
        %v5659 = vadd.f32 %v5415, %v5591
        %v5660 = vadd.f32 %v5416, %v5593
        %v5661 = vadd.f32 %v5417, %v5596
        %v5662 = vadd.f32 %v5418, %v5598
        %v5663 = vld [vmem:[#allocation8] sm:$0x1]
        %v5665 = vlaneseq
        %v5666 = vshrl.u32 %v5665, 7
        %v5667 = vsub.s32 0, %v5666
        %v5668 = vrot.slane %v5663, %v5667
        %v5670 = vadd.f32 %v5631, %v5668
        %v5671 = vadd.f32 %v5632, %v5668
        %v5672 = vadd.f32 %v5633, %v5668
        %v5673 = vadd.f32 %v5634, %v5668
        %v5674 = vadd.f32 %v5635, %v5668
        %v5675 = vadd.f32 %v5636, %v5668
        %v5676 = vadd.f32 %v5637, %v5668
        %v5677 = vadd.f32 %v5638, %v5668
        %v5678 = vadd.f32 %v5639, %v5668
        %v5679 = vadd.f32 %v5640, %v5668
        %v5680 = vadd.f32 %v5641, %v5668
        %v5681 = vadd.f32 %v5642, %v5668
        %v5682 = vadd.f32 %v5643, %v5668
        %v5683 = vadd.f32 %v5644, %v5668
        %v5684 = vadd.f32 %v5645, %v5668
        %v5685 = vadd.f32 %v5646, %v5668
        %v5686 = vadd.f32 %v5647, %v5668
        %v5687 = vadd.f32 %v5648, %v5668
        %v5688 = vadd.f32 %v5649, %v5668
        %v5689 = vadd.f32 %v5650, %v5668
        %v5690 = vadd.f32 %v5651, %v5668
        %v5691 = vadd.f32 %v5652, %v5668
        %v5692 = vadd.f32 %v5653, %v5668
        %v5693 = vadd.f32 %v5654, %v5668
        %v5694 = vadd.f32 %v5655, %v5668
        %v5695 = vadd.f32 %v5656, %v5668
        %v5696 = vadd.f32 %v5657, %v5668
        %v5697 = vadd.f32 %v5658, %v5668
        %v5698 = vadd.f32 %v5659, %v5668
        %v5699 = vadd.f32 %v5660, %v5668
        %v5700 = vadd.f32 %v5661, %v5668
        %v5701 = vadd.f32 %v5662, %v5668
        %v5702 = vadd.f32 %v5670, 3.0
        %v5703 = vadd.f32 %v5671, 3.0
        %v5704 = vadd.f32 %v5672, 3.0
        %v5705 = vadd.f32 %v5673, 3.0
        %v5706 = vadd.f32 %v5674, 3.0
        %v5707 = vadd.f32 %v5675, 3.0
        %v5708 = vadd.f32 %v5676, 3.0
        %v5709 = vadd.f32 %v5677, 3.0
        %v5710 = vadd.f32 %v5678, 3.0
        %v5711 = vadd.f32 %v5679, 3.0
        %v5712 = vadd.f32 %v5680, 3.0
        %v5713 = vadd.f32 %v5681, 3.0
        %v5714 = vadd.f32 %v5682, 3.0
        %v5715 = vadd.f32 %v5683, 3.0
        %v5716 = vadd.f32 %v5684, 3.0
        %v5717 = vadd.f32 %v5685, 3.0
        %v5718 = vadd.f32 %v5686, 3.0
        %v5719 = vadd.f32 %v5687, 3.0
        %v5720 = vadd.f32 %v5688, 3.0
        %v5721 = vadd.f32 %v5689, 3.0
        %v5722 = vadd.f32 %v5690, 3.0
        %v5723 = vadd.f32 %v5691, 3.0
        %v5724 = vadd.f32 %v5692, 3.0
        %v5725 = vadd.f32 %v5693, 3.0
        %v5726 = vadd.f32 %v5694, 3.0
        %v5727 = vadd.f32 %v5695, 3.0
        %v5728 = vadd.f32 %v5696, 3.0
        %v5729 = vadd.f32 %v5697, 3.0
        %v5730 = vadd.f32 %v5698, 3.0
        %v5731 = vadd.f32 %v5699, 3.0
        %v5732 = vadd.f32 %v5700, 3.0
        %v5733 = vadd.f32 %v5701, 3.0
        %v5734 = vmax.f32 %v5702, 0.0
        %v5735 = vmax.f32 %v5703, 0.0
        %v5736 = vmax.f32 %v5704, 0.0
        %v5737 = vmax.f32 %v5705, 0.0
        %v5738 = vmax.f32 %v5706, 0.0
        %v5739 = vmax.f32 %v5707, 0.0
        %v5740 = vmax.f32 %v5708, 0.0
        %v5741 = vmax.f32 %v5709, 0.0
        %v5742 = vmax.f32 %v5710, 0.0
        %v5743 = vmax.f32 %v5711, 0.0
        %v5744 = vmax.f32 %v5712, 0.0
        %v5745 = vmax.f32 %v5713, 0.0
        %v5746 = vmax.f32 %v5714, 0.0
        %v5747 = vmax.f32 %v5715, 0.0
        %v5748 = vmax.f32 %v5716, 0.0
        %v5749 = vmax.f32 %v5717, 0.0
        %v5750 = vmax.f32 %v5718, 0.0
        %v5751 = vmax.f32 %v5719, 0.0
        %v5752 = vmax.f32 %v5720, 0.0
        %v5753 = vmax.f32 %v5721, 0.0
        %v5754 = vmax.f32 %v5722, 0.0
        %v5755 = vmax.f32 %v5723, 0.0
        %v5756 = vmax.f32 %v5724, 0.0
        %v5757 = vmax.f32 %v5725, 0.0
        %v5758 = vmax.f32 %v5726, 0.0
        %v5759 = vmax.f32 %v5727, 0.0
        %v5760 = vmax.f32 %v5728, 0.0
        %v5761 = vmax.f32 %v5729, 0.0
        %v5762 = vmax.f32 %v5730, 0.0
        %v5763 = vmax.f32 %v5731, 0.0
        %v5764 = vmax.f32 %v5732, 0.0
        %v5765 = vmax.f32 %v5733, 0.0
        %v5766 = vmin.f32 %v5734, 6.0
        %v5767 = vmin.f32 %v5735, 6.0
        %v5768 = vmin.f32 %v5736, 6.0
        %v5769 = vmin.f32 %v5737, 6.0
        %v5770 = vmin.f32 %v5738, 6.0
        %v5771 = vmin.f32 %v5739, 6.0
        %v5772 = vmin.f32 %v5740, 6.0
        %v5773 = vmin.f32 %v5741, 6.0
        %v5774 = vmin.f32 %v5742, 6.0
        %v5775 = vmin.f32 %v5743, 6.0
        %v5776 = vmin.f32 %v5744, 6.0
        %v5777 = vmin.f32 %v5745, 6.0
        %v5778 = vmin.f32 %v5746, 6.0
        %v5779 = vmin.f32 %v5747, 6.0
        %v5780 = vmin.f32 %v5748, 6.0
        %v5781 = vmin.f32 %v5749, 6.0
        %v5782 = vmin.f32 %v5750, 6.0
        %v5783 = vmin.f32 %v5751, 6.0
        %v5784 = vmin.f32 %v5752, 6.0
        %v5785 = vmin.f32 %v5753, 6.0
        %v5786 = vmin.f32 %v5754, 6.0
        %v5787 = vmin.f32 %v5755, 6.0
        %v5788 = vmin.f32 %v5756, 6.0
        %v5789 = vmin.f32 %v5757, 6.0
        %v5790 = vmin.f32 %v5758, 6.0
        %v5791 = vmin.f32 %v5759, 6.0
        %v5792 = vmin.f32 %v5760, 6.0
        %v5793 = vmin.f32 %v5761, 6.0
        %v5794 = vmin.f32 %v5762, 6.0
        %v5795 = vmin.f32 %v5763, 6.0
        %v5796 = vmin.f32 %v5764, 6.0
        %v5797 = vmin.f32 %v5765, 6.0
        %v5798 = vmul.f32 %v5670, %v5766
        %v5799 = vmul.f32 %v5671, %v5767
        %v5800 = vmul.f32 %v5672, %v5768
        %v5801 = vmul.f32 %v5673, %v5769
        %v5802 = vmul.f32 %v5674, %v5770
        %v5803 = vmul.f32 %v5675, %v5771
        %v5804 = vmul.f32 %v5676, %v5772
        %v5805 = vmul.f32 %v5677, %v5773
        %v5806 = vmul.f32 %v5678, %v5774
        %v5807 = vmul.f32 %v5679, %v5775
        %v5808 = vmul.f32 %v5680, %v5776
        %v5809 = vmul.f32 %v5681, %v5777
        %v5810 = vmul.f32 %v5682, %v5778
        %v5811 = vmul.f32 %v5683, %v5779
        %v5812 = vmul.f32 %v5684, %v5780
        %v5813 = vmul.f32 %v5685, %v5781
        %v5814 = vmul.f32 %v5686, %v5782
        %v5815 = vmul.f32 %v5687, %v5783
        %v5816 = vmul.f32 %v5688, %v5784
        %v5817 = vmul.f32 %v5689, %v5785
        %v5818 = vmul.f32 %v5690, %v5786
        %v5819 = vmul.f32 %v5691, %v5787
        %v5820 = vmul.f32 %v5692, %v5788
        %v5821 = vmul.f32 %v5693, %v5789
        %v5822 = vmul.f32 %v5694, %v5790
        %v5823 = vmul.f32 %v5695, %v5791
        %v5824 = vmul.f32 %v5696, %v5792
        %v5825 = vmul.f32 %v5697, %v5793
        %v5826 = vmul.f32 %v5698, %v5794
        %v5827 = vmul.f32 %v5699, %v5795
        %v5828 = vmul.f32 %v5700, %v5796
        %v5829 = vmul.f32 %v5701, %v5797
        %v5830 = vmul.f32 %v5798, 0.16666667
        %v5831 = vmul.f32 %v5799, 0.16666667
        %v5832 = vmul.f32 %v5800, 0.16666667
        %v5833 = vmul.f32 %v5801, 0.16666667
        %v5834 = vmul.f32 %v5802, 0.16666667
        %v5835 = vmul.f32 %v5803, 0.16666667
        %v5836 = vmul.f32 %v5804, 0.16666667
        %v5837 = vmul.f32 %v5805, 0.16666667
        %v5838 = vmul.f32 %v5806, 0.16666667
        %v5839 = vmul.f32 %v5807, 0.16666667
        %v5840 = vmul.f32 %v5808, 0.16666667
        %v5841 = vmul.f32 %v5809, 0.16666667
        %v5842 = vmul.f32 %v5810, 0.16666667
        %v5843 = vmul.f32 %v5811, 0.16666667
        %v5844 = vmul.f32 %v5812, 0.16666667
        %v5845 = vmul.f32 %v5813, 0.16666667
        %v5846 = vmul.f32 %v5814, 0.16666667
        %v5847 = vmul.f32 %v5815, 0.16666667
        %v5848 = vmul.f32 %v5816, 0.16666667
        %v5849 = vmul.f32 %v5817, 0.16666667
        %v5850 = vmul.f32 %v5818, 0.16666667
        %v5851 = vmul.f32 %v5819, 0.16666667
        %v5852 = vmul.f32 %v5820, 0.16666667
        %v5853 = vmul.f32 %v5821, 0.16666667
        %v5854 = vmul.f32 %v5822, 0.16666667
        %v5855 = vmul.f32 %v5823, 0.16666667
        %v5856 = vmul.f32 %v5824, 0.16666667
        %v5857 = vmul.f32 %v5825, 0.16666667
        %v5858 = vmul.f32 %v5826, 0.16666667
        %v5859 = vmul.f32 %v5827, 0.16666667
        %v5860 = vmul.f32 %v5828, 0.16666667
        %v5861 = vmul.f32 %v5829, 0.16666667
        %5862 = vst.msk [vmem:[%s246] sm:$0xff] %vm247, %v5830
        %5863 = vst.msk [vmem:[%s246 + $0x8] sm:$0xff] %vm247, %v5831
        %5864 = vst.msk [vmem:[%s246 + $0x10] sm:$0xff] %vm247, %v5832
        %5865 = vst.msk [vmem:[%s246 + $0x18] sm:$0xff] %vm247, %v5833
        %5866 = vst.msk [vmem:[%s246 + $0x20] sm:$0xff] %vm247, %v5834
        %5867 = vst.msk [vmem:[%s246 + $0x28] sm:$0xff] %vm247, %v5835
        %5868 = vst.msk [vmem:[%s246 + $0x30] sm:$0xff] %vm247, %v5836
        %5869 = vst.msk [vmem:[%s246 + $0x38] sm:$0xff] %vm247, %v5837
        %5870 = vst.msk [vmem:[%s246 + $0x40] sm:$0xff] %vm247, %v5838
        %5871 = vst.msk [vmem:[%s246 + $0x48] sm:$0xff] %vm247, %v5839
        %5872 = vst.msk [vmem:[%s246 + $0x50] sm:$0xff] %vm247, %v5840
        %5873 = vst.msk [vmem:[%s246 + $0x58] sm:$0xff] %vm247, %v5841
        %5874 = vst.msk [vmem:[%s246 + $0x60] sm:$0xff] %vm247, %v5842
        %5875 = vst.msk [vmem:[%s246 + $0x68] sm:$0xff] %vm247, %v5843
        %5876 = vst.msk [vmem:[%s246 + $0x70] sm:$0xff] %vm247, %v5844
        %5877 = vst.msk [vmem:[%s246 + $0x78] sm:$0xff] %vm247, %v5845
        %5878 = vst.msk [vmem:[%s246 + $0x80] sm:$0xff] %vm247, %v5846
        %5879 = vst.msk [vmem:[%s246 + $0x88] sm:$0xff] %vm247, %v5847
        %5880 = vst.msk [vmem:[%s246 + $0x90] sm:$0xff] %vm247, %v5848
        %5881 = vst.msk [vmem:[%s246 + $0x98] sm:$0xff] %vm247, %v5849
        %5882 = vst.msk [vmem:[%s246 + $0xa0] sm:$0xff] %vm247, %v5850
        %5883 = vst.msk [vmem:[%s246 + $0xa8] sm:$0xff] %vm247, %v5851
        %5884 = vst.msk [vmem:[%s246 + $0xb0] sm:$0xff] %vm247, %v5852
        %5885 = vst.msk [vmem:[%s246 + $0xb8] sm:$0xff] %vm247, %v5853
        %5886 = vst.msk [vmem:[%s246 + $0xc0] sm:$0xff] %vm247, %v5854
        %5887 = vst.msk [vmem:[%s246 + $0xc8] sm:$0xff] %vm247, %v5855
        %5888 = vst.msk [vmem:[%s246 + $0xd0] sm:$0xff] %vm247, %v5856
        %5889 = vst.msk [vmem:[%s246 + $0xd8] sm:$0xff] %vm247, %v5857
        %5890 = vst.msk [vmem:[%s246 + $0xe0] sm:$0xff] %vm247, %v5858
        %5891 = vst.msk [vmem:[%s246 + $0xe8] sm:$0xff] %vm247, %v5859
        %5892 = vst.msk [vmem:[%s246 + $0xf0] sm:$0xff] %vm247, %v5860
        %5893 = vst.msk [vmem:[%s246 + $0xf8] sm:$0xff] %vm247, %v5861
        %s5894 = sand.u32 %s123, 1
        %s5895 = scalar_lea.sflag [#allocation5], %s5894
        %s5896 = sand.u32 %s123, 1
        %s5897 = smul.addr %s5896, 256
        %s5898 = scalar_lea.vmem [#allocation9], %s5897
        // Predicated region
        $region45: #{tpu_custom_call.1} parent=31 // pred_check
          %p5899 = pneg %p133
        $region46: #{tpu_custom_call.1} parent=31 // pred_check_branch
          %5901 = sbr.rel (%p5899) target = $region48
        $region47: #{tpu_custom_call.1} parent=31 // pred_region
          %s5903 = ssub.s32 4096, 4096
          %5904 = vsyncadd %s5895, %s5903
          %s5905 = smul.addr %s25, 32
          %s5906 = sadd.s32 %s26, %s5905
          %s5907 = smul.addr %s5906, 128
          %s5908 = scalar_lea.hbm %s3, %s5907
          %s5909 = sshll.u32 %s5898, 4
          %s5910 = int_to_ptr.vmem [resolvable:$true] %s5909
          %5915 = dma.vmem_to_hbm [thread:$0]  %s5910, 4096, %s5908, %s5895, 128, 128, 8
        $region48: #{tpu_custom_call.1} parent=31 // pred_fallthru
          _
      $region32: #{tpu_custom_call.1} parent=5 // pred_fallthru
        _
      %p5916 = scmp.le.s32.totalorder 2, %s16
      // Predicated region
      $region49: #{tpu_custom_call.1} parent=5 // pred_check
        %p5917 = pneg %p5916
      $region50: #{tpu_custom_call.1} parent=5 // pred_check_branch
        %5919 = sbr.rel (%p5917) target = $region52
      $region51: #{tpu_custom_call.1} parent=5 // pred_region
        %s5920 = ssub.s32 %s16, 2
        // Predicated region
        $region53: #{tpu_custom_call.1} parent=51 // pred_check
          %p5921 = pneg %p139
        $region54: #{tpu_custom_call.1} parent=51 // pred_check_branch
          %5923 = sbr.rel (%p5921) target = $region56
        $region55: #{tpu_custom_call.1} parent=51 // pred_region
          %s5924 = sand.u32 %s124, 1
          %s5925 = scalar_lea.sflag [#allocation5], %s5924
          %s5926 = sand.u32 %s124, 1
          %s5927 = smul.addr %s5926, 256
          %s5928 = scalar_lea.vmem [#allocation9], %s5927
          %5929 = dma.done %s5925, 4096
        $region56: #{tpu_custom_call.1} parent=51 // pred_fallthru
          _
      $region52: #{tpu_custom_call.1} parent=5 // pred_fallthru
        _
    $region6: #{tpu_custom_call.1} parent=1 // loop_footer
      %s20 = sadd.s32 1, %s16
    $region7: #{tpu_custom_call.1} parent=1 // loop_footer_branch
      %15 = sbr.rel target = $region3
    $region8: #{tpu_custom_call.1} parent=1 // loop_exit
      _
    %5930 = vsyncpa [#allocation4], 1
    %s5931 = scalar_lea.sflag [#allocation4], 1
    %5932 = vsyncpa %s5931, 1
    %5933 = vsyncpa [#allocation7], 1
    %5934 = vsyncpa [#allocation5], 1
    %s5935 = scalar_lea.sflag [#allocation5], 1
    %5936 = vsyncpa %s5935, 1

</llo_original>
